<compile_context>
chip_gen: v5e
topology: v5e:2x2
jax: 0.10.0
libtpu: 0.0.40
codegen_flags: <defaults>
</compile_context>

<pallas_src>
import jax
import jax.numpy as jnp
from jax import lax
from jax.experimental import pallas as pl
from jax.experimental.pallas import tpu as pltpu
import numpy as np

INPUT_SIZE = 28
HIDDEN = 64
SEQ = 28
NUM_CLASSES = 10
OUT_PAD = 128        # fc output lane-padded 10 -> 128


def lstm_kernel(xp_ref, whh_ref, wfc_ref, bfc_ref, out_ref):
    # xp_ref:  (T, TB, 4H) f32   precomputed x@W_ih^T + b (gate order f,i,o,2g)
    # whh_ref: (H, 4H)    bf16   hidden->gates weights (transposed, reordered)
    # wfc_ref: (H, 128)   f32    fc weights (transposed, zero-padded cols)
    # bfc_ref: (1, 128)   f32    fc bias (-1e30 in padded cols)
    # out_ref: (TB, 128)  f32    softmax probabilities (cols >= 10 are 0)
    T, TB, G4 = xp_ref.shape
    H = whh_ref.shape[0]

    whh = whh_ref[...]                       # resident bf16 (H, 4H)
    h0 = jnp.zeros((TB, H), jnp.float32)
    c0 = jnp.zeros((TB, H), jnp.float32)

    def step(t, carry):
        h, c = carry
        # bf16 x bf16 MXU matmul, f32 accumulation; xp already contains bias.
        gates = xp_ref[t] + jnp.dot(
            h.astype(jnp.bfloat16), whh, preferred_element_type=jnp.float32
        )                                    # (TB, 4H), gate order f, i, o, g
        # One full-tile sigmoid keeps the EUP fed with full vregs; the g-gate
        # pre-activations were pre-scaled by 2 so tanh(g) = 2*sigmoid(2g) - 1.
        s = jax.nn.sigmoid(gates)
        f_g = s[:, 0:H]
        i_g = s[:, H:2 * H]
        o_g = s[:, 2 * H:3 * H]
        g_g = 2.0 * s[:, 3 * H:4 * H] - 1.0
        c_new = f_g * c + i_g * g_g
        h_new = o_g * jnp.tanh(c_new)
        return (h_new, c_new)

    # T is static (28): fully unroll so MXU / EUP / VPU work of adjacent
    # timesteps overlaps instead of serializing behind an opaque loop.
    h_final, _ = lax.fori_loop(0, T, step, (h0, c0), unroll=True)

    logits = (
        jnp.dot(h_final, wfc_ref[...], preferred_element_type=jnp.float32)
        + bfc_ref[...]
    )                                        # (TB, 128); padded cols ~ -1e30
    m = jnp.max(logits, axis=1, keepdims=True)
    e = jnp.exp(logits - m)                  # padded cols underflow to 0
    out_ref[...] = e / jnp.sum(e, axis=1, keepdims=True)


def _prep_params(params):
    """Reorder gates [i,f,g,o]->[f,i,o,g], fold biases, pre-scale g by 2,
    transpose weights, bf16-cast W_hh, lane-pad the fc head to 128 columns."""
    w_ih, w_hh, b_ih, b_hh, w_fc, b_fc = params
    H = HIDDEN
    perm = np.concatenate([
        np.arange(H, 2 * H),      # f
        np.arange(0, H),          # i
        np.arange(3 * H, 4 * H),  # o
        np.arange(2 * H, 3 * H),  # g
    ])
    scale = jnp.concatenate([
        jnp.ones((3 * H,), jnp.float32),
        jnp.full((H,), 2.0, jnp.float32),     # g-gate pre-scaled by 2
    ])
    wih_t = jnp.transpose(w_ih)[:, perm] * scale[None, :]                # (I, 4H) f32
    whh_t = (jnp.transpose(w_hh)[:, perm] * scale[None, :]).astype(jnp.bfloat16)  # (H, 4H)
    b = ((b_ih + b_hh)[perm] * scale).reshape(1, 4 * H)                  # (1, 4H) f32
    wfc_pad = jnp.zeros((H, OUT_PAD), jnp.float32).at[:, :NUM_CLASSES].set(
        jnp.transpose(w_fc))                                             # (H, 128)
    bfc_pad = jnp.full((1, OUT_PAD), -1e30, jnp.float32).at[0, :NUM_CLASSES].set(
        b_fc)                                                            # (1, 128)
    return wih_t, whh_t, b, wfc_pad, bfc_pad


def lstm_forward(x, params, *, block_b=128):
    """x: (B, 1, 28, 28) or (B, 28, 28) float32 -> (B, 10) softmax probs."""
    B = x.shape[0]
    x = x.reshape(B, SEQ, INPUT_SIZE).astype(jnp.float32)   # x.view(B, 28, -1)

    wih_t, whh_t, b, wfc_pad, bfc_pad = _prep_params(params)
    G4 = 4 * HIDDEN

    # Batch tile: sublane multiple of 8, capped at block_b (=128: fills the MXU
    # rows far better than 64 and stays ~7 MiB double-buffered, under every
    # generation's scoped VMEM default), and additionally capped at ~B/2 so the
    # 1-D grid has >= 2 steps whenever possible (v7x has 2 TensorCores).
    B8 = ((B + 7) // 8) * 8
    TB = min(block_b, B8)
    if B8 >= 16:
        half = ((pl.cdiv(B8, 2) + 7) // 8) * 8
        TB = min(TB, half)
    Bp = pl.cdiv(B, TB) * TB
    n_blocks = Bp // TB

    # Hoisted input projection: one bulk XLA matmul over the whole batch and
    # sequence (K=32-class work is trivial there), bias folded in. The kernel
    # then streams a lane-dense (SEQ, TB, 256) block per grid step.
    xp = jnp.einsum("bti,ig->btg", x, wih_t) + b            # (B, SEQ, 4H) f32
    xp_tm = jnp.zeros((SEQ, Bp, G4), jnp.float32)
    xp_tm = xp_tm.at[:, :B, :].set(jnp.transpose(xp, (1, 0, 2)))

    grid_spec = pltpu.PrefetchScalarGridSpec(
        num_scalar_prefetch=0,
        grid=(n_blocks,),
        in_specs=[
            pl.BlockSpec((SEQ, TB, G4), lambda i: (0, i, 0)),
            # Weights / biases: constant index_map -> DMA'd once, resident in
            # VMEM across batch tiles.
            pl.BlockSpec((HIDDEN, G4), lambda i: (0, 0)),
            pl.BlockSpec((HIDDEN, OUT_PAD), lambda i: (0, 0)),
            pl.BlockSpec((1, OUT_PAD), lambda i: (0, 0)),
        ],
        out_specs=pl.BlockSpec((TB, OUT_PAD), lambda i: (i, 0)),
    )

    out = pl.pallas_call(
        lstm_kernel,
        out_shape=jax.ShapeDtypeStruct((Bp, OUT_PAD), jnp.float32),
        grid_spec=grid_spec,
        compiler_params=pltpu.CompilerParams(
            dimension_semantics=("parallel",),
            vmem_limit_bytes=32 * 1024 * 1024,
        ),
    )(xp_tm, whh_t, wfc_pad, bfc_pad)
    return out[:B, :NUM_CLASSES]


def init_params(key):
    """Deterministic init matching PyTorch default U(-1/sqrt(H), 1/sqrt(H))."""
    k = 1.0 / np.sqrt(HIDDEN)
    keys = jax.random.split(key, 6)
    w_ih = jax.random.uniform(keys[0], (4 * HIDDEN, INPUT_SIZE), jnp.float32, -k, k)
    w_hh = jax.random.uniform(keys[1], (4 * HIDDEN, HIDDEN), jnp.float32, -k, k)
    b_ih = jax.random.uniform(keys[2], (4 * HIDDEN,), jnp.float32, -k, k)
    b_hh = jax.random.uniform(keys[3], (4 * HIDDEN,), jnp.float32, -k, k)
    w_fc = jax.random.uniform(keys[4], (NUM_CLASSES, HIDDEN), jnp.float32, -k, k)
    b_fc = jax.random.uniform(keys[5], (NUM_CLASSES,), jnp.float32, -k, k)
    return (w_ih, w_hh, b_ih, b_hh, w_fc, b_fc)


def reference_forward(x, params):
    """Pure-JAX f32 reference mirroring the PyTorch forward."""
    B = x.shape[0]
    x = x.reshape(B, SEQ, INPUT_SIZE).astype(jnp.float32)
    w_ih, w_hh, b_ih, b_hh, w_fc, b_fc = params
    h = jnp.zeros((B, HIDDEN), jnp.float32)
    c = jnp.zeros((B, HIDDEN), jnp.float32)
    for t in range(SEQ):
        gates = x[:, t, :] @ w_ih.T + b_ih + h @ w_hh.T + b_hh
        i_g = jax.nn.sigmoid(gates[:, 0:HIDDEN])
        f_g = jax.nn.sigmoid(gates[:, HIDDEN:2 * HIDDEN])
        g_g = jnp.tanh(gates[:, 2 * HIDDEN:3 * HIDDEN])
        o_g = jax.nn.sigmoid(gates[:, 3 * HIDDEN:4 * HIDDEN])
        c = f_g * c + i_g * g_g
        h = o_g * jnp.tanh(c)
    logits = h @ w_fc.T + b_fc
    return jax.nn.softmax(logits, axis=1)


if __name__ == "__main__":
    key = jax.random.PRNGKey(0)
    k_param, k_x, k_x2 = jax.random.split(key, 3)
    params = init_params(k_param)

    # Small MNIST-like NCHW input, as the module's forward implies.
    B = 2
    x = jax.random.normal(k_x, (B, 1, SEQ, INPUT_SIZE), jnp.float32)
    out = jax.block_until_ready(lstm_forward(x, params))
    ref = reference_forward(x, params)
    # Tolerance widened deliberately: the recurrent matmul runs with bf16
    # operands (f32 accumulation); the reference is pure f32.
    np.testing.assert_allclose(np.asarray(out), np.asarray(ref), atol=2e-2, rtol=0)
    assert out.shape == (B, NUM_CLASSES)
    np.testing.assert_allclose(np.asarray(out).sum(axis=1), 1.0, atol=1e-5)

    # Second check exercising batch padding, the multi-block grid and the
    # "keep >= 2 grid steps" tile cap.
    B2 = 96
    x2 = jax.random.normal(k_x2, (B2, 1, SEQ, INPUT_SIZE), jnp.float32)
    out2 = jax.block_until_ready(lstm_forward(x2, params))
    ref2 = reference_forward(x2, params)
    np.testing.assert_allclose(np.asarray(out2), np.asarray(ref2), atol=2e-2, rtol=0)
    assert out2.shape == (B2, NUM_CLASSES)

    print("KERNEL_OK")
</pallas_src>

<mosaic_0001>
module attributes {stable_mosaic.version = 11 : i64} {
  func.func @lstm_kernel(%arg0: i32, %arg1: memref<28x8x256xf32, #tpu.memory_space<vmem>>, %arg2: memref<64x256xbf16, #tpu.memory_space<vmem>>, %arg3: memref<64x128xf32, #tpu.memory_space<vmem>>, %arg4: memref<1x128xf32, #tpu.memory_space<vmem>>, %arg5: memref<8x128xf32, #tpu.memory_space<vmem>>) attributes {dimension_semantics = [#tpu.dimension_semantics<parallel>], iteration_bounds = array<i64: 1>, scalar_prefetch = 0 : i64, scratch_operands = 0 : i64, tpu.core_type = #tpu.core_type<tc>, window_params = [{transform_indices = @transform_0, window_bounds = array<i64: 28, 8, 256>}, {pipeline_mode = #tpu.pipeline_mode<synchronous>, transform_indices = @transform_1, window_bounds = array<i64: 64, 256>}, {pipeline_mode = #tpu.pipeline_mode<synchronous>, transform_indices = @transform_2, window_bounds = array<i64: 64, 128>}, {pipeline_mode = #tpu.pipeline_mode<synchronous>, transform_indices = @transform_3, window_bounds = array<i64: 1, 128>}, {transform_indices = @transform_4, window_bounds = array<i64: 8, 128>}]} {
    %c0 = arith.constant 0 : index
    %c0_0 = arith.constant 0 : index
    %0 = vector.load %arg2[%c0, %c0_0] : memref<64x256xbf16, #tpu.memory_space<vmem>>, vector<64x256xbf16>
    %cst = arith.constant 0.000000e+00 : f32
    %1 = vector.broadcast %cst : f32 to vector<8x64xf32>
    %cst_1 = arith.constant 0.000000e+00 : f32
    %2 = vector.broadcast %cst_1 : f32 to vector<8x64xf32>
    %c0_i32 = arith.constant 0 : i32
    %3 = arith.index_cast %c0_i32 : i32 to index
    %c0_2 = arith.constant 0 : index
    %c0_3 = arith.constant 0 : index
    %4 = vector.load %arg1[%3, %c0_2, %c0_3] : memref<28x8x256xf32, #tpu.memory_space<vmem>>, vector<1x8x256xf32>
    %5 = vector.shape_cast %4 : vector<1x8x256xf32> to vector<8x256xf32>
    %6 = arith.truncf %1 : vector<8x64xf32> to vector<8x64xbf16>
    %cst_4 = arith.constant dense<0.000000e+00> : vector<8x256xf32>
    %7 = tpu.matmul %6, %0, %cst_4 {dimension_numbers = #tpu.dot_dimension_numbers<[1], [0], [0], [1], [0, 0, 1, 1], [], []>} : vector<8x64xbf16>, vector<64x256xbf16>, vector<8x256xf32> -> vector<8x256xf32>
    %8 = arith.addf %5, %7 : vector<8x256xf32>
    %9 = arith.negf %8 : vector<8x256xf32>
    %10 = math.exp %9 : vector<8x256xf32>
    %cst_5 = arith.constant 1.000000e+00 : f32
    %11 = vector.broadcast %cst_5 : f32 to vector<8x256xf32>
    %12 = arith.addf %11, %10 : vector<8x256xf32>
    %13 = arith.divf %11, %12 : vector<8x256xf32>
    %14 = vector.extract_strided_slice %13 {offsets = [0, 0], sizes = [8, 64], strides = [1, 1]} : vector<8x256xf32> to vector<8x64xf32>
    %15 = vector.extract_strided_slice %13 {offsets = [0, 64], sizes = [8, 64], strides = [1, 1]} : vector<8x256xf32> to vector<8x64xf32>
    %16 = vector.extract_strided_slice %13 {offsets = [0, 128], sizes = [8, 64], strides = [1, 1]} : vector<8x256xf32> to vector<8x64xf32>
    %17 = vector.extract_strided_slice %13 {offsets = [0, 192], sizes = [8, 64], strides = [1, 1]} : vector<8x256xf32> to vector<8x64xf32>
    %cst_6 = arith.constant 2.000000e+00 : f32
    %18 = vector.broadcast %cst_6 : f32 to vector<8x64xf32>
    %19 = arith.mulf %18, %17 : vector<8x64xf32>
    %cst_7 = arith.constant 1.000000e+00 : f32
    %20 = vector.broadcast %cst_7 : f32 to vector<8x64xf32>
    %21 = arith.subf %19, %20 : vector<8x64xf32>
    %22 = arith.mulf %14, %2 : vector<8x64xf32>
    %23 = arith.mulf %15, %21 : vector<8x64xf32>
    %24 = arith.addf %22, %23 : vector<8x64xf32>
    %25 = math.tanh %24 : vector<8x64xf32>
    %26 = arith.mulf %16, %25 : vector<8x64xf32>
    %c1_i32 = arith.constant 1 : i32
    %27 = arith.index_cast %c1_i32 : i32 to index
    %c0_8 = arith.constant 0 : index
    %c0_9 = arith.constant 0 : index
    %28 = vector.load %arg1[%27, %c0_8, %c0_9] : memref<28x8x256xf32, #tpu.memory_space<vmem>>, vector<1x8x256xf32>
    %29 = vector.shape_cast %28 : vector<1x8x256xf32> to vector<8x256xf32>
    %30 = arith.truncf %26 : vector<8x64xf32> to vector<8x64xbf16>
    %cst_10 = arith.constant dense<0.000000e+00> : vector<8x256xf32>
    %31 = tpu.matmul %30, %0, %cst_10 {dimension_numbers = #tpu.dot_dimension_numbers<[1], [0], [0], [1], [0, 0, 1, 1], [], []>} : vector<8x64xbf16>, vector<64x256xbf16>, vector<8x256xf32> -> vector<8x256xf32>
    %32 = arith.addf %29, %31 : vector<8x256xf32>
    %33 = arith.negf %32 : vector<8x256xf32>
    %34 = math.exp %33 : vector<8x256xf32>
    %cst_11 = arith.constant 1.000000e+00 : f32
    %35 = vector.broadcast %cst_11 : f32 to vector<8x256xf32>
    %36 = arith.addf %35, %34 : vector<8x256xf32>
    %37 = arith.divf %35, %36 : vector<8x256xf32>
    %38 = vector.extract_strided_slice %37 {offsets = [0, 0], sizes = [8, 64], strides = [1, 1]} : vector<8x256xf32> to vector<8x64xf32>
    %39 = vector.extract_strided_slice %37 {offsets = [0, 64], sizes = [8, 64], strides = [1, 1]} : vector<8x256xf32> to vector<8x64xf32>
    %40 = vector.extract_strided_slice %37 {offsets = [0, 128], sizes = [8, 64], strides = [1, 1]} : vector<8x256xf32> to vector<8x64xf32>
    %41 = vector.extract_strided_slice %37 {offsets = [0, 192], sizes = [8, 64], strides = [1, 1]} : vector<8x256xf32> to vector<8x64xf32>
    %cst_12 = arith.constant 2.000000e+00 : f32
    %42 = vector.broadcast %cst_12 : f32 to vector<8x64xf32>
    %43 = arith.mulf %42, %41 : vector<8x64xf32>
    %cst_13 = arith.constant 1.000000e+00 : f32
    %44 = vector.broadcast %cst_13 : f32 to vector<8x64xf32>
    %45 = arith.subf %43, %44 : vector<8x64xf32>
    %46 = arith.mulf %38, %24 : vector<8x64xf32>
    %47 = arith.mulf %39, %45 : vector<8x64xf32>
    %48 = arith.addf %46, %47 : vector<8x64xf32>
    %49 = math.tanh %48 : vector<8x64xf32>
    %50 = arith.mulf %40, %49 : vector<8x64xf32>
    %c2_i32 = arith.constant 2 : i32
    %51 = arith.index_cast %c2_i32 : i32 to index
    %c0_14 = arith.constant 0 : index
    %c0_15 = arith.constant 0 : index
    %52 = vector.load %arg1[%51, %c0_14, %c0_15] : memref<28x8x256xf32, #tpu.memory_space<vmem>>, vector<1x8x256xf32>
    %53 = vector.shape_cast %52 : vector<1x8x256xf32> to vector<8x256xf32>
    %54 = arith.truncf %50 : vector<8x64xf32> to vector<8x64xbf16>
    %cst_16 = arith.constant dense<0.000000e+00> : vector<8x256xf32>
    %55 = tpu.matmul %54, %0, %cst_16 {dimension_numbers = #tpu.dot_dimension_numbers<[1], [0], [0], [1], [0, 0, 1, 1], [], []>} : vector<8x64xbf16>, vector<64x256xbf16>, vector<8x256xf32> -> vector<8x256xf32>
    %56 = arith.addf %53, %55 : vector<8x256xf32>
    %57 = arith.negf %56 : vector<8x256xf32>
    %58 = math.exp %57 : vector<8x256xf32>
    %cst_17 = arith.constant 1.000000e+00 : f32
    %59 = vector.broadcast %cst_17 : f32 to vector<8x256xf32>
    %60 = arith.addf %59, %58 : vector<8x256xf32>
    %61 = arith.divf %59, %60 : vector<8x256xf32>
    %62 = vector.extract_strided_slice %61 {offsets = [0, 0], sizes = [8, 64], strides = [1, 1]} : vector<8x256xf32> to vector<8x64xf32>
    %63 = vector.extract_strided_slice %61 {offsets = [0, 64], sizes = [8, 64], strides = [1, 1]} : vector<8x256xf32> to vector<8x64xf32>
    %64 = vector.extract_strided_slice %61 {offsets = [0, 128], sizes = [8, 64], strides = [1, 1]} : vector<8x256xf32> to vector<8x64xf32>
    %65 = vector.extract_strided_slice %61 {offsets = [0, 192], sizes = [8, 64], strides = [1, 1]} : vector<8x256xf32> to vector<8x64xf32>
    %cst_18 = arith.constant 2.000000e+00 : f32
    %66 = vector.broadcast %cst_18 : f32 to vector<8x64xf32>
    %67 = arith.mulf %66, %65 : vector<8x64xf32>
    %cst_19 = arith.constant 1.000000e+00 : f32
    %68 = vector.broadcast %cst_19 : f32 to vector<8x64xf32>
    %69 = arith.subf %67, %68 : vector<8x64xf32>
    %70 = arith.mulf %62, %48 : vector<8x64xf32>
    %71 = arith.mulf %63, %69 : vector<8x64xf32>
    %72 = arith.addf %70, %71 : vector<8x64xf32>
    %73 = math.tanh %72 : vector<8x64xf32>
    %74 = arith.mulf %64, %73 : vector<8x64xf32>
    %c3_i32 = arith.constant 3 : i32
    %75 = arith.index_cast %c3_i32 : i32 to index
    %c0_20 = arith.constant 0 : index
    %c0_21 = arith.constant 0 : index
    %76 = vector.load %arg1[%75, %c0_20, %c0_21] : memref<28x8x256xf32, #tpu.memory_space<vmem>>, vector<1x8x256xf32>
    %77 = vector.shape_cast %76 : vector<1x8x256xf32> to vector<8x256xf32>
    %78 = arith.truncf %74 : vector<8x64xf32> to vector<8x64xbf16>
    %cst_22 = arith.constant dense<0.000000e+00> : vector<8x256xf32>
    %79 = tpu.matmul %78, %0, %cst_22 {dimension_numbers = #tpu.dot_dimension_numbers<[1], [0], [0], [1], [0, 0, 1, 1], [], []>} : vector<8x64xbf16>, vector<64x256xbf16>, vector<8x256xf32> -> vector<8x256xf32>
    %80 = arith.addf %77, %79 : vector<8x256xf32>
    %81 = arith.negf %80 : vector<8x256xf32>
    %82 = math.exp %81 : vector<8x256xf32>
    %cst_23 = arith.constant 1.000000e+00 : f32
    %83 = vector.broadcast %cst_23 : f32 to vector<8x256xf32>
    %84 = arith.addf %83, %82 : vector<8x256xf32>
    %85 = arith.divf %83, %84 : vector<8x256xf32>
    %86 = vector.extract_strided_slice %85 {offsets = [0, 0], sizes = [8, 64], strides = [1, 1]} : vector<8x256xf32> to vector<8x64xf32>
    %87 = vector.extract_strided_slice %85 {offsets = [0, 64], sizes = [8, 64], strides = [1, 1]} : vector<8x256xf32> to vector<8x64xf32>
    %88 = vector.extract_strided_slice %85 {offsets = [0, 128], sizes = [8, 64], strides = [1, 1]} : vector<8x256xf32> to vector<8x64xf32>
    %89 = vector.extract_strided_slice %85 {offsets = [0, 192], sizes = [8, 64], strides = [1, 1]} : vector<8x256xf32> to vector<8x64xf32>
    %cst_24 = arith.constant 2.000000e+00 : f32
    %90 = vector.broadcast %cst_24 : f32 to vector<8x64xf32>
    %91 = arith.mulf %90, %89 : vector<8x64xf32>
    %cst_25 = arith.constant 1.000000e+00 : f32
    %92 = vector.broadcast %cst_25 : f32 to vector<8x64xf32>
    %93 = arith.subf %91, %92 : vector<8x64xf32>
    %94 = arith.mulf %86, %72 : vector<8x64xf32>
    %95 = arith.mulf %87, %93 : vector<8x64xf32>
    %96 = arith.addf %94, %95 : vector<8x64xf32>
    %97 = math.tanh %96 : vector<8x64xf32>
    %98 = arith.mulf %88, %97 : vector<8x64xf32>
    %c4_i32 = arith.constant 4 : i32
    %99 = arith.index_cast %c4_i32 : i32 to index
    %c0_26 = arith.constant 0 : index
    %c0_27 = arith.constant 0 : index
    %100 = vector.load %arg1[%99, %c0_26, %c0_27] : memref<28x8x256xf32, #tpu.memory_space<vmem>>, vector<1x8x256xf32>
    %101 = vector.shape_cast %100 : vector<1x8x256xf32> to vector<8x256xf32>
    %102 = arith.truncf %98 : vector<8x64xf32> to vector<8x64xbf16>
    %cst_28 = arith.constant dense<0.000000e+00> : vector<8x256xf32>
    %103 = tpu.matmul %102, %0, %cst_28 {dimension_numbers = #tpu.dot_dimension_numbers<[1], [0], [0], [1], [0, 0, 1, 1], [], []>} : vector<8x64xbf16>, vector<64x256xbf16>, vector<8x256xf32> -> vector<8x256xf32>
    %104 = arith.addf %101, %103 : vector<8x256xf32>
    %105 = arith.negf %104 : vector<8x256xf32>
    %106 = math.exp %105 : vector<8x256xf32>
    %cst_29 = arith.constant 1.000000e+00 : f32
    %107 = vector.broadcast %cst_29 : f32 to vector<8x256xf32>
    %108 = arith.addf %107, %106 : vector<8x256xf32>
    %109 = arith.divf %107, %108 : vector<8x256xf32>
    %110 = vector.extract_strided_slice %109 {offsets = [0, 0], sizes = [8, 64], strides = [1, 1]} : vector<8x256xf32> to vector<8x64xf32>
    %111 = vector.extract_strided_slice %109 {offsets = [0, 64], sizes = [8, 64], strides = [1, 1]} : vector<8x256xf32> to vector<8x64xf32>
    %112 = vector.extract_strided_slice %109 {offsets = [0, 128], sizes = [8, 64], strides = [1, 1]} : vector<8x256xf32> to vector<8x64xf32>
    %113 = vector.extract_strided_slice %109 {offsets = [0, 192], sizes = [8, 64], strides = [1, 1]} : vector<8x256xf32> to vector<8x64xf32>
    %cst_30 = arith.constant 2.000000e+00 : f32
    %114 = vector.broadcast %cst_30 : f32 to vector<8x64xf32>
    %115 = arith.mulf %114, %113 : vector<8x64xf32>
    %cst_31 = arith.constant 1.000000e+00 : f32
    %116 = vector.broadcast %cst_31 : f32 to vector<8x64xf32>
    %117 = arith.subf %115, %116 : vector<8x64xf32>
    %118 = arith.mulf %110, %96 : vector<8x64xf32>
    %119 = arith.mulf %111, %117 : vector<8x64xf32>
    %120 = arith.addf %118, %119 : vector<8x64xf32>
    %121 = math.tanh %120 : vector<8x64xf32>
    %122 = arith.mulf %112, %121 : vector<8x64xf32>
    %c5_i32 = arith.constant 5 : i32
    %123 = arith.index_cast %c5_i32 : i32 to index
    %c0_32 = arith.constant 0 : index
    %c0_33 = arith.constant 0 : index
    %124 = vector.load %arg1[%123, %c0_32, %c0_33] : memref<28x8x256xf32, #tpu.memory_space<vmem>>, vector<1x8x256xf32>
    %125 = vector.shape_cast %124 : vector<1x8x256xf32> to vector<8x256xf32>
    %126 = arith.truncf %122 : vector<8x64xf32> to vector<8x64xbf16>
    %cst_34 = arith.constant dense<0.000000e+00> : vector<8x256xf32>
    %127 = tpu.matmul %126, %0, %cst_34 {dimension_numbers = #tpu.dot_dimension_numbers<[1], [0], [0], [1], [0, 0, 1, 1], [], []>} : vector<8x64xbf16>, vector<64x256xbf16>, vector<8x256xf32> -> vector<8x256xf32>
    %128 = arith.addf %125, %127 : vector<8x256xf32>
    %129 = arith.negf %128 : vector<8x256xf32>
    %130 = math.exp %129 : vector<8x256xf32>
    %cst_35 = arith.constant 1.000000e+00 : f32
    %131 = vector.broadcast %cst_35 : f32 to vector<8x256xf32>
    %132 = arith.addf %131, %130 : vector<8x256xf32>
    %133 = arith.divf %131, %132 : vector<8x256xf32>
    %134 = vector.extract_strided_slice %133 {offsets = [0, 0], sizes = [8, 64], strides = [1, 1]} : vector<8x256xf32> to vector<8x64xf32>
    %135 = vector.extract_strided_slice %133 {offsets = [0, 64], sizes = [8, 64], strides = [1, 1]} : vector<8x256xf32> to vector<8x64xf32>
    %136 = vector.extract_strided_slice %133 {offsets = [0, 128], sizes = [8, 64], strides = [1, 1]} : vector<8x256xf32> to vector<8x64xf32>
    %137 = vector.extract_strided_slice %133 {offsets = [0, 192], sizes = [8, 64], strides = [1, 1]} : vector<8x256xf32> to vector<8x64xf32>
    %cst_36 = arith.constant 2.000000e+00 : f32
    %138 = vector.broadcast %cst_36 : f32 to vector<8x64xf32>
    %139 = arith.mulf %138, %137 : vector<8x64xf32>
    %cst_37 = arith.constant 1.000000e+00 : f32
    %140 = vector.broadcast %cst_37 : f32 to vector<8x64xf32>
    %141 = arith.subf %139, %140 : vector<8x64xf32>
    %142 = arith.mulf %134, %120 : vector<8x64xf32>
    %143 = arith.mulf %135, %141 : vector<8x64xf32>
    %144 = arith.addf %142, %143 : vector<8x64xf32>
    %145 = math.tanh %144 : vector<8x64xf32>
    %146 = arith.mulf %136, %145 : vector<8x64xf32>
    %c6_i32 = arith.constant 6 : i32
    %147 = arith.index_cast %c6_i32 : i32 to index
    %c0_38 = arith.constant 0 : index
    %c0_39 = arith.constant 0 : index
    %148 = vector.load %arg1[%147, %c0_38, %c0_39] : memref<28x8x256xf32, #tpu.memory_space<vmem>>, vector<1x8x256xf32>
    %149 = vector.shape_cast %148 : vector<1x8x256xf32> to vector<8x256xf32>
    %150 = arith.truncf %146 : vector<8x64xf32> to vector<8x64xbf16>
    %cst_40 = arith.constant dense<0.000000e+00> : vector<8x256xf32>
    %151 = tpu.matmul %150, %0, %cst_40 {dimension_numbers = #tpu.dot_dimension_numbers<[1], [0], [0], [1], [0, 0, 1, 1], [], []>} : vector<8x64xbf16>, vector<64x256xbf16>, vector<8x256xf32> -> vector<8x256xf32>
    %152 = arith.addf %149, %151 : vector<8x256xf32>
    %153 = arith.negf %152 : vector<8x256xf32>
    %154 = math.exp %153 : vector<8x256xf32>
    %cst_41 = arith.constant 1.000000e+00 : f32
    %155 = vector.broadcast %cst_41 : f32 to vector<8x256xf32>
    %156 = arith.addf %155, %154 : vector<8x256xf32>
    %157 = arith.divf %155, %156 : vector<8x256xf32>
    %158 = vector.extract_strided_slice %157 {offsets = [0, 0], sizes = [8, 64], strides = [1, 1]} : vector<8x256xf32> to vector<8x64xf32>
    %159 = vector.extract_strided_slice %157 {offsets = [0, 64], sizes = [8, 64], strides = [1, 1]} : vector<8x256xf32> to vector<8x64xf32>
    %160 = vector.extract_strided_slice %157 {offsets = [0, 128], sizes = [8, 64], strides = [1, 1]} : vector<8x256xf32> to vector<8x64xf32>
    %161 = vector.extract_strided_slice %157 {offsets = [0, 192], sizes = [8, 64], strides = [1, 1]} : vector<8x256xf32> to vector<8x64xf32>
    %cst_42 = arith.constant 2.000000e+00 : f32
    %162 = vector.broadcast %cst_42 : f32 to vector<8x64xf32>
    %163 = arith.mulf %162, %161 : vector<8x64xf32>
    %cst_43 = arith.constant 1.000000e+00 : f32
    %164 = vector.broadcast %cst_43 : f32 to vector<8x64xf32>
    %165 = arith.subf %163, %164 : vector<8x64xf32>
    %166 = arith.mulf %158, %144 : vector<8x64xf32>
    %167 = arith.mulf %159, %165 : vector<8x64xf32>
    %168 = arith.addf %166, %167 : vector<8x64xf32>
    %169 = math.tanh %168 : vector<8x64xf32>
    %170 = arith.mulf %160, %169 : vector<8x64xf32>
    %c7_i32 = arith.constant 7 : i32
    %171 = arith.index_cast %c7_i32 : i32 to index
    %c0_44 = arith.constant 0 : index
    %c0_45 = arith.constant 0 : index
    %172 = vector.load %arg1[%171, %c0_44, %c0_45] : memref<28x8x256xf32, #tpu.memory_space<vmem>>, vector<1x8x256xf32>
    %173 = vector.shape_cast %172 : vector<1x8x256xf32> to vector<8x256xf32>
    %174 = arith.truncf %170 : vector<8x64xf32> to vector<8x64xbf16>
    %cst_46 = arith.constant dense<0.000000e+00> : vector<8x256xf32>
    %175 = tpu.matmul %174, %0, %cst_46 {dimension_numbers = #tpu.dot_dimension_numbers<[1], [0], [0], [1], [0, 0, 1, 1], [], []>} : vector<8x64xbf16>, vector<64x256xbf16>, vector<8x256xf32> -> vector<8x256xf32>
    %176 = arith.addf %173, %175 : vector<8x256xf32>
    %177 = arith.negf %176 : vector<8x256xf32>
    %178 = math.exp %177 : vector<8x256xf32>
    %cst_47 = arith.constant 1.000000e+00 : f32
    %179 = vector.broadcast %cst_47 : f32 to vector<8x256xf32>
    %180 = arith.addf %179, %178 : vector<8x256xf32>
    %181 = arith.divf %179, %180 : vector<8x256xf32>
    %182 = vector.extract_strided_slice %181 {offsets = [0, 0], sizes = [8, 64], strides = [1, 1]} : vector<8x256xf32> to vector<8x64xf32>
    %183 = vector.extract_strided_slice %181 {offsets = [0, 64], sizes = [8, 64], strides = [1, 1]} : vector<8x256xf32> to vector<8x64xf32>
    %184 = vector.extract_strided_slice %181 {offsets = [0, 128], sizes = [8, 64], strides = [1, 1]} : vector<8x256xf32> to vector<8x64xf32>
    %185 = vector.extract_strided_slice %181 {offsets = [0, 192], sizes = [8, 64], strides = [1, 1]} : vector<8x256xf32> to vector<8x64xf32>
    %cst_48 = arith.constant 2.000000e+00 : f32
    %186 = vector.broadcast %cst_48 : f32 to vector<8x64xf32>
    %187 = arith.mulf %186, %185 : vector<8x64xf32>
    %cst_49 = arith.constant 1.000000e+00 : f32
    %188 = vector.broadcast %cst_49 : f32 to vector<8x64xf32>
    %189 = arith.subf %187, %188 : vector<8x64xf32>
    %190 = arith.mulf %182, %168 : vector<8x64xf32>
    %191 = arith.mulf %183, %189 : vector<8x64xf32>
    %192 = arith.addf %190, %191 : vector<8x64xf32>
    %193 = math.tanh %192 : vector<8x64xf32>
    %194 = arith.mulf %184, %193 : vector<8x64xf32>
    %c8_i32 = arith.constant 8 : i32
    %195 = arith.index_cast %c8_i32 : i32 to index
    %c0_50 = arith.constant 0 : index
    %c0_51 = arith.constant 0 : index
    %196 = vector.load %arg1[%195, %c0_50, %c0_51] : memref<28x8x256xf32, #tpu.memory_space<vmem>>, vector<1x8x256xf32>
    %197 = vector.shape_cast %196 : vector<1x8x256xf32> to vector<8x256xf32>
    %198 = arith.truncf %194 : vector<8x64xf32> to vector<8x64xbf16>
    %cst_52 = arith.constant dense<0.000000e+00> : vector<8x256xf32>
    %199 = tpu.matmul %198, %0, %cst_52 {dimension_numbers = #tpu.dot_dimension_numbers<[1], [0], [0], [1], [0, 0, 1, 1], [], []>} : vector<8x64xbf16>, vector<64x256xbf16>, vector<8x256xf32> -> vector<8x256xf32>
    %200 = arith.addf %197, %199 : vector<8x256xf32>
    %201 = arith.negf %200 : vector<8x256xf32>
    %202 = math.exp %201 : vector<8x256xf32>
    %cst_53 = arith.constant 1.000000e+00 : f32
    %203 = vector.broadcast %cst_53 : f32 to vector<8x256xf32>
    %204 = arith.addf %203, %202 : vector<8x256xf32>
    %205 = arith.divf %203, %204 : vector<8x256xf32>
    %206 = vector.extract_strided_slice %205 {offsets = [0, 0], sizes = [8, 64], strides = [1, 1]} : vector<8x256xf32> to vector<8x64xf32>
    %207 = vector.extract_strided_slice %205 {offsets = [0, 64], sizes = [8, 64], strides = [1, 1]} : vector<8x256xf32> to vector<8x64xf32>
    %208 = vector.extract_strided_slice %205 {offsets = [0, 128], sizes = [8, 64], strides = [1, 1]} : vector<8x256xf32> to vector<8x64xf32>
    %209 = vector.extract_strided_slice %205 {offsets = [0, 192], sizes = [8, 64], strides = [1, 1]} : vector<8x256xf32> to vector<8x64xf32>
    %cst_54 = arith.constant 2.000000e+00 : f32
    %210 = vector.broadcast %cst_54 : f32 to vector<8x64xf32>
    %211 = arith.mulf %210, %209 : vector<8x64xf32>
    %cst_55 = arith.constant 1.000000e+00 : f32
    %212 = vector.broadcast %cst_55 : f32 to vector<8x64xf32>
    %213 = arith.subf %211, %212 : vector<8x64xf32>
    %214 = arith.mulf %206, %192 : vector<8x64xf32>
    %215 = arith.mulf %207, %213 : vector<8x64xf32>
    %216 = arith.addf %214, %215 : vector<8x64xf32>
    %217 = math.tanh %216 : vector<8x64xf32>
    %218 = arith.mulf %208, %217 : vector<8x64xf32>
    %c9_i32 = arith.constant 9 : i32
    %219 = arith.index_cast %c9_i32 : i32 to index
    %c0_56 = arith.constant 0 : index
    %c0_57 = arith.constant 0 : index
    %220 = vector.load %arg1[%219, %c0_56, %c0_57] : memref<28x8x256xf32, #tpu.memory_space<vmem>>, vector<1x8x256xf32>
    %221 = vector.shape_cast %220 : vector<1x8x256xf32> to vector<8x256xf32>
    %222 = arith.truncf %218 : vector<8x64xf32> to vector<8x64xbf16>
    %cst_58 = arith.constant dense<0.000000e+00> : vector<8x256xf32>
    %223 = tpu.matmul %222, %0, %cst_58 {dimension_numbers = #tpu.dot_dimension_numbers<[1], [0], [0], [1], [0, 0, 1, 1], [], []>} : vector<8x64xbf16>, vector<64x256xbf16>, vector<8x256xf32> -> vector<8x256xf32>
    %224 = arith.addf %221, %223 : vector<8x256xf32>
    %225 = arith.negf %224 : vector<8x256xf32>
    %226 = math.exp %225 : vector<8x256xf32>
    %cst_59 = arith.constant 1.000000e+00 : f32
    %227 = vector.broadcast %cst_59 : f32 to vector<8x256xf32>
    %228 = arith.addf %227, %226 : vector<8x256xf32>
    %229 = arith.divf %227, %228 : vector<8x256xf32>
    %230 = vector.extract_strided_slice %229 {offsets = [0, 0], sizes = [8, 64], strides = [1, 1]} : vector<8x256xf32> to vector<8x64xf32>
    %231 = vector.extract_strided_slice %229 {offsets = [0, 64], sizes = [8, 64], strides = [1, 1]} : vector<8x256xf32> to vector<8x64xf32>
    %232 = vector.extract_strided_slice %229 {offsets = [0, 128], sizes = [8, 64], strides = [1, 1]} : vector<8x256xf32> to vector<8x64xf32>
    %233 = vector.extract_strided_slice %229 {offsets = [0, 192], sizes = [8, 64], strides = [1, 1]} : vector<8x256xf32> to vector<8x64xf32>
    %cst_60 = arith.constant 2.000000e+00 : f32
    %234 = vector.broadcast %cst_60 : f32 to vector<8x64xf32>
    %235 = arith.mulf %234, %233 : vector<8x64xf32>
    %cst_61 = arith.constant 1.000000e+00 : f32
    %236 = vector.broadcast %cst_61 : f32 to vector<8x64xf32>
    %237 = arith.subf %235, %236 : vector<8x64xf32>
    %238 = arith.mulf %230, %216 : vector<8x64xf32>
    %239 = arith.mulf %231, %237 : vector<8x64xf32>
    %240 = arith.addf %238, %239 : vector<8x64xf32>
    %241 = math.tanh %240 : vector<8x64xf32>
    %242 = arith.mulf %232, %241 : vector<8x64xf32>
    %c10_i32 = arith.constant 10 : i32
    %243 = arith.index_cast %c10_i32 : i32 to index
    %c0_62 = arith.constant 0 : index
    %c0_63 = arith.constant 0 : index
    %244 = vector.load %arg1[%243, %c0_62, %c0_63] : memref<28x8x256xf32, #tpu.memory_space<vmem>>, vector<1x8x256xf32>
    %245 = vector.shape_cast %244 : vector<1x8x256xf32> to vector<8x256xf32>
    %246 = arith.truncf %242 : vector<8x64xf32> to vector<8x64xbf16>
    %cst_64 = arith.constant dense<0.000000e+00> : vector<8x256xf32>
    %247 = tpu.matmul %246, %0, %cst_64 {dimension_numbers = #tpu.dot_dimension_numbers<[1], [0], [0], [1], [0, 0, 1, 1], [], []>} : vector<8x64xbf16>, vector<64x256xbf16>, vector<8x256xf32> -> vector<8x256xf32>
    %248 = arith.addf %245, %247 : vector<8x256xf32>
    %249 = arith.negf %248 : vector<8x256xf32>
    %250 = math.exp %249 : vector<8x256xf32>
    %cst_65 = arith.constant 1.000000e+00 : f32
    %251 = vector.broadcast %cst_65 : f32 to vector<8x256xf32>
    %252 = arith.addf %251, %250 : vector<8x256xf32>
    %253 = arith.divf %251, %252 : vector<8x256xf32>
    %254 = vector.extract_strided_slice %253 {offsets = [0, 0], sizes = [8, 64], strides = [1, 1]} : vector<8x256xf32> to vector<8x64xf32>
    %255 = vector.extract_strided_slice %253 {offsets = [0, 64], sizes = [8, 64], strides = [1, 1]} : vector<8x256xf32> to vector<8x64xf32>
    %256 = vector.extract_strided_slice %253 {offsets = [0, 128], sizes = [8, 64], strides = [1, 1]} : vector<8x256xf32> to vector<8x64xf32>
    %257 = vector.extract_strided_slice %253 {offsets = [0, 192], sizes = [8, 64], strides = [1, 1]} : vector<8x256xf32> to vector<8x64xf32>
    %cst_66 = arith.constant 2.000000e+00 : f32
    %258 = vector.broadcast %cst_66 : f32 to vector<8x64xf32>
    %259 = arith.mulf %258, %257 : vector<8x64xf32>
    %cst_67 = arith.constant 1.000000e+00 : f32
    %260 = vector.broadcast %cst_67 : f32 to vector<8x64xf32>
    %261 = arith.subf %259, %260 : vector<8x64xf32>
    %262 = arith.mulf %254, %240 : vector<8x64xf32>
    %263 = arith.mulf %255, %261 : vector<8x64xf32>
    %264 = arith.addf %262, %263 : vector<8x64xf32>
    %265 = math.tanh %264 : vector<8x64xf32>
    %266 = arith.mulf %256, %265 : vector<8x64xf32>
    %c11_i32 = arith.constant 11 : i32
    %267 = arith.index_cast %c11_i32 : i32 to index
    %c0_68 = arith.constant 0 : index
    %c0_69 = arith.constant 0 : index
    %268 = vector.load %arg1[%267, %c0_68, %c0_69] : memref<28x8x256xf32, #tpu.memory_space<vmem>>, vector<1x8x256xf32>
    %269 = vector.shape_cast %268 : vector<1x8x256xf32> to vector<8x256xf32>
    %270 = arith.truncf %266 : vector<8x64xf32> to vector<8x64xbf16>
    %cst_70 = arith.constant dense<0.000000e+00> : vector<8x256xf32>
    %271 = tpu.matmul %270, %0, %cst_70 {dimension_numbers = #tpu.dot_dimension_numbers<[1], [0], [0], [1], [0, 0, 1, 1], [], []>} : vector<8x64xbf16>, vector<64x256xbf16>, vector<8x256xf32> -> vector<8x256xf32>
    %272 = arith.addf %269, %271 : vector<8x256xf32>
    %273 = arith.negf %272 : vector<8x256xf32>
    %274 = math.exp %273 : vector<8x256xf32>
    %cst_71 = arith.constant 1.000000e+00 : f32
    %275 = vector.broadcast %cst_71 : f32 to vector<8x256xf32>
    %276 = arith.addf %275, %274 : vector<8x256xf32>
    %277 = arith.divf %275, %276 : vector<8x256xf32>
    %278 = vector.extract_strided_slice %277 {offsets = [0, 0], sizes = [8, 64], strides = [1, 1]} : vector<8x256xf32> to vector<8x64xf32>
    %279 = vector.extract_strided_slice %277 {offsets = [0, 64], sizes = [8, 64], strides = [1, 1]} : vector<8x256xf32> to vector<8x64xf32>
    %280 = vector.extract_strided_slice %277 {offsets = [0, 128], sizes = [8, 64], strides = [1, 1]} : vector<8x256xf32> to vector<8x64xf32>
    %281 = vector.extract_strided_slice %277 {offsets = [0, 192], sizes = [8, 64], strides = [1, 1]} : vector<8x256xf32> to vector<8x64xf32>
    %cst_72 = arith.constant 2.000000e+00 : f32
    %282 = vector.broadcast %cst_72 : f32 to vector<8x64xf32>
    %283 = arith.mulf %282, %281 : vector<8x64xf32>
    %cst_73 = arith.constant 1.000000e+00 : f32
    %284 = vector.broadcast %cst_73 : f32 to vector<8x64xf32>
    %285 = arith.subf %283, %284 : vector<8x64xf32>
    %286 = arith.mulf %278, %264 : vector<8x64xf32>
    %287 = arith.mulf %279, %285 : vector<8x64xf32>
    %288 = arith.addf %286, %287 : vector<8x64xf32>
    %289 = math.tanh %288 : vector<8x64xf32>
    %290 = arith.mulf %280, %289 : vector<8x64xf32>
    %c12_i32 = arith.constant 12 : i32
    %291 = arith.index_cast %c12_i32 : i32 to index
    %c0_74 = arith.constant 0 : index
    %c0_75 = arith.constant 0 : index
    %292 = vector.load %arg1[%291, %c0_74, %c0_75] : memref<28x8x256xf32, #tpu.memory_space<vmem>>, vector<1x8x256xf32>
    %293 = vector.shape_cast %292 : vector<1x8x256xf32> to vector<8x256xf32>
    %294 = arith.truncf %290 : vector<8x64xf32> to vector<8x64xbf16>
    %cst_76 = arith.constant dense<0.000000e+00> : vector<8x256xf32>
    %295 = tpu.matmul %294, %0, %cst_76 {dimension_numbers = #tpu.dot_dimension_numbers<[1], [0], [0], [1], [0, 0, 1, 1], [], []>} : vector<8x64xbf16>, vector<64x256xbf16>, vector<8x256xf32> -> vector<8x256xf32>
    %296 = arith.addf %293, %295 : vector<8x256xf32>
    %297 = arith.negf %296 : vector<8x256xf32>
    %298 = math.exp %297 : vector<8x256xf32>
    %cst_77 = arith.constant 1.000000e+00 : f32
    %299 = vector.broadcast %cst_77 : f32 to vector<8x256xf32>
    %300 = arith.addf %299, %298 : vector<8x256xf32>
    %301 = arith.divf %299, %300 : vector<8x256xf32>
    %302 = vector.extract_strided_slice %301 {offsets = [0, 0], sizes = [8, 64], strides = [1, 1]} : vector<8x256xf32> to vector<8x64xf32>
    %303 = vector.extract_strided_slice %301 {offsets = [0, 64], sizes = [8, 64], strides = [1, 1]} : vector<8x256xf32> to vector<8x64xf32>
    %304 = vector.extract_strided_slice %301 {offsets = [0, 128], sizes = [8, 64], strides = [1, 1]} : vector<8x256xf32> to vector<8x64xf32>
    %305 = vector.extract_strided_slice %301 {offsets = [0, 192], sizes = [8, 64], strides = [1, 1]} : vector<8x256xf32> to vector<8x64xf32>
    %cst_78 = arith.constant 2.000000e+00 : f32
    %306 = vector.broadcast %cst_78 : f32 to vector<8x64xf32>
    %307 = arith.mulf %306, %305 : vector<8x64xf32>
    %cst_79 = arith.constant 1.000000e+00 : f32
    %308 = vector.broadcast %cst_79 : f32 to vector<8x64xf32>
    %309 = arith.subf %307, %308 : vector<8x64xf32>
    %310 = arith.mulf %302, %288 : vector<8x64xf32>
    %311 = arith.mulf %303, %309 : vector<8x64xf32>
    %312 = arith.addf %310, %311 : vector<8x64xf32>
    %313 = math.tanh %312 : vector<8x64xf32>
    %314 = arith.mulf %304, %313 : vector<8x64xf32>
    %c13_i32 = arith.constant 13 : i32
    %315 = arith.index_cast %c13_i32 : i32 to index
    %c0_80 = arith.constant 0 : index
    %c0_81 = arith.constant 0 : index
    %316 = vector.load %arg1[%315, %c0_80, %c0_81] : memref<28x8x256xf32, #tpu.memory_space<vmem>>, vector<1x8x256xf32>
    %317 = vector.shape_cast %316 : vector<1x8x256xf32> to vector<8x256xf32>
    %318 = arith.truncf %314 : vector<8x64xf32> to vector<8x64xbf16>
    %cst_82 = arith.constant dense<0.000000e+00> : vector<8x256xf32>
    %319 = tpu.matmul %318, %0, %cst_82 {dimension_numbers = #tpu.dot_dimension_numbers<[1], [0], [0], [1], [0, 0, 1, 1], [], []>} : vector<8x64xbf16>, vector<64x256xbf16>, vector<8x256xf32> -> vector<8x256xf32>
    %320 = arith.addf %317, %319 : vector<8x256xf32>
    %321 = arith.negf %320 : vector<8x256xf32>
    %322 = math.exp %321 : vector<8x256xf32>
    %cst_83 = arith.constant 1.000000e+00 : f32
    %323 = vector.broadcast %cst_83 : f32 to vector<8x256xf32>
    %324 = arith.addf %323, %322 : vector<8x256xf32>
    %325 = arith.divf %323, %324 : vector<8x256xf32>
    %326 = vector.extract_strided_slice %325 {offsets = [0, 0], sizes = [8, 64], strides = [1, 1]} : vector<8x256xf32> to vector<8x64xf32>
    %327 = vector.extract_strided_slice %325 {offsets = [0, 64], sizes = [8, 64], strides = [1, 1]} : vector<8x256xf32> to vector<8x64xf32>
    %328 = vector.extract_strided_slice %325 {offsets = [0, 128], sizes = [8, 64], strides = [1, 1]} : vector<8x256xf32> to vector<8x64xf32>
    %329 = vector.extract_strided_slice %325 {offsets = [0, 192], sizes = [8, 64], strides = [1, 1]} : vector<8x256xf32> to vector<8x64xf32>
    %cst_84 = arith.constant 2.000000e+00 : f32
    %330 = vector.broadcast %cst_84 : f32 to vector<8x64xf32>
    %331 = arith.mulf %330, %329 : vector<8x64xf32>
    %cst_85 = arith.constant 1.000000e+00 : f32
    %332 = vector.broadcast %cst_85 : f32 to vector<8x64xf32>
    %333 = arith.subf %331, %332 : vector<8x64xf32>
    %334 = arith.mulf %326, %312 : vector<8x64xf32>
    %335 = arith.mulf %327, %333 : vector<8x64xf32>
    %336 = arith.addf %334, %335 : vector<8x64xf32>
    %337 = math.tanh %336 : vector<8x64xf32>
    %338 = arith.mulf %328, %337 : vector<8x64xf32>
    %c14_i32 = arith.constant 14 : i32
    %339 = arith.index_cast %c14_i32 : i32 to index
    %c0_86 = arith.constant 0 : index
    %c0_87 = arith.constant 0 : index
    %340 = vector.load %arg1[%339, %c0_86, %c0_87] : memref<28x8x256xf32, #tpu.memory_space<vmem>>, vector<1x8x256xf32>
    %341 = vector.shape_cast %340 : vector<1x8x256xf32> to vector<8x256xf32>
    %342 = arith.truncf %338 : vector<8x64xf32> to vector<8x64xbf16>
    %cst_88 = arith.constant dense<0.000000e+00> : vector<8x256xf32>
    %343 = tpu.matmul %342, %0, %cst_88 {dimension_numbers = #tpu.dot_dimension_numbers<[1], [0], [0], [1], [0, 0, 1, 1], [], []>} : vector<8x64xbf16>, vector<64x256xbf16>, vector<8x256xf32> -> vector<8x256xf32>
    %344 = arith.addf %341, %343 : vector<8x256xf32>
    %345 = arith.negf %344 : vector<8x256xf32>
    %346 = math.exp %345 : vector<8x256xf32>
    %cst_89 = arith.constant 1.000000e+00 : f32
    %347 = vector.broadcast %cst_89 : f32 to vector<8x256xf32>
    %348 = arith.addf %347, %346 : vector<8x256xf32>
    %349 = arith.divf %347, %348 : vector<8x256xf32>
    %350 = vector.extract_strided_slice %349 {offsets = [0, 0], sizes = [8, 64], strides = [1, 1]} : vector<8x256xf32> to vector<8x64xf32>
    %351 = vector.extract_strided_slice %349 {offsets = [0, 64], sizes = [8, 64], strides = [1, 1]} : vector<8x256xf32> to vector<8x64xf32>
    %352 = vector.extract_strided_slice %349 {offsets = [0, 128], sizes = [8, 64], strides = [1, 1]} : vector<8x256xf32> to vector<8x64xf32>
    %353 = vector.extract_strided_slice %349 {offsets = [0, 192], sizes = [8, 64], strides = [1, 1]} : vector<8x256xf32> to vector<8x64xf32>
    %cst_90 = arith.constant 2.000000e+00 : f32
    %354 = vector.broadcast %cst_90 : f32 to vector<8x64xf32>
    %355 = arith.mulf %354, %353 : vector<8x64xf32>
    %cst_91 = arith.constant 1.000000e+00 : f32
    %356 = vector.broadcast %cst_91 : f32 to vector<8x64xf32>
    %357 = arith.subf %355, %356 : vector<8x64xf32>
    %358 = arith.mulf %350, %336 : vector<8x64xf32>
    %359 = arith.mulf %351, %357 : vector<8x64xf32>
    %360 = arith.addf %358, %359 : vector<8x64xf32>
    %361 = math.tanh %360 : vector<8x64xf32>
    %362 = arith.mulf %352, %361 : vector<8x64xf32>
    %c15_i32 = arith.constant 15 : i32
    %363 = arith.index_cast %c15_i32 : i32 to index
    %c0_92 = arith.constant 0 : index
    %c0_93 = arith.constant 0 : index
    %364 = vector.load %arg1[%363, %c0_92, %c0_93] : memref<28x8x256xf32, #tpu.memory_space<vmem>>, vector<1x8x256xf32>
    %365 = vector.shape_cast %364 : vector<1x8x256xf32> to vector<8x256xf32>
    %366 = arith.truncf %362 : vector<8x64xf32> to vector<8x64xbf16>
    %cst_94 = arith.constant dense<0.000000e+00> : vector<8x256xf32>
    %367 = tpu.matmul %366, %0, %cst_94 {dimension_numbers = #tpu.dot_dimension_numbers<[1], [0], [0], [1], [0, 0, 1, 1], [], []>} : vector<8x64xbf16>, vector<64x256xbf16>, vector<8x256xf32> -> vector<8x256xf32>
    %368 = arith.addf %365, %367 : vector<8x256xf32>
    %369 = arith.negf %368 : vector<8x256xf32>
    %370 = math.exp %369 : vector<8x256xf32>
    %cst_95 = arith.constant 1.000000e+00 : f32
    %371 = vector.broadcast %cst_95 : f32 to vector<8x256xf32>
    %372 = arith.addf %371, %370 : vector<8x256xf32>
    %373 = arith.divf %371, %372 : vector<8x256xf32>
    %374 = vector.extract_strided_slice %373 {offsets = [0, 0], sizes = [8, 64], strides = [1, 1]} : vector<8x256xf32> to vector<8x64xf32>
    %375 = vector.extract_strided_slice %373 {offsets = [0, 64], sizes = [8, 64], strides = [1, 1]} : vector<8x256xf32> to vector<8x64xf32>
    %376 = vector.extract_strided_slice %373 {offsets = [0, 128], sizes = [8, 64], strides = [1, 1]} : vector<8x256xf32> to vector<8x64xf32>
    %377 = vector.extract_strided_slice %373 {offsets = [0, 192], sizes = [8, 64], strides = [1, 1]} : vector<8x256xf32> to vector<8x64xf32>
    %cst_96 = arith.constant 2.000000e+00 : f32
    %378 = vector.broadcast %cst_96 : f32 to vector<8x64xf32>
    %379 = arith.mulf %378, %377 : vector<8x64xf32>
    %cst_97 = arith.constant 1.000000e+00 : f32
    %380 = vector.broadcast %cst_97 : f32 to vector<8x64xf32>
    %381 = arith.subf %379, %380 : vector<8x64xf32>
    %382 = arith.mulf %374, %360 : vector<8x64xf32>
    %383 = arith.mulf %375, %381 : vector<8x64xf32>
    %384 = arith.addf %382, %383 : vector<8x64xf32>
    %385 = math.tanh %384 : vector<8x64xf32>
    %386 = arith.mulf %376, %385 : vector<8x64xf32>
    %c16_i32 = arith.constant 16 : i32
    %387 = arith.index_cast %c16_i32 : i32 to index
    %c0_98 = arith.constant 0 : index
    %c0_99 = arith.constant 0 : index
    %388 = vector.load %arg1[%387, %c0_98, %c0_99] : memref<28x8x256xf32, #tpu.memory_space<vmem>>, vector<1x8x256xf32>
    %389 = vector.shape_cast %388 : vector<1x8x256xf32> to vector<8x256xf32>
    %390 = arith.truncf %386 : vector<8x64xf32> to vector<8x64xbf16>
    %cst_100 = arith.constant dense<0.000000e+00> : vector<8x256xf32>
    %391 = tpu.matmul %390, %0, %cst_100 {dimension_numbers = #tpu.dot_dimension_numbers<[1], [0], [0], [1], [0, 0, 1, 1], [], []>} : vector<8x64xbf16>, vector<64x256xbf16>, vector<8x256xf32> -> vector<8x256xf32>
    %392 = arith.addf %389, %391 : vector<8x256xf32>
    %393 = arith.negf %392 : vector<8x256xf32>
    %394 = math.exp %393 : vector<8x256xf32>
    %cst_101 = arith.constant 1.000000e+00 : f32
    %395 = vector.broadcast %cst_101 : f32 to vector<8x256xf32>
    %396 = arith.addf %395, %394 : vector<8x256xf32>
    %397 = arith.divf %395, %396 : vector<8x256xf32>
    %398 = vector.extract_strided_slice %397 {offsets = [0, 0], sizes = [8, 64], strides = [1, 1]} : vector<8x256xf32> to vector<8x64xf32>
    %399 = vector.extract_strided_slice %397 {offsets = [0, 64], sizes = [8, 64], strides = [1, 1]} : vector<8x256xf32> to vector<8x64xf32>
    %400 = vector.extract_strided_slice %397 {offsets = [0, 128], sizes = [8, 64], strides = [1, 1]} : vector<8x256xf32> to vector<8x64xf32>
    %401 = vector.extract_strided_slice %397 {offsets = [0, 192], sizes = [8, 64], strides = [1, 1]} : vector<8x256xf32> to vector<8x64xf32>
    %cst_102 = arith.constant 2.000000e+00 : f32
    %402 = vector.broadcast %cst_102 : f32 to vector<8x64xf32>
    %403 = arith.mulf %402, %401 : vector<8x64xf32>
    %cst_103 = arith.constant 1.000000e+00 : f32
    %404 = vector.broadcast %cst_103 : f32 to vector<8x64xf32>
    %405 = arith.subf %403, %404 : vector<8x64xf32>
    %406 = arith.mulf %398, %384 : vector<8x64xf32>
    %407 = arith.mulf %399, %405 : vector<8x64xf32>
    %408 = arith.addf %406, %407 : vector<8x64xf32>
    %409 = math.tanh %408 : vector<8x64xf32>
    %410 = arith.mulf %400, %409 : vector<8x64xf32>
    %c17_i32 = arith.constant 17 : i32
    %411 = arith.index_cast %c17_i32 : i32 to index
    %c0_104 = arith.constant 0 : index
    %c0_105 = arith.constant 0 : index
    %412 = vector.load %arg1[%411, %c0_104, %c0_105] : memref<28x8x256xf32, #tpu.memory_space<vmem>>, vector<1x8x256xf32>
    %413 = vector.shape_cast %412 : vector<1x8x256xf32> to vector<8x256xf32>
    %414 = arith.truncf %410 : vector<8x64xf32> to vector<8x64xbf16>
    %cst_106 = arith.constant dense<0.000000e+00> : vector<8x256xf32>
    %415 = tpu.matmul %414, %0, %cst_106 {dimension_numbers = #tpu.dot_dimension_numbers<[1], [0], [0], [1], [0, 0, 1, 1], [], []>} : vector<8x64xbf16>, vector<64x256xbf16>, vector<8x256xf32> -> vector<8x256xf32>
    %416 = arith.addf %413, %415 : vector<8x256xf32>
    %417 = arith.negf %416 : vector<8x256xf32>
    %418 = math.exp %417 : vector<8x256xf32>
    %cst_107 = arith.constant 1.000000e+00 : f32
    %419 = vector.broadcast %cst_107 : f32 to vector<8x256xf32>
    %420 = arith.addf %419, %418 : vector<8x256xf32>
    %421 = arith.divf %419, %420 : vector<8x256xf32>
    %422 = vector.extract_strided_slice %421 {offsets = [0, 0], sizes = [8, 64], strides = [1, 1]} : vector<8x256xf32> to vector<8x64xf32>
    %423 = vector.extract_strided_slice %421 {offsets = [0, 64], sizes = [8, 64], strides = [1, 1]} : vector<8x256xf32> to vector<8x64xf32>
    %424 = vector.extract_strided_slice %421 {offsets = [0, 128], sizes = [8, 64], strides = [1, 1]} : vector<8x256xf32> to vector<8x64xf32>
    %425 = vector.extract_strided_slice %421 {offsets = [0, 192], sizes = [8, 64], strides = [1, 1]} : vector<8x256xf32> to vector<8x64xf32>
    %cst_108 = arith.constant 2.000000e+00 : f32
    %426 = vector.broadcast %cst_108 : f32 to vector<8x64xf32>
    %427 = arith.mulf %426, %425 : vector<8x64xf32>
    %cst_109 = arith.constant 1.000000e+00 : f32
    %428 = vector.broadcast %cst_109 : f32 to vector<8x64xf32>
    %429 = arith.subf %427, %428 : vector<8x64xf32>
    %430 = arith.mulf %422, %408 : vector<8x64xf32>
    %431 = arith.mulf %423, %429 : vector<8x64xf32>
    %432 = arith.addf %430, %431 : vector<8x64xf32>
    %433 = math.tanh %432 : vector<8x64xf32>
    %434 = arith.mulf %424, %433 : vector<8x64xf32>
    %c18_i32 = arith.constant 18 : i32
    %435 = arith.index_cast %c18_i32 : i32 to index
    %c0_110 = arith.constant 0 : index
    %c0_111 = arith.constant 0 : index
    %436 = vector.load %arg1[%435, %c0_110, %c0_111] : memref<28x8x256xf32, #tpu.memory_space<vmem>>, vector<1x8x256xf32>
    %437 = vector.shape_cast %436 : vector<1x8x256xf32> to vector<8x256xf32>
    %438 = arith.truncf %434 : vector<8x64xf32> to vector<8x64xbf16>
    %cst_112 = arith.constant dense<0.000000e+00> : vector<8x256xf32>
    %439 = tpu.matmul %438, %0, %cst_112 {dimension_numbers = #tpu.dot_dimension_numbers<[1], [0], [0], [1], [0, 0, 1, 1], [], []>} : vector<8x64xbf16>, vector<64x256xbf16>, vector<8x256xf32> -> vector<8x256xf32>
    %440 = arith.addf %437, %439 : vector<8x256xf32>
    %441 = arith.negf %440 : vector<8x256xf32>
    %442 = math.exp %441 : vector<8x256xf32>
    %cst_113 = arith.constant 1.000000e+00 : f32
    %443 = vector.broadcast %cst_113 : f32 to vector<8x256xf32>
    %444 = arith.addf %443, %442 : vector<8x256xf32>
    %445 = arith.divf %443, %444 : vector<8x256xf32>
    %446 = vector.extract_strided_slice %445 {offsets = [0, 0], sizes = [8, 64], strides = [1, 1]} : vector<8x256xf32> to vector<8x64xf32>
    %447 = vector.extract_strided_slice %445 {offsets = [0, 64], sizes = [8, 64], strides = [1, 1]} : vector<8x256xf32> to vector<8x64xf32>
    %448 = vector.extract_strided_slice %445 {offsets = [0, 128], sizes = [8, 64], strides = [1, 1]} : vector<8x256xf32> to vector<8x64xf32>
    %449 = vector.extract_strided_slice %445 {offsets = [0, 192], sizes = [8, 64], strides = [1, 1]} : vector<8x256xf32> to vector<8x64xf32>
    %cst_114 = arith.constant 2.000000e+00 : f32
    %450 = vector.broadcast %cst_114 : f32 to vector<8x64xf32>
    %451 = arith.mulf %450, %449 : vector<8x64xf32>
    %cst_115 = arith.constant 1.000000e+00 : f32
    %452 = vector.broadcast %cst_115 : f32 to vector<8x64xf32>
    %453 = arith.subf %451, %452 : vector<8x64xf32>
    %454 = arith.mulf %446, %432 : vector<8x64xf32>
    %455 = arith.mulf %447, %453 : vector<8x64xf32>
    %456 = arith.addf %454, %455 : vector<8x64xf32>
    %457 = math.tanh %456 : vector<8x64xf32>
    %458 = arith.mulf %448, %457 : vector<8x64xf32>
    %c19_i32 = arith.constant 19 : i32
    %459 = arith.index_cast %c19_i32 : i32 to index
    %c0_116 = arith.constant 0 : index
    %c0_117 = arith.constant 0 : index
    %460 = vector.load %arg1[%459, %c0_116, %c0_117] : memref<28x8x256xf32, #tpu.memory_space<vmem>>, vector<1x8x256xf32>
    %461 = vector.shape_cast %460 : vector<1x8x256xf32> to vector<8x256xf32>
    %462 = arith.truncf %458 : vector<8x64xf32> to vector<8x64xbf16>
    %cst_118 = arith.constant dense<0.000000e+00> : vector<8x256xf32>
    %463 = tpu.matmul %462, %0, %cst_118 {dimension_numbers = #tpu.dot_dimension_numbers<[1], [0], [0], [1], [0, 0, 1, 1], [], []>} : vector<8x64xbf16>, vector<64x256xbf16>, vector<8x256xf32> -> vector<8x256xf32>
    %464 = arith.addf %461, %463 : vector<8x256xf32>
    %465 = arith.negf %464 : vector<8x256xf32>
    %466 = math.exp %465 : vector<8x256xf32>
    %cst_119 = arith.constant 1.000000e+00 : f32
    %467 = vector.broadcast %cst_119 : f32 to vector<8x256xf32>
    %468 = arith.addf %467, %466 : vector<8x256xf32>
    %469 = arith.divf %467, %468 : vector<8x256xf32>
    %470 = vector.extract_strided_slice %469 {offsets = [0, 0], sizes = [8, 64], strides = [1, 1]} : vector<8x256xf32> to vector<8x64xf32>
    %471 = vector.extract_strided_slice %469 {offsets = [0, 64], sizes = [8, 64], strides = [1, 1]} : vector<8x256xf32> to vector<8x64xf32>
    %472 = vector.extract_strided_slice %469 {offsets = [0, 128], sizes = [8, 64], strides = [1, 1]} : vector<8x256xf32> to vector<8x64xf32>
    %473 = vector.extract_strided_slice %469 {offsets = [0, 192], sizes = [8, 64], strides = [1, 1]} : vector<8x256xf32> to vector<8x64xf32>
    %cst_120 = arith.constant 2.000000e+00 : f32
    %474 = vector.broadcast %cst_120 : f32 to vector<8x64xf32>
    %475 = arith.mulf %474, %473 : vector<8x64xf32>
    %cst_121 = arith.constant 1.000000e+00 : f32
    %476 = vector.broadcast %cst_121 : f32 to vector<8x64xf32>
    %477 = arith.subf %475, %476 : vector<8x64xf32>
    %478 = arith.mulf %470, %456 : vector<8x64xf32>
    %479 = arith.mulf %471, %477 : vector<8x64xf32>
    %480 = arith.addf %478, %479 : vector<8x64xf32>
    %481 = math.tanh %480 : vector<8x64xf32>
    %482 = arith.mulf %472, %481 : vector<8x64xf32>
    %c20_i32 = arith.constant 20 : i32
    %483 = arith.index_cast %c20_i32 : i32 to index
    %c0_122 = arith.constant 0 : index
    %c0_123 = arith.constant 0 : index
    %484 = vector.load %arg1[%483, %c0_122, %c0_123] : memref<28x8x256xf32, #tpu.memory_space<vmem>>, vector<1x8x256xf32>
    %485 = vector.shape_cast %484 : vector<1x8x256xf32> to vector<8x256xf32>
    %486 = arith.truncf %482 : vector<8x64xf32> to vector<8x64xbf16>
    %cst_124 = arith.constant dense<0.000000e+00> : vector<8x256xf32>
    %487 = tpu.matmul %486, %0, %cst_124 {dimension_numbers = #tpu.dot_dimension_numbers<[1], [0], [0], [1], [0, 0, 1, 1], [], []>} : vector<8x64xbf16>, vector<64x256xbf16>, vector<8x256xf32> -> vector<8x256xf32>
    %488 = arith.addf %485, %487 : vector<8x256xf32>
    %489 = arith.negf %488 : vector<8x256xf32>
    %490 = math.exp %489 : vector<8x256xf32>
    %cst_125 = arith.constant 1.000000e+00 : f32
    %491 = vector.broadcast %cst_125 : f32 to vector<8x256xf32>
    %492 = arith.addf %491, %490 : vector<8x256xf32>
    %493 = arith.divf %491, %492 : vector<8x256xf32>
    %494 = vector.extract_strided_slice %493 {offsets = [0, 0], sizes = [8, 64], strides = [1, 1]} : vector<8x256xf32> to vector<8x64xf32>
    %495 = vector.extract_strided_slice %493 {offsets = [0, 64], sizes = [8, 64], strides = [1, 1]} : vector<8x256xf32> to vector<8x64xf32>
    %496 = vector.extract_strided_slice %493 {offsets = [0, 128], sizes = [8, 64], strides = [1, 1]} : vector<8x256xf32> to vector<8x64xf32>
    %497 = vector.extract_strided_slice %493 {offsets = [0, 192], sizes = [8, 64], strides = [1, 1]} : vector<8x256xf32> to vector<8x64xf32>
    %cst_126 = arith.constant 2.000000e+00 : f32
    %498 = vector.broadcast %cst_126 : f32 to vector<8x64xf32>
    %499 = arith.mulf %498, %497 : vector<8x64xf32>
    %cst_127 = arith.constant 1.000000e+00 : f32
    %500 = vector.broadcast %cst_127 : f32 to vector<8x64xf32>
    %501 = arith.subf %499, %500 : vector<8x64xf32>
    %502 = arith.mulf %494, %480 : vector<8x64xf32>
    %503 = arith.mulf %495, %501 : vector<8x64xf32>
    %504 = arith.addf %502, %503 : vector<8x64xf32>
    %505 = math.tanh %504 : vector<8x64xf32>
    %506 = arith.mulf %496, %505 : vector<8x64xf32>
    %c21_i32 = arith.constant 21 : i32
    %507 = arith.index_cast %c21_i32 : i32 to index
    %c0_128 = arith.constant 0 : index
    %c0_129 = arith.constant 0 : index
    %508 = vector.load %arg1[%507, %c0_128, %c0_129] : memref<28x8x256xf32, #tpu.memory_space<vmem>>, vector<1x8x256xf32>
    %509 = vector.shape_cast %508 : vector<1x8x256xf32> to vector<8x256xf32>
    %510 = arith.truncf %506 : vector<8x64xf32> to vector<8x64xbf16>
    %cst_130 = arith.constant dense<0.000000e+00> : vector<8x256xf32>
    %511 = tpu.matmul %510, %0, %cst_130 {dimension_numbers = #tpu.dot_dimension_numbers<[1], [0], [0], [1], [0, 0, 1, 1], [], []>} : vector<8x64xbf16>, vector<64x256xbf16>, vector<8x256xf32> -> vector<8x256xf32>
    %512 = arith.addf %509, %511 : vector<8x256xf32>
    %513 = arith.negf %512 : vector<8x256xf32>
    %514 = math.exp %513 : vector<8x256xf32>
    %cst_131 = arith.constant 1.000000e+00 : f32
    %515 = vector.broadcast %cst_131 : f32 to vector<8x256xf32>
    %516 = arith.addf %515, %514 : vector<8x256xf32>
    %517 = arith.divf %515, %516 : vector<8x256xf32>
    %518 = vector.extract_strided_slice %517 {offsets = [0, 0], sizes = [8, 64], strides = [1, 1]} : vector<8x256xf32> to vector<8x64xf32>
    %519 = vector.extract_strided_slice %517 {offsets = [0, 64], sizes = [8, 64], strides = [1, 1]} : vector<8x256xf32> to vector<8x64xf32>
    %520 = vector.extract_strided_slice %517 {offsets = [0, 128], sizes = [8, 64], strides = [1, 1]} : vector<8x256xf32> to vector<8x64xf32>
    %521 = vector.extract_strided_slice %517 {offsets = [0, 192], sizes = [8, 64], strides = [1, 1]} : vector<8x256xf32> to vector<8x64xf32>
    %cst_132 = arith.constant 2.000000e+00 : f32
    %522 = vector.broadcast %cst_132 : f32 to vector<8x64xf32>
    %523 = arith.mulf %522, %521 : vector<8x64xf32>
    %cst_133 = arith.constant 1.000000e+00 : f32
    %524 = vector.broadcast %cst_133 : f32 to vector<8x64xf32>
    %525 = arith.subf %523, %524 : vector<8x64xf32>
    %526 = arith.mulf %518, %504 : vector<8x64xf32>
    %527 = arith.mulf %519, %525 : vector<8x64xf32>
    %528 = arith.addf %526, %527 : vector<8x64xf32>
    %529 = math.tanh %528 : vector<8x64xf32>
    %530 = arith.mulf %520, %529 : vector<8x64xf32>
    %c22_i32 = arith.constant 22 : i32
    %531 = arith.index_cast %c22_i32 : i32 to index
    %c0_134 = arith.constant 0 : index
    %c0_135 = arith.constant 0 : index
    %532 = vector.load %arg1[%531, %c0_134, %c0_135] : memref<28x8x256xf32, #tpu.memory_space<vmem>>, vector<1x8x256xf32>
    %533 = vector.shape_cast %532 : vector<1x8x256xf32> to vector<8x256xf32>
    %534 = arith.truncf %530 : vector<8x64xf32> to vector<8x64xbf16>
    %cst_136 = arith.constant dense<0.000000e+00> : vector<8x256xf32>
    %535 = tpu.matmul %534, %0, %cst_136 {dimension_numbers = #tpu.dot_dimension_numbers<[1], [0], [0], [1], [0, 0, 1, 1], [], []>} : vector<8x64xbf16>, vector<64x256xbf16>, vector<8x256xf32> -> vector<8x256xf32>
    %536 = arith.addf %533, %535 : vector<8x256xf32>
    %537 = arith.negf %536 : vector<8x256xf32>
    %538 = math.exp %537 : vector<8x256xf32>
    %cst_137 = arith.constant 1.000000e+00 : f32
    %539 = vector.broadcast %cst_137 : f32 to vector<8x256xf32>
    %540 = arith.addf %539, %538 : vector<8x256xf32>
    %541 = arith.divf %539, %540 : vector<8x256xf32>
    %542 = vector.extract_strided_slice %541 {offsets = [0, 0], sizes = [8, 64], strides = [1, 1]} : vector<8x256xf32> to vector<8x64xf32>
    %543 = vector.extract_strided_slice %541 {offsets = [0, 64], sizes = [8, 64], strides = [1, 1]} : vector<8x256xf32> to vector<8x64xf32>
    %544 = vector.extract_strided_slice %541 {offsets = [0, 128], sizes = [8, 64], strides = [1, 1]} : vector<8x256xf32> to vector<8x64xf32>
    %545 = vector.extract_strided_slice %541 {offsets = [0, 192], sizes = [8, 64], strides = [1, 1]} : vector<8x256xf32> to vector<8x64xf32>
    %cst_138 = arith.constant 2.000000e+00 : f32
    %546 = vector.broadcast %cst_138 : f32 to vector<8x64xf32>
    %547 = arith.mulf %546, %545 : vector<8x64xf32>
    %cst_139 = arith.constant 1.000000e+00 : f32
    %548 = vector.broadcast %cst_139 : f32 to vector<8x64xf32>
    %549 = arith.subf %547, %548 : vector<8x64xf32>
    %550 = arith.mulf %542, %528 : vector<8x64xf32>
    %551 = arith.mulf %543, %549 : vector<8x64xf32>
    %552 = arith.addf %550, %551 : vector<8x64xf32>
    %553 = math.tanh %552 : vector<8x64xf32>
    %554 = arith.mulf %544, %553 : vector<8x64xf32>
    %c23_i32 = arith.constant 23 : i32
    %555 = arith.index_cast %c23_i32 : i32 to index
    %c0_140 = arith.constant 0 : index
    %c0_141 = arith.constant 0 : index
    %556 = vector.load %arg1[%555, %c0_140, %c0_141] : memref<28x8x256xf32, #tpu.memory_space<vmem>>, vector<1x8x256xf32>
    %557 = vector.shape_cast %556 : vector<1x8x256xf32> to vector<8x256xf32>
    %558 = arith.truncf %554 : vector<8x64xf32> to vector<8x64xbf16>
    %cst_142 = arith.constant dense<0.000000e+00> : vector<8x256xf32>
    %559 = tpu.matmul %558, %0, %cst_142 {dimension_numbers = #tpu.dot_dimension_numbers<[1], [0], [0], [1], [0, 0, 1, 1], [], []>} : vector<8x64xbf16>, vector<64x256xbf16>, vector<8x256xf32> -> vector<8x256xf32>
    %560 = arith.addf %557, %559 : vector<8x256xf32>
    %561 = arith.negf %560 : vector<8x256xf32>
    %562 = math.exp %561 : vector<8x256xf32>
    %cst_143 = arith.constant 1.000000e+00 : f32
    %563 = vector.broadcast %cst_143 : f32 to vector<8x256xf32>
    %564 = arith.addf %563, %562 : vector<8x256xf32>
    %565 = arith.divf %563, %564 : vector<8x256xf32>
    %566 = vector.extract_strided_slice %565 {offsets = [0, 0], sizes = [8, 64], strides = [1, 1]} : vector<8x256xf32> to vector<8x64xf32>
    %567 = vector.extract_strided_slice %565 {offsets = [0, 64], sizes = [8, 64], strides = [1, 1]} : vector<8x256xf32> to vector<8x64xf32>
    %568 = vector.extract_strided_slice %565 {offsets = [0, 128], sizes = [8, 64], strides = [1, 1]} : vector<8x256xf32> to vector<8x64xf32>
    %569 = vector.extract_strided_slice %565 {offsets = [0, 192], sizes = [8, 64], strides = [1, 1]} : vector<8x256xf32> to vector<8x64xf32>
    %cst_144 = arith.constant 2.000000e+00 : f32
    %570 = vector.broadcast %cst_144 : f32 to vector<8x64xf32>
    %571 = arith.mulf %570, %569 : vector<8x64xf32>
    %cst_145 = arith.constant 1.000000e+00 : f32
    %572 = vector.broadcast %cst_145 : f32 to vector<8x64xf32>
    %573 = arith.subf %571, %572 : vector<8x64xf32>
    %574 = arith.mulf %566, %552 : vector<8x64xf32>
    %575 = arith.mulf %567, %573 : vector<8x64xf32>
    %576 = arith.addf %574, %575 : vector<8x64xf32>
    %577 = math.tanh %576 : vector<8x64xf32>
    %578 = arith.mulf %568, %577 : vector<8x64xf32>
    %c24_i32 = arith.constant 24 : i32
    %579 = arith.index_cast %c24_i32 : i32 to index
    %c0_146 = arith.constant 0 : index
    %c0_147 = arith.constant 0 : index
    %580 = vector.load %arg1[%579, %c0_146, %c0_147] : memref<28x8x256xf32, #tpu.memory_space<vmem>>, vector<1x8x256xf32>
    %581 = vector.shape_cast %580 : vector<1x8x256xf32> to vector<8x256xf32>
    %582 = arith.truncf %578 : vector<8x64xf32> to vector<8x64xbf16>
    %cst_148 = arith.constant dense<0.000000e+00> : vector<8x256xf32>
    %583 = tpu.matmul %582, %0, %cst_148 {dimension_numbers = #tpu.dot_dimension_numbers<[1], [0], [0], [1], [0, 0, 1, 1], [], []>} : vector<8x64xbf16>, vector<64x256xbf16>, vector<8x256xf32> -> vector<8x256xf32>
    %584 = arith.addf %581, %583 : vector<8x256xf32>
    %585 = arith.negf %584 : vector<8x256xf32>
    %586 = math.exp %585 : vector<8x256xf32>
    %cst_149 = arith.constant 1.000000e+00 : f32
    %587 = vector.broadcast %cst_149 : f32 to vector<8x256xf32>
    %588 = arith.addf %587, %586 : vector<8x256xf32>
    %589 = arith.divf %587, %588 : vector<8x256xf32>
    %590 = vector.extract_strided_slice %589 {offsets = [0, 0], sizes = [8, 64], strides = [1, 1]} : vector<8x256xf32> to vector<8x64xf32>
    %591 = vector.extract_strided_slice %589 {offsets = [0, 64], sizes = [8, 64], strides = [1, 1]} : vector<8x256xf32> to vector<8x64xf32>
    %592 = vector.extract_strided_slice %589 {offsets = [0, 128], sizes = [8, 64], strides = [1, 1]} : vector<8x256xf32> to vector<8x64xf32>
    %593 = vector.extract_strided_slice %589 {offsets = [0, 192], sizes = [8, 64], strides = [1, 1]} : vector<8x256xf32> to vector<8x64xf32>
    %cst_150 = arith.constant 2.000000e+00 : f32
    %594 = vector.broadcast %cst_150 : f32 to vector<8x64xf32>
    %595 = arith.mulf %594, %593 : vector<8x64xf32>
    %cst_151 = arith.constant 1.000000e+00 : f32
    %596 = vector.broadcast %cst_151 : f32 to vector<8x64xf32>
    %597 = arith.subf %595, %596 : vector<8x64xf32>
    %598 = arith.mulf %590, %576 : vector<8x64xf32>
    %599 = arith.mulf %591, %597 : vector<8x64xf32>
    %600 = arith.addf %598, %599 : vector<8x64xf32>
    %601 = math.tanh %600 : vector<8x64xf32>
    %602 = arith.mulf %592, %601 : vector<8x64xf32>
    %c25_i32 = arith.constant 25 : i32
    %603 = arith.index_cast %c25_i32 : i32 to index
    %c0_152 = arith.constant 0 : index
    %c0_153 = arith.constant 0 : index
    %604 = vector.load %arg1[%603, %c0_152, %c0_153] : memref<28x8x256xf32, #tpu.memory_space<vmem>>, vector<1x8x256xf32>
    %605 = vector.shape_cast %604 : vector<1x8x256xf32> to vector<8x256xf32>
    %606 = arith.truncf %602 : vector<8x64xf32> to vector<8x64xbf16>
    %cst_154 = arith.constant dense<0.000000e+00> : vector<8x256xf32>
    %607 = tpu.matmul %606, %0, %cst_154 {dimension_numbers = #tpu.dot_dimension_numbers<[1], [0], [0], [1], [0, 0, 1, 1], [], []>} : vector<8x64xbf16>, vector<64x256xbf16>, vector<8x256xf32> -> vector<8x256xf32>
    %608 = arith.addf %605, %607 : vector<8x256xf32>
    %609 = arith.negf %608 : vector<8x256xf32>
    %610 = math.exp %609 : vector<8x256xf32>
    %cst_155 = arith.constant 1.000000e+00 : f32
    %611 = vector.broadcast %cst_155 : f32 to vector<8x256xf32>
    %612 = arith.addf %611, %610 : vector<8x256xf32>
    %613 = arith.divf %611, %612 : vector<8x256xf32>
    %614 = vector.extract_strided_slice %613 {offsets = [0, 0], sizes = [8, 64], strides = [1, 1]} : vector<8x256xf32> to vector<8x64xf32>
    %615 = vector.extract_strided_slice %613 {offsets = [0, 64], sizes = [8, 64], strides = [1, 1]} : vector<8x256xf32> to vector<8x64xf32>
    %616 = vector.extract_strided_slice %613 {offsets = [0, 128], sizes = [8, 64], strides = [1, 1]} : vector<8x256xf32> to vector<8x64xf32>
    %617 = vector.extract_strided_slice %613 {offsets = [0, 192], sizes = [8, 64], strides = [1, 1]} : vector<8x256xf32> to vector<8x64xf32>
    %cst_156 = arith.constant 2.000000e+00 : f32
    %618 = vector.broadcast %cst_156 : f32 to vector<8x64xf32>
    %619 = arith.mulf %618, %617 : vector<8x64xf32>
    %cst_157 = arith.constant 1.000000e+00 : f32
    %620 = vector.broadcast %cst_157 : f32 to vector<8x64xf32>
    %621 = arith.subf %619, %620 : vector<8x64xf32>
    %622 = arith.mulf %614, %600 : vector<8x64xf32>
    %623 = arith.mulf %615, %621 : vector<8x64xf32>
    %624 = arith.addf %622, %623 : vector<8x64xf32>
    %625 = math.tanh %624 : vector<8x64xf32>
    %626 = arith.mulf %616, %625 : vector<8x64xf32>
    %c26_i32 = arith.constant 26 : i32
    %627 = arith.index_cast %c26_i32 : i32 to index
    %c0_158 = arith.constant 0 : index
    %c0_159 = arith.constant 0 : index
    %628 = vector.load %arg1[%627, %c0_158, %c0_159] : memref<28x8x256xf32, #tpu.memory_space<vmem>>, vector<1x8x256xf32>
    %629 = vector.shape_cast %628 : vector<1x8x256xf32> to vector<8x256xf32>
    %630 = arith.truncf %626 : vector<8x64xf32> to vector<8x64xbf16>
    %cst_160 = arith.constant dense<0.000000e+00> : vector<8x256xf32>
    %631 = tpu.matmul %630, %0, %cst_160 {dimension_numbers = #tpu.dot_dimension_numbers<[1], [0], [0], [1], [0, 0, 1, 1], [], []>} : vector<8x64xbf16>, vector<64x256xbf16>, vector<8x256xf32> -> vector<8x256xf32>
    %632 = arith.addf %629, %631 : vector<8x256xf32>
    %633 = arith.negf %632 : vector<8x256xf32>
    %634 = math.exp %633 : vector<8x256xf32>
    %cst_161 = arith.constant 1.000000e+00 : f32
    %635 = vector.broadcast %cst_161 : f32 to vector<8x256xf32>
    %636 = arith.addf %635, %634 : vector<8x256xf32>
    %637 = arith.divf %635, %636 : vector<8x256xf32>
    %638 = vector.extract_strided_slice %637 {offsets = [0, 0], sizes = [8, 64], strides = [1, 1]} : vector<8x256xf32> to vector<8x64xf32>
    %639 = vector.extract_strided_slice %637 {offsets = [0, 64], sizes = [8, 64], strides = [1, 1]} : vector<8x256xf32> to vector<8x64xf32>
    %640 = vector.extract_strided_slice %637 {offsets = [0, 128], sizes = [8, 64], strides = [1, 1]} : vector<8x256xf32> to vector<8x64xf32>
    %641 = vector.extract_strided_slice %637 {offsets = [0, 192], sizes = [8, 64], strides = [1, 1]} : vector<8x256xf32> to vector<8x64xf32>
    %cst_162 = arith.constant 2.000000e+00 : f32
    %642 = vector.broadcast %cst_162 : f32 to vector<8x64xf32>
    %643 = arith.mulf %642, %641 : vector<8x64xf32>
    %cst_163 = arith.constant 1.000000e+00 : f32
    %644 = vector.broadcast %cst_163 : f32 to vector<8x64xf32>
    %645 = arith.subf %643, %644 : vector<8x64xf32>
    %646 = arith.mulf %638, %624 : vector<8x64xf32>
    %647 = arith.mulf %639, %645 : vector<8x64xf32>
    %648 = arith.addf %646, %647 : vector<8x64xf32>
    %649 = math.tanh %648 : vector<8x64xf32>
    %650 = arith.mulf %640, %649 : vector<8x64xf32>
    %c27_i32 = arith.constant 27 : i32
    %651 = arith.index_cast %c27_i32 : i32 to index
    %c0_164 = arith.constant 0 : index
    %c0_165 = arith.constant 0 : index
    %652 = vector.load %arg1[%651, %c0_164, %c0_165] : memref<28x8x256xf32, #tpu.memory_space<vmem>>, vector<1x8x256xf32>
    %653 = vector.shape_cast %652 : vector<1x8x256xf32> to vector<8x256xf32>
    %654 = arith.truncf %650 : vector<8x64xf32> to vector<8x64xbf16>
    %cst_166 = arith.constant dense<0.000000e+00> : vector<8x256xf32>
    %655 = tpu.matmul %654, %0, %cst_166 {dimension_numbers = #tpu.dot_dimension_numbers<[1], [0], [0], [1], [0, 0, 1, 1], [], []>} : vector<8x64xbf16>, vector<64x256xbf16>, vector<8x256xf32> -> vector<8x256xf32>
    %656 = arith.addf %653, %655 : vector<8x256xf32>
    %657 = arith.negf %656 : vector<8x256xf32>
    %658 = math.exp %657 : vector<8x256xf32>
    %cst_167 = arith.constant 1.000000e+00 : f32
    %659 = vector.broadcast %cst_167 : f32 to vector<8x256xf32>
    %660 = arith.addf %659, %658 : vector<8x256xf32>
    %661 = arith.divf %659, %660 : vector<8x256xf32>
    %662 = vector.extract_strided_slice %661 {offsets = [0, 0], sizes = [8, 64], strides = [1, 1]} : vector<8x256xf32> to vector<8x64xf32>
    %663 = vector.extract_strided_slice %661 {offsets = [0, 64], sizes = [8, 64], strides = [1, 1]} : vector<8x256xf32> to vector<8x64xf32>
    %664 = vector.extract_strided_slice %661 {offsets = [0, 128], sizes = [8, 64], strides = [1, 1]} : vector<8x256xf32> to vector<8x64xf32>
    %665 = vector.extract_strided_slice %661 {offsets = [0, 192], sizes = [8, 64], strides = [1, 1]} : vector<8x256xf32> to vector<8x64xf32>
    %cst_168 = arith.constant 2.000000e+00 : f32
    %666 = vector.broadcast %cst_168 : f32 to vector<8x64xf32>
    %667 = arith.mulf %666, %665 : vector<8x64xf32>
    %cst_169 = arith.constant 1.000000e+00 : f32
    %668 = vector.broadcast %cst_169 : f32 to vector<8x64xf32>
    %669 = arith.subf %667, %668 : vector<8x64xf32>
    %670 = arith.mulf %662, %648 : vector<8x64xf32>
    %671 = arith.mulf %663, %669 : vector<8x64xf32>
    %672 = arith.addf %670, %671 : vector<8x64xf32>
    %673 = math.tanh %672 : vector<8x64xf32>
    %674 = arith.mulf %664, %673 : vector<8x64xf32>
    %c28_i32 = arith.constant 28 : i32
    %c0_170 = arith.constant 0 : index
    %c0_171 = arith.constant 0 : index
    %675 = vector.load %arg3[%c0_170, %c0_171] : memref<64x128xf32, #tpu.memory_space<vmem>>, vector<64x128xf32>
    %cst_172 = arith.constant dense<0.000000e+00> : vector<8x128xf32>
    %676 = tpu.matmul %674, %675, %cst_172 {dimension_numbers = #tpu.dot_dimension_numbers<[1], [0], [0], [1], [0, 0, 1, 1], [], []>} : vector<8x64xf32>, vector<64x128xf32>, vector<8x128xf32> -> vector<8x128xf32>
    %c0_173 = arith.constant 0 : index
    %c0_174 = arith.constant 0 : index
    %677 = vector.load %arg4[%c0_173, %c0_174] : memref<1x128xf32, #tpu.memory_space<vmem>>, vector<1x128xf32>
    %678 = vector.broadcast %677 : vector<1x128xf32> to vector<8x128xf32>
    %679 = arith.addf %676, %678 : vector<8x128xf32>
    %cst_175 = arith.constant dense<0xFF800000> : vector<8xf32>
    %680 = vector.multi_reduction <maximumf>, %679, %cst_175 [1] : vector<8x128xf32> to vector<8xf32>
    %681 = vector.shape_cast %680 : vector<8xf32> to vector<8x1xf32>
    %682 = vector.broadcast %681 : vector<8x1xf32> to vector<8x128xf32>
    %683 = arith.subf %679, %682 : vector<8x128xf32>
    %684 = math.exp %683 : vector<8x128xf32>
    %cst_176 = arith.constant dense<0.000000e+00> : vector<8xf32>
    %685 = vector.multi_reduction <add>, %684, %cst_176 [1] : vector<8x128xf32> to vector<8xf32>
    %686 = vector.shape_cast %685 : vector<8xf32> to vector<8x1xf32>
    %687 = vector.broadcast %686 : vector<8x1xf32> to vector<8x128xf32>
    %688 = arith.divf %684, %687 : vector<8x128xf32>
    %c0_177 = arith.constant 0 : index
    %c0_178 = arith.constant 0 : index
    %689 = vector.load %arg5[%c0_177, %c0_178] : memref<8x128xf32, #tpu.memory_space<vmem>>, vector<8x128xf32>
    tpu.vector_store %arg5[%c0_177, %c0_178], %688 {strides = array<i32>} : memref<8x128xf32, #tpu.memory_space<vmem>>, vector<8x128xf32>,
    return
  }
  func.func @transform_0(%arg0: i32) -> (i32, i32, i32) {
    %c0_i32 = arith.constant 0 : i32
    %c0_i32_0 = arith.constant 0 : i32
    %c0_i32_1 = arith.constant 0 : i32
    return %c0_i32, %arg0, %c0_i32_0 : i32, i32, i32
  }
  func.func @transform_1(%arg0: i32) -> (i32, i32) {
    %c0_i32 = arith.constant 0 : i32
    %c0_i32_0 = arith.constant 0 : i32
    %c0_i32_1 = arith.constant 0 : i32
    return %c0_i32, %c0_i32_0 : i32, i32
  }
  func.func @transform_2(%arg0: i32) -> (i32, i32) {
    %c0_i32 = arith.constant 0 : i32
    %c0_i32_0 = arith.constant 0 : i32
    %c0_i32_1 = arith.constant 0 : i32
    return %c0_i32, %c0_i32_0 : i32, i32
  }
  func.func @transform_3(%arg0: i32) -> (i32, i32) {
    %c0_i32 = arith.constant 0 : i32
    %c0_i32_0 = arith.constant 0 : i32
    %c0_i32_1 = arith.constant 0 : i32
    return %c0_i32, %c0_i32_0 : i32, i32
  }
  func.func @transform_4(%arg0: i32) -> (i32, i32) {
    %c0_i32 = arith.constant 0 : i32
    %c0_i32_0 = arith.constant 0 : i32
    return %arg0, %c0_i32 : i32, i32
  }
}

</mosaic_0001>

<llo_original>
// kernel: tpu_custom_call.1
$region0: #{tpu_custom_call.1}
  #allocation0 [shape = 'u32[]', space=smem, size = 0x4, offset = 0x4, fixed_abs, tag = 'smem constant byte address 0x4 - core index']
  #allocation1 [shape = 'u32[72,128]{1,0:T(1,128)}', space=vmem, size = 0x9000, scoped, tag = 'internal scratch']
  %s0 = inlined_call_operand.hbm [shape: f32[28,8,256], index: 0, kind: input, shape index: {}]
  %s1 = inlined_call_operand.hbm [shape: bf16[64,256], index: 1, kind: input, shape index: {}]
  %s2 = inlined_call_operand.hbm [shape: f32[64,128], index: 2, kind: input, shape index: {}]
  %s3 = inlined_call_operand.vmem [shape: f32[1,128], index: 3, kind: input, shape index: {}]
  %s4 = inlined_call_operand.hbm [shape: f32[8,128], index: 4, kind: output, shape index: {}]
  %s5 = sld [smem:[#allocation0]]
  $region38: #{tpu_custom_call.1} parent=0
    _
  %s7 = ssub.s32 1, %s5
  %s8 = scalar_select 0, %s7, %s5
  $region1: #{tpu_custom_call.1} parent=0
    #allocation2 [shape = 'u8[229376]{0}', space=vmem, size = 0x38000, scoped, tag = 'input window, operand 0, single buffered']
    #allocation3 [shape = 's32[1]{0}', space=sflag, size = 0x4, scoped, tag = 'scoped memory for tpu_custom_call.1']
    #allocation4 [shape = 's32[1]{0}', space=sflag, size = 0x4, scoped, tag = 'scoped memory for tpu_custom_call.1']
    #allocation5 [shape = 'u8[32768]{0}', space=vmem, size = 0x8000, scoped, tag = 'input window, operand 1, single buffered']
    #allocation6 [shape = 's32[1]{0}', space=sflag, size = 0x4, scoped, tag = 'scoped memory for tpu_custom_call.1']
    #allocation7 [shape = 'u8[32768]{0}', space=vmem, size = 0x8000, scoped, tag = 'input window, operand 2, single buffered']
    #allocation8 [shape = 'u8[4096]{0}', space=vmem, size = 0x1000, scoped, tag = 'output window, operand 0, single buffered']
    %9 = vsyncpa [#allocation3], 0
    %10 = vsyncpa [#allocation6], 0
    %11 = vsyncpa [#allocation4], 0
    // Predicated region
    $region2: #{tpu_custom_call.1} parent=1 // pred_check
      _
    $region3: #{tpu_custom_call.1} parent=1 // pred_check_branch
      %13 = sbr.rel (0) target = $region5
    $region4: #{tpu_custom_call.1} parent=1 // pred_region
      %15 = vsyncadd [#allocation3], 0
      %s16 = sshll.u32 %s0, 4
      %s17 = int_to_ptr.hbm [resolvable:$true] %s16
      %s18 = sshll.u32 [#allocation2], 4
      %s19 = int_to_ptr.vmem [resolvable:$true] %s18
      %24 = dma.hbm_to_vmem [thread:$0]  %s17, 7168, %s19, [#allocation3], 256, 256, 16
    $region5: #{tpu_custom_call.1} parent=1 // pred_fallthru
      _
    // Predicated region
    $region6: #{tpu_custom_call.1} parent=1 // pred_check
      _
    $region7: #{tpu_custom_call.1} parent=1 // pred_check_branch
      %26 = sbr.rel (0) target = $region9
    $region8: #{tpu_custom_call.1} parent=1 // pred_region
      %28 = vsyncadd [#allocation6], 0
      %s29 = sshll.u32 %s1, 4
      %s30 = int_to_ptr.hbm [resolvable:$true] %s29
      %s31 = sshll.u32 [#allocation5], 4
      %s32 = int_to_ptr.vmem [resolvable:$true] %s31
      %37 = dma.hbm_to_vmem [thread:$0]  %s30, 1024, %s32, [#allocation6], 128, 128, 8
    $region9: #{tpu_custom_call.1} parent=1 // pred_fallthru
      _
    // Predicated region
    $region10: #{tpu_custom_call.1} parent=1 // pred_check
      _
    $region11: #{tpu_custom_call.1} parent=1 // pred_check_branch
      %39 = sbr.rel (0) target = $region13
    $region12: #{tpu_custom_call.1} parent=1 // pred_region
      %41 = vsyncadd [#allocation6], 0
      %s42 = sshll.u32 %s2, 4
      %s43 = int_to_ptr.hbm [resolvable:$true] %s42
      %s44 = sshll.u32 [#allocation7], 4
      %s45 = int_to_ptr.vmem [resolvable:$true] %s44
      %50 = dma.hbm_to_vmem [thread:$0]  %s43, 1024, %s45, [#allocation6], 128, 128, 8
    $region13: #{tpu_custom_call.1} parent=1 // pred_fallthru
      _
    // Predicated region
    $region14: #{tpu_custom_call.1} parent=1 // pred_check
      _
    $region15: #{tpu_custom_call.1} parent=1 // pred_check_branch
      %52 = sbr.rel (0) target = $region17
    $region16: #{tpu_custom_call.1} parent=1 // pred_region
      _
    $region17: #{tpu_custom_call.1} parent=1 // pred_fallthru
      _
    // Predicated region
    $region18: #{tpu_custom_call.1} parent=1 // pred_check
      _
    $region19: #{tpu_custom_call.1} parent=1 // pred_check_branch
      %54 = sbr.rel (0) target = $region21
    $region20: #{tpu_custom_call.1} parent=1 // pred_region
      %56 = dma.done [#allocation3], 7168
    $region21: #{tpu_custom_call.1} parent=1 // pred_fallthru
      _
    // Predicated region
    $region22: #{tpu_custom_call.1} parent=1 // pred_check
      _
    $region23: #{tpu_custom_call.1} parent=1 // pred_check_branch
      %58 = sbr.rel (0) target = $region25
    $region24: #{tpu_custom_call.1} parent=1 // pred_region
      %60 = dma.done [#allocation6], 1024
    $region25: #{tpu_custom_call.1} parent=1 // pred_fallthru
      _
    // Predicated region
    $region26: #{tpu_custom_call.1} parent=1 // pred_check
      _
    $region27: #{tpu_custom_call.1} parent=1 // pred_check_branch
      %62 = sbr.rel (0) target = $region29
    $region28: #{tpu_custom_call.1} parent=1 // pred_region
      %64 = dma.done [#allocation6], 1024
    $region29: #{tpu_custom_call.1} parent=1 // pred_fallthru
      _
    %v66 = vld [vmem:[#allocation5] sm:$0xff]
    %v67 = vld [vmem:[#allocation5 + $0x8] sm:$0xff]
    %v68 = vld [vmem:[#allocation5 + $0x10] sm:$0xff]
    %v69 = vld [vmem:[#allocation5 + $0x18] sm:$0xff]
    %v70 = vld [vmem:[#allocation5 + $0x20] sm:$0xff]
    %v71 = vld [vmem:[#allocation5 + $0x28] sm:$0xff]
    %v72 = vld [vmem:[#allocation5 + $0x30] sm:$0xff]
    %v73 = vld [vmem:[#allocation5 + $0x38] sm:$0xff]
    %v74 = vld [vmem:[#allocation2] sm:$0xff]
    %v75 = vld [vmem:[#allocation2 + $0x8] sm:$0xff]
    %v84 = vunpack.c.l.b16 %v66
    %v85 = vunpack.c.h.b16 %v66
    %v86 = vunpack.c.l.b16 %v67
    %v87 = vunpack.c.h.b16 %v67
    %v88 = vunpack.c.l.b16 %v68
    %v89 = vunpack.c.h.b16 %v68
    %v90 = vunpack.c.l.b16 %v69
    %v91 = vunpack.c.h.b16 %v69
    %v92 = vunpack.c.l.b16 %v70
    %v93 = vunpack.c.h.b16 %v70
    %v94 = vunpack.c.l.b16 %v71
    %v95 = vunpack.c.h.b16 %v71
    %v96 = vunpack.c.l.b16 %v72
    %v97 = vunpack.c.h.b16 %v72
    %v98 = vunpack.c.l.b16 %v73
    %v99 = vunpack.c.h.b16 %v73
    %v100 = vpack.c.b16 %v86, %v84
    %v101 = vpack.c.b16 %v87, %v85
    %v102 = vpack.c.b16 %v90, %v88
    %v103 = vpack.c.b16 %v91, %v89
    %v104 = vpack.c.b16 %v94, %v92
    %v105 = vpack.c.b16 %v95, %v93
    %v106 = vpack.c.b16 %v98, %v96
    %v107 = vpack.c.b16 %v99, %v97
    %vm116 = vcmask 523264
    %v118 = vsel %vm116, 0, 0
    %120 = vmatpush.bf16.msra.mxu0 0
    %121 = vmatpush.bf16.msra.mxu0 0
    %122 = vmatpush.bf16.msra.mxu0 0
    %123 = vmatpush.bf16.msra.mxu0 0
    %124 = vmatpush.bf16.msra.mxu0 %v106
    %125 = vmatpush.bf16.msra.mxu0 %v104
    %126 = vmatpush.bf16.msra.mxu0 %v102
    %127 = vmatpush.bf16.msra.mxu0 %v100
    %128 = vmatmul.bf16.gmra.mxu0 %v118
    %v129 = vpop.f32.mrf.mxu0
    %v130 = vadd.f32 0.0, %v129
    %v131 = vpop.f32.mrf.mxu0
    %132 = vdwg.mxu0
    %133 = vmatpush.bf16.msra.mxu0 0
    %134 = vmatpush.bf16.msra.mxu0 0
    %135 = vmatpush.bf16.msra.mxu0 0
    %136 = vmatpush.bf16.msra.mxu0 0
    %137 = vmatpush.bf16.msra.mxu0 %v107
    %138 = vmatpush.bf16.msra.mxu0 %v105
    %139 = vmatpush.bf16.msra.mxu0 %v103
    %140 = vmatpush.bf16.msra.mxu0 %v101
    %141 = vmatmul.bf16.gmra.mxu0 %v118
    %v142 = vpop.f32.mrf.mxu0
    %v143 = vadd.f32 0.0, %v142
    %v144 = vpop.f32.mrf.mxu0
    %145 = vdwg.mxu0
    %v146 = vadd.f32 %v74, %v130
    %v147 = vadd.f32 %v75, %v143
    %v148 = vxor.u32 %v146, 2147483648
    %v149 = vxor.u32 %v147, 2147483648
    %v150 = vmul.f32 %v148, 1.442695
    %v151 = vpow.pop %v150
    %v152 = vmul.f32 %v149, 1.442695
    %v153 = vpow.pop %v152
    %v154 = vadd.f32 %v151, 1.0
    %v155 = vadd.f32 %v153, 1.0
    %v156 = vrcp.pop %v154
    %v157 = vmul.f32 %v154, %v156
    %v158 = vsub.f32 1.0, %v157
    %v159 = vmul.f32 %v156, %v158
    %v160 = vadd.f32 %v156, %v159
    %vm161 = vweird.f32 %v154
    %vm162 = vweird.f32 %v156
    %vm163 = vmor %vm161, %vm162
    %v164 = vsel %vm163, %v156, %v160
    %v165 = vand.u32 2147483647, %v154
    %vm166 = vcmp.eq.f32.partialorder %v165, 8.507059e+37
    %v167 = vand.u32 %v154, 2147483648
    %v168 = vor.u32 1.1754944e-38, %v167
    %v169 = vsel %vm166, %v168, %v164
    %v170 = vmul.f32 1.0, %v169
    %v171 = vrcp.pop %v155
    %v172 = vmul.f32 %v155, %v171
    %v173 = vsub.f32 1.0, %v172
    %v174 = vmul.f32 %v171, %v173
    %v175 = vadd.f32 %v171, %v174
    %vm176 = vweird.f32 %v155
    %vm177 = vweird.f32 %v171
    %vm178 = vmor %vm176, %vm177
    %v179 = vsel %vm178, %v171, %v175
    %v180 = vand.u32 2147483647, %v155
    %vm181 = vcmp.eq.f32.partialorder %v180, 8.507059e+37
    %v182 = vand.u32 %v155, 2147483648
    %v183 = vor.u32 1.1754944e-38, %v182
    %v184 = vsel %vm181, %v183, %v179
    %v185 = vmul.f32 1.0, %v184
    %v186 = vmul.f32 %v185, 2.0
    %v187 = vsub.f32 %v186, 1.0
    %v188 = vmul.f32 %v170, 0.0
    %v189 = vmul.f32 %v170, %v187
    %191 = vrot.lane.b32.xlu0 %v189, 64
    %v192 = vpop.permute.xlu0 %191
    %v194 = vadd.f32 %v188, %v192
    %v195 = vtanh.pop %v194
    %v196 = vmul.f32 %v185, %v195
    %s197 = scalar_lea.vmem [#allocation2], 16
    %v198 = vld [vmem:[%s197] sm:$0xff]
    %v199 = vld [vmem:[%s197 + $0x8] sm:$0xff]
    %v200 = vpack.c.bf16 %v196, %v196
    %v202 = vsel %vm116, %v200, 0
    %204 = vmatpush.bf16.msra.mxu0 0
    %205 = vmatpush.bf16.msra.mxu0 0
    %206 = vmatpush.bf16.msra.mxu0 0
    %207 = vmatpush.bf16.msra.mxu0 0
    %208 = vmatpush.bf16.msra.mxu0 %v106
    %209 = vmatpush.bf16.msra.mxu0 %v104
    %210 = vmatpush.bf16.msra.mxu0 %v102
    %211 = vmatpush.bf16.msra.mxu0 %v100
    %212 = vmatmul.bf16.gmra.mxu0 %v202
    %v213 = vpop.f32.mrf.mxu0
    %v214 = vadd.f32 0.0, %v213
    %v215 = vpop.f32.mrf.mxu0
    %216 = vdwg.mxu0
    %217 = vmatpush.bf16.msra.mxu0 0
    %218 = vmatpush.bf16.msra.mxu0 0
    %219 = vmatpush.bf16.msra.mxu0 0
    %220 = vmatpush.bf16.msra.mxu0 0
    %221 = vmatpush.bf16.msra.mxu0 %v107
    %222 = vmatpush.bf16.msra.mxu0 %v105
    %223 = vmatpush.bf16.msra.mxu0 %v103
    %224 = vmatpush.bf16.msra.mxu0 %v101
    %225 = vmatmul.bf16.gmra.mxu0 %v202
    %v226 = vpop.f32.mrf.mxu0
    %v227 = vadd.f32 0.0, %v226
    %v228 = vpop.f32.mrf.mxu0
    %229 = vdwg.mxu0
    %v230 = vadd.f32 %v198, %v214
    %v231 = vadd.f32 %v199, %v227
    %v232 = vxor.u32 %v230, 2147483648
    %v233 = vxor.u32 %v231, 2147483648
    %v234 = vmul.f32 %v232, 1.442695
    %v235 = vpow.pop %v234
    %v236 = vmul.f32 %v233, 1.442695
    %v237 = vpow.pop %v236
    %v238 = vadd.f32 %v235, 1.0
    %v239 = vadd.f32 %v237, 1.0
    %v240 = vrcp.pop %v238
    %v241 = vmul.f32 %v238, %v240
    %v242 = vsub.f32 1.0, %v241
    %v243 = vmul.f32 %v240, %v242
    %v244 = vadd.f32 %v240, %v243
    %vm245 = vweird.f32 %v238
    %vm246 = vweird.f32 %v240
    %vm247 = vmor %vm245, %vm246
    %v248 = vsel %vm247, %v240, %v244
    %v249 = vand.u32 2147483647, %v238
    %vm250 = vcmp.eq.f32.partialorder %v249, 8.507059e+37
    %v251 = vand.u32 %v238, 2147483648
    %v252 = vor.u32 1.1754944e-38, %v251
    %v253 = vsel %vm250, %v252, %v248
    %v254 = vmul.f32 1.0, %v253
    %v255 = vrcp.pop %v239
    %v256 = vmul.f32 %v239, %v255
    %v257 = vsub.f32 1.0, %v256
    %v258 = vmul.f32 %v255, %v257
    %v259 = vadd.f32 %v255, %v258
    %vm260 = vweird.f32 %v239
    %vm261 = vweird.f32 %v255
    %vm262 = vmor %vm260, %vm261
    %v263 = vsel %vm262, %v255, %v259
    %v264 = vand.u32 2147483647, %v239
    %vm265 = vcmp.eq.f32.partialorder %v264, 8.507059e+37
    %v266 = vand.u32 %v239, 2147483648
    %v267 = vor.u32 1.1754944e-38, %v266
    %v268 = vsel %vm265, %v267, %v263
    %v269 = vmul.f32 1.0, %v268
    %v270 = vmul.f32 %v269, 2.0
    %v271 = vsub.f32 %v270, 1.0
    %v272 = vmul.f32 %v254, %v194
    %v273 = vmul.f32 %v254, %v271
    %275 = vrot.lane.b32.xlu0 %v273, 64
    %v276 = vpop.permute.xlu0 %275
    %v278 = vadd.f32 %v272, %v276
    %v279 = vtanh.pop %v278
    %v280 = vmul.f32 %v269, %v279
    %s281 = scalar_lea.vmem [#allocation2], 32
    %v282 = vld [vmem:[%s281] sm:$0xff]
    %v283 = vld [vmem:[%s281 + $0x8] sm:$0xff]
    %v284 = vpack.c.bf16 %v280, %v280
    %v286 = vsel %vm116, %v284, 0
    %288 = vmatpush.bf16.msra.mxu0 0
    %289 = vmatpush.bf16.msra.mxu0 0
    %290 = vmatpush.bf16.msra.mxu0 0
    %291 = vmatpush.bf16.msra.mxu0 0
    %292 = vmatpush.bf16.msra.mxu0 %v106
    %293 = vmatpush.bf16.msra.mxu0 %v104
    %294 = vmatpush.bf16.msra.mxu0 %v102
    %295 = vmatpush.bf16.msra.mxu0 %v100
    %296 = vmatmul.bf16.gmra.mxu0 %v286
    %v297 = vpop.f32.mrf.mxu0
    %v298 = vadd.f32 0.0, %v297
    %v299 = vpop.f32.mrf.mxu0
    %300 = vdwg.mxu0
    %301 = vmatpush.bf16.msra.mxu0 0
    %302 = vmatpush.bf16.msra.mxu0 0
    %303 = vmatpush.bf16.msra.mxu0 0
    %304 = vmatpush.bf16.msra.mxu0 0
    %305 = vmatpush.bf16.msra.mxu0 %v107
    %306 = vmatpush.bf16.msra.mxu0 %v105
    %307 = vmatpush.bf16.msra.mxu0 %v103
    %308 = vmatpush.bf16.msra.mxu0 %v101
    %309 = vmatmul.bf16.gmra.mxu0 %v286
    %v310 = vpop.f32.mrf.mxu0
    %v311 = vadd.f32 0.0, %v310
    %v312 = vpop.f32.mrf.mxu0
    %313 = vdwg.mxu0
    %v314 = vadd.f32 %v282, %v298
    %v315 = vadd.f32 %v283, %v311
    %v316 = vxor.u32 %v314, 2147483648
    %v317 = vxor.u32 %v315, 2147483648
    %v318 = vmul.f32 %v316, 1.442695
    %v319 = vpow.pop %v318
    %v320 = vmul.f32 %v317, 1.442695
    %v321 = vpow.pop %v320
    %v322 = vadd.f32 %v319, 1.0
    %v323 = vadd.f32 %v321, 1.0
    %v324 = vrcp.pop %v322
    %v325 = vmul.f32 %v322, %v324
    %v326 = vsub.f32 1.0, %v325
    %v327 = vmul.f32 %v324, %v326
    %v328 = vadd.f32 %v324, %v327
    %vm329 = vweird.f32 %v322
    %vm330 = vweird.f32 %v324
    %vm331 = vmor %vm329, %vm330
    %v332 = vsel %vm331, %v324, %v328
    %v333 = vand.u32 2147483647, %v322
    %vm334 = vcmp.eq.f32.partialorder %v333, 8.507059e+37
    %v335 = vand.u32 %v322, 2147483648
    %v336 = vor.u32 1.1754944e-38, %v335
    %v337 = vsel %vm334, %v336, %v332
    %v338 = vmul.f32 1.0, %v337
    %v339 = vrcp.pop %v323
    %v340 = vmul.f32 %v323, %v339
    %v341 = vsub.f32 1.0, %v340
    %v342 = vmul.f32 %v339, %v341
    %v343 = vadd.f32 %v339, %v342
    %vm344 = vweird.f32 %v323
    %vm345 = vweird.f32 %v339
    %vm346 = vmor %vm344, %vm345
    %v347 = vsel %vm346, %v339, %v343
    %v348 = vand.u32 2147483647, %v323
    %vm349 = vcmp.eq.f32.partialorder %v348, 8.507059e+37
    %v350 = vand.u32 %v323, 2147483648
    %v351 = vor.u32 1.1754944e-38, %v350
    %v352 = vsel %vm349, %v351, %v347
    %v353 = vmul.f32 1.0, %v352
    %v354 = vmul.f32 %v353, 2.0
    %v355 = vsub.f32 %v354, 1.0
    %v356 = vmul.f32 %v338, %v278
    %v357 = vmul.f32 %v338, %v355
    %359 = vrot.lane.b32.xlu0 %v357, 64
    %v360 = vpop.permute.xlu0 %359
    %v362 = vadd.f32 %v356, %v360
    %v363 = vtanh.pop %v362
    %v364 = vmul.f32 %v353, %v363
    %s365 = scalar_lea.vmem [#allocation2], 48
    %v366 = vld [vmem:[%s365] sm:$0xff]
    %v367 = vld [vmem:[%s365 + $0x8] sm:$0xff]
    %v368 = vpack.c.bf16 %v364, %v364
    %v370 = vsel %vm116, %v368, 0
    %372 = vmatpush.bf16.msra.mxu0 0
    %373 = vmatpush.bf16.msra.mxu0 0
    %374 = vmatpush.bf16.msra.mxu0 0
    %375 = vmatpush.bf16.msra.mxu0 0
    %376 = vmatpush.bf16.msra.mxu0 %v106
    %377 = vmatpush.bf16.msra.mxu0 %v104
    %378 = vmatpush.bf16.msra.mxu0 %v102
    %379 = vmatpush.bf16.msra.mxu0 %v100
    %380 = vmatmul.bf16.gmra.mxu0 %v370
    %v381 = vpop.f32.mrf.mxu0
    %v382 = vadd.f32 0.0, %v381
    %v383 = vpop.f32.mrf.mxu0
    %384 = vdwg.mxu0
    %385 = vmatpush.bf16.msra.mxu0 0
    %386 = vmatpush.bf16.msra.mxu0 0
    %387 = vmatpush.bf16.msra.mxu0 0
    %388 = vmatpush.bf16.msra.mxu0 0
    %389 = vmatpush.bf16.msra.mxu0 %v107
    %390 = vmatpush.bf16.msra.mxu0 %v105
    %391 = vmatpush.bf16.msra.mxu0 %v103
    %392 = vmatpush.bf16.msra.mxu0 %v101
    %393 = vmatmul.bf16.gmra.mxu0 %v370
    %v394 = vpop.f32.mrf.mxu0
    %v395 = vadd.f32 0.0, %v394
    %v396 = vpop.f32.mrf.mxu0
    %397 = vdwg.mxu0
    %v398 = vadd.f32 %v366, %v382
    %v399 = vadd.f32 %v367, %v395
    %v400 = vxor.u32 %v398, 2147483648
    %v401 = vxor.u32 %v399, 2147483648
    %v402 = vmul.f32 %v400, 1.442695
    %v403 = vpow.pop %v402
    %v404 = vmul.f32 %v401, 1.442695
    %v405 = vpow.pop %v404
    %v406 = vadd.f32 %v403, 1.0
    %v407 = vadd.f32 %v405, 1.0
    %v408 = vrcp.pop %v406
    %v409 = vmul.f32 %v406, %v408
    %v410 = vsub.f32 1.0, %v409
    %v411 = vmul.f32 %v408, %v410
    %v412 = vadd.f32 %v408, %v411
    %vm413 = vweird.f32 %v406
    %vm414 = vweird.f32 %v408
    %vm415 = vmor %vm413, %vm414
    %v416 = vsel %vm415, %v408, %v412
    %v417 = vand.u32 2147483647, %v406
    %vm418 = vcmp.eq.f32.partialorder %v417, 8.507059e+37
    %v419 = vand.u32 %v406, 2147483648
    %v420 = vor.u32 1.1754944e-38, %v419
    %v421 = vsel %vm418, %v420, %v416
    %v422 = vmul.f32 1.0, %v421
    %v423 = vrcp.pop %v407
    %v424 = vmul.f32 %v407, %v423
    %v425 = vsub.f32 1.0, %v424
    %v426 = vmul.f32 %v423, %v425
    %v427 = vadd.f32 %v423, %v426
    %vm428 = vweird.f32 %v407
    %vm429 = vweird.f32 %v423
    %vm430 = vmor %vm428, %vm429
    %v431 = vsel %vm430, %v423, %v427
    %v432 = vand.u32 2147483647, %v407
    %vm433 = vcmp.eq.f32.partialorder %v432, 8.507059e+37
    %v434 = vand.u32 %v407, 2147483648
    %v435 = vor.u32 1.1754944e-38, %v434
    %v436 = vsel %vm433, %v435, %v431
    %v437 = vmul.f32 1.0, %v436
    %v438 = vmul.f32 %v437, 2.0
    %v439 = vsub.f32 %v438, 1.0
    %v440 = vmul.f32 %v422, %v362
    %v441 = vmul.f32 %v422, %v439
    %443 = vrot.lane.b32.xlu0 %v441, 64
    %v444 = vpop.permute.xlu0 %443
    %v446 = vadd.f32 %v440, %v444
    %v447 = vtanh.pop %v446
    %v448 = vmul.f32 %v437, %v447
    %s449 = scalar_lea.vmem [#allocation2], 64
    %v450 = vld [vmem:[%s449] sm:$0xff]
    %v451 = vld [vmem:[%s449 + $0x8] sm:$0xff]
    %v452 = vpack.c.bf16 %v448, %v448
    %v454 = vsel %vm116, %v452, 0
    %456 = vmatpush.bf16.msra.mxu0 0
    %457 = vmatpush.bf16.msra.mxu0 0
    %458 = vmatpush.bf16.msra.mxu0 0
    %459 = vmatpush.bf16.msra.mxu0 0
    %460 = vmatpush.bf16.msra.mxu0 %v106
    %461 = vmatpush.bf16.msra.mxu0 %v104
    %462 = vmatpush.bf16.msra.mxu0 %v102
    %463 = vmatpush.bf16.msra.mxu0 %v100
    %464 = vmatmul.bf16.gmra.mxu0 %v454
    %v465 = vpop.f32.mrf.mxu0
    %v466 = vadd.f32 0.0, %v465
    %v467 = vpop.f32.mrf.mxu0
    %468 = vdwg.mxu0
    %469 = vmatpush.bf16.msra.mxu0 0
    %470 = vmatpush.bf16.msra.mxu0 0
    %471 = vmatpush.bf16.msra.mxu0 0
    %472 = vmatpush.bf16.msra.mxu0 0
    %473 = vmatpush.bf16.msra.mxu0 %v107
    %474 = vmatpush.bf16.msra.mxu0 %v105
    %475 = vmatpush.bf16.msra.mxu0 %v103
    %476 = vmatpush.bf16.msra.mxu0 %v101
    %477 = vmatmul.bf16.gmra.mxu0 %v454
    %v478 = vpop.f32.mrf.mxu0
    %v479 = vadd.f32 0.0, %v478
    %v480 = vpop.f32.mrf.mxu0
    %481 = vdwg.mxu0
    %v482 = vadd.f32 %v450, %v466
    %v483 = vadd.f32 %v451, %v479
    %v484 = vxor.u32 %v482, 2147483648
    %v485 = vxor.u32 %v483, 2147483648
    %v486 = vmul.f32 %v484, 1.442695
    %v487 = vpow.pop %v486
    %v488 = vmul.f32 %v485, 1.442695
    %v489 = vpow.pop %v488
    %v490 = vadd.f32 %v487, 1.0
    %v491 = vadd.f32 %v489, 1.0
    %v492 = vrcp.pop %v490
    %v493 = vmul.f32 %v490, %v492
    %v494 = vsub.f32 1.0, %v493
    %v495 = vmul.f32 %v492, %v494
    %v496 = vadd.f32 %v492, %v495
    %vm497 = vweird.f32 %v490
    %vm498 = vweird.f32 %v492
    %vm499 = vmor %vm497, %vm498
    %v500 = vsel %vm499, %v492, %v496
    %v501 = vand.u32 2147483647, %v490
    %vm502 = vcmp.eq.f32.partialorder %v501, 8.507059e+37
    %v503 = vand.u32 %v490, 2147483648
    %v504 = vor.u32 1.1754944e-38, %v503
    %v505 = vsel %vm502, %v504, %v500
    %v506 = vmul.f32 1.0, %v505
    %v507 = vrcp.pop %v491
    %v508 = vmul.f32 %v491, %v507
    %v509 = vsub.f32 1.0, %v508
    %v510 = vmul.f32 %v507, %v509
    %v511 = vadd.f32 %v507, %v510
    %vm512 = vweird.f32 %v491
    %vm513 = vweird.f32 %v507
    %vm514 = vmor %vm512, %vm513
    %v515 = vsel %vm514, %v507, %v511
    %v516 = vand.u32 2147483647, %v491
    %vm517 = vcmp.eq.f32.partialorder %v516, 8.507059e+37
    %v518 = vand.u32 %v491, 2147483648
    %v519 = vor.u32 1.1754944e-38, %v518
    %v520 = vsel %vm517, %v519, %v515
    %v521 = vmul.f32 1.0, %v520
    %v522 = vmul.f32 %v521, 2.0
    %v523 = vsub.f32 %v522, 1.0
    %v524 = vmul.f32 %v506, %v446
    %v525 = vmul.f32 %v506, %v523
    %527 = vrot.lane.b32.xlu0 %v525, 64
    %v528 = vpop.permute.xlu0 %527
    %v530 = vadd.f32 %v524, %v528
    %v531 = vtanh.pop %v530
    %v532 = vmul.f32 %v521, %v531
    %s533 = scalar_lea.vmem [#allocation2], 80
    %v534 = vld [vmem:[%s533] sm:$0xff]
    %v535 = vld [vmem:[%s533 + $0x8] sm:$0xff]
    %v536 = vpack.c.bf16 %v532, %v532
    %v538 = vsel %vm116, %v536, 0
    %540 = vmatpush.bf16.msra.mxu0 0
    %541 = vmatpush.bf16.msra.mxu0 0
    %542 = vmatpush.bf16.msra.mxu0 0
    %543 = vmatpush.bf16.msra.mxu0 0
    %544 = vmatpush.bf16.msra.mxu0 %v106
    %545 = vmatpush.bf16.msra.mxu0 %v104
    %546 = vmatpush.bf16.msra.mxu0 %v102
    %547 = vmatpush.bf16.msra.mxu0 %v100
    %548 = vmatmul.bf16.gmra.mxu0 %v538
    %v549 = vpop.f32.mrf.mxu0
    %v550 = vadd.f32 0.0, %v549
    %v551 = vpop.f32.mrf.mxu0
    %552 = vdwg.mxu0
    %553 = vmatpush.bf16.msra.mxu0 0
    %554 = vmatpush.bf16.msra.mxu0 0
    %555 = vmatpush.bf16.msra.mxu0 0
    %556 = vmatpush.bf16.msra.mxu0 0
    %557 = vmatpush.bf16.msra.mxu0 %v107
    %558 = vmatpush.bf16.msra.mxu0 %v105
    %559 = vmatpush.bf16.msra.mxu0 %v103
    %560 = vmatpush.bf16.msra.mxu0 %v101
    %561 = vmatmul.bf16.gmra.mxu0 %v538
    %v562 = vpop.f32.mrf.mxu0
    %v563 = vadd.f32 0.0, %v562
    %v564 = vpop.f32.mrf.mxu0
    %565 = vdwg.mxu0
    %v566 = vadd.f32 %v534, %v550
    %v567 = vadd.f32 %v535, %v563
    %v568 = vxor.u32 %v566, 2147483648
    %v569 = vxor.u32 %v567, 2147483648
    %v570 = vmul.f32 %v568, 1.442695
    %v571 = vpow.pop %v570
    %v572 = vmul.f32 %v569, 1.442695
    %v573 = vpow.pop %v572
    %v574 = vadd.f32 %v571, 1.0
    %v575 = vadd.f32 %v573, 1.0
    %v576 = vrcp.pop %v574
    %v577 = vmul.f32 %v574, %v576
    %v578 = vsub.f32 1.0, %v577
    %v579 = vmul.f32 %v576, %v578
    %v580 = vadd.f32 %v576, %v579
    %vm581 = vweird.f32 %v574
    %vm582 = vweird.f32 %v576
    %vm583 = vmor %vm581, %vm582
    %v584 = vsel %vm583, %v576, %v580
    %v585 = vand.u32 2147483647, %v574
    %vm586 = vcmp.eq.f32.partialorder %v585, 8.507059e+37
    %v587 = vand.u32 %v574, 2147483648
    %v588 = vor.u32 1.1754944e-38, %v587
    %v589 = vsel %vm586, %v588, %v584
    %v590 = vmul.f32 1.0, %v589
    %v591 = vrcp.pop %v575
    %v592 = vmul.f32 %v575, %v591
    %v593 = vsub.f32 1.0, %v592
    %v594 = vmul.f32 %v591, %v593
    %v595 = vadd.f32 %v591, %v594
    %vm596 = vweird.f32 %v575
    %vm597 = vweird.f32 %v591
    %vm598 = vmor %vm596, %vm597
    %v599 = vsel %vm598, %v591, %v595
    %v600 = vand.u32 2147483647, %v575
    %vm601 = vcmp.eq.f32.partialorder %v600, 8.507059e+37
    %v602 = vand.u32 %v575, 2147483648
    %v603 = vor.u32 1.1754944e-38, %v602
    %v604 = vsel %vm601, %v603, %v599
    %v605 = vmul.f32 1.0, %v604
    %v606 = vmul.f32 %v605, 2.0
    %v607 = vsub.f32 %v606, 1.0
    %v608 = vmul.f32 %v590, %v530
    %v609 = vmul.f32 %v590, %v607
    %611 = vrot.lane.b32.xlu0 %v609, 64
    %v612 = vpop.permute.xlu0 %611
    %v614 = vadd.f32 %v608, %v612
    %v615 = vtanh.pop %v614
    %v616 = vmul.f32 %v605, %v615
    %s617 = scalar_lea.vmem [#allocation2], 96
    %v618 = vld [vmem:[%s617] sm:$0xff]
    %v619 = vld [vmem:[%s617 + $0x8] sm:$0xff]
    %v620 = vpack.c.bf16 %v616, %v616
    %v622 = vsel %vm116, %v620, 0
    %624 = vmatpush.bf16.msra.mxu0 0
    %625 = vmatpush.bf16.msra.mxu0 0
    %626 = vmatpush.bf16.msra.mxu0 0
    %627 = vmatpush.bf16.msra.mxu0 0
    %628 = vmatpush.bf16.msra.mxu0 %v106
    %629 = vmatpush.bf16.msra.mxu0 %v104
    %630 = vmatpush.bf16.msra.mxu0 %v102
    %631 = vmatpush.bf16.msra.mxu0 %v100
    %632 = vmatmul.bf16.gmra.mxu0 %v622
    %v633 = vpop.f32.mrf.mxu0
    %v634 = vadd.f32 0.0, %v633
    %v635 = vpop.f32.mrf.mxu0
    %636 = vdwg.mxu0
    %637 = vmatpush.bf16.msra.mxu0 0
    %638 = vmatpush.bf16.msra.mxu0 0
    %639 = vmatpush.bf16.msra.mxu0 0
    %640 = vmatpush.bf16.msra.mxu0 0
    %641 = vmatpush.bf16.msra.mxu0 %v107
    %642 = vmatpush.bf16.msra.mxu0 %v105
    %643 = vmatpush.bf16.msra.mxu0 %v103
    %644 = vmatpush.bf16.msra.mxu0 %v101
    %645 = vmatmul.bf16.gmra.mxu0 %v622
    %v646 = vpop.f32.mrf.mxu0
    %v647 = vadd.f32 0.0, %v646
    %v648 = vpop.f32.mrf.mxu0
    %649 = vdwg.mxu0
    %v650 = vadd.f32 %v618, %v634
    %v651 = vadd.f32 %v619, %v647
    %v652 = vxor.u32 %v650, 2147483648
    %v653 = vxor.u32 %v651, 2147483648
    %v654 = vmul.f32 %v652, 1.442695
    %v655 = vpow.pop %v654
    %v656 = vmul.f32 %v653, 1.442695
    %v657 = vpow.pop %v656
    %v658 = vadd.f32 %v655, 1.0
    %v659 = vadd.f32 %v657, 1.0
    %v660 = vrcp.pop %v658
    %v661 = vmul.f32 %v658, %v660
    %v662 = vsub.f32 1.0, %v661
    %v663 = vmul.f32 %v660, %v662
    %v664 = vadd.f32 %v660, %v663
    %vm665 = vweird.f32 %v658
    %vm666 = vweird.f32 %v660
    %vm667 = vmor %vm665, %vm666
    %v668 = vsel %vm667, %v660, %v664
    %v669 = vand.u32 2147483647, %v658
    %vm670 = vcmp.eq.f32.partialorder %v669, 8.507059e+37
    %v671 = vand.u32 %v658, 2147483648
    %v672 = vor.u32 1.1754944e-38, %v671
    %v673 = vsel %vm670, %v672, %v668
    %v674 = vmul.f32 1.0, %v673
    %v675 = vrcp.pop %v659
    %v676 = vmul.f32 %v659, %v675
    %v677 = vsub.f32 1.0, %v676
    %v678 = vmul.f32 %v675, %v677
    %v679 = vadd.f32 %v675, %v678
    %vm680 = vweird.f32 %v659
    %vm681 = vweird.f32 %v675
    %vm682 = vmor %vm680, %vm681
    %v683 = vsel %vm682, %v675, %v679
    %v684 = vand.u32 2147483647, %v659
    %vm685 = vcmp.eq.f32.partialorder %v684, 8.507059e+37
    %v686 = vand.u32 %v659, 2147483648
    %v687 = vor.u32 1.1754944e-38, %v686
    %v688 = vsel %vm685, %v687, %v683
    %v689 = vmul.f32 1.0, %v688
    %v690 = vmul.f32 %v689, 2.0
    %v691 = vsub.f32 %v690, 1.0
    %v692 = vmul.f32 %v674, %v614
    %v693 = vmul.f32 %v674, %v691
    %695 = vrot.lane.b32.xlu0 %v693, 64
    %v696 = vpop.permute.xlu0 %695
    %v698 = vadd.f32 %v692, %v696
    %v699 = vtanh.pop %v698
    %v700 = vmul.f32 %v689, %v699
    %s701 = scalar_lea.vmem [#allocation2], 112
    %v702 = vld [vmem:[%s701] sm:$0xff]
    %v703 = vld [vmem:[%s701 + $0x8] sm:$0xff]
    %v704 = vpack.c.bf16 %v700, %v700
    %v706 = vsel %vm116, %v704, 0
    %708 = vmatpush.bf16.msra.mxu0 0
    %709 = vmatpush.bf16.msra.mxu0 0
    %710 = vmatpush.bf16.msra.mxu0 0
    %711 = vmatpush.bf16.msra.mxu0 0
    %712 = vmatpush.bf16.msra.mxu0 %v106
    %713 = vmatpush.bf16.msra.mxu0 %v104
    %714 = vmatpush.bf16.msra.mxu0 %v102
    %715 = vmatpush.bf16.msra.mxu0 %v100
    %716 = vmatmul.bf16.gmra.mxu0 %v706
    %v717 = vpop.f32.mrf.mxu0
    %v718 = vadd.f32 0.0, %v717
    %v719 = vpop.f32.mrf.mxu0
    %720 = vdwg.mxu0
    %721 = vmatpush.bf16.msra.mxu0 0
    %722 = vmatpush.bf16.msra.mxu0 0
    %723 = vmatpush.bf16.msra.mxu0 0
    %724 = vmatpush.bf16.msra.mxu0 0
    %725 = vmatpush.bf16.msra.mxu0 %v107
    %726 = vmatpush.bf16.msra.mxu0 %v105
    %727 = vmatpush.bf16.msra.mxu0 %v103
    %728 = vmatpush.bf16.msra.mxu0 %v101
    %729 = vmatmul.bf16.gmra.mxu0 %v706
    %v730 = vpop.f32.mrf.mxu0
    %v731 = vadd.f32 0.0, %v730
    %v732 = vpop.f32.mrf.mxu0
    %733 = vdwg.mxu0
    %v734 = vadd.f32 %v702, %v718
    %v735 = vadd.f32 %v703, %v731
    %v736 = vxor.u32 %v734, 2147483648
    %v737 = vxor.u32 %v735, 2147483648
    %v738 = vmul.f32 %v736, 1.442695
    %v739 = vpow.pop %v738
    %v740 = vmul.f32 %v737, 1.442695
    %v741 = vpow.pop %v740
    %v742 = vadd.f32 %v739, 1.0
    %v743 = vadd.f32 %v741, 1.0
    %v744 = vrcp.pop %v742
    %v745 = vmul.f32 %v742, %v744
    %v746 = vsub.f32 1.0, %v745
    %v747 = vmul.f32 %v744, %v746
    %v748 = vadd.f32 %v744, %v747
    %vm749 = vweird.f32 %v742
    %vm750 = vweird.f32 %v744
    %vm751 = vmor %vm749, %vm750
    %v752 = vsel %vm751, %v744, %v748
    %v753 = vand.u32 2147483647, %v742
    %vm754 = vcmp.eq.f32.partialorder %v753, 8.507059e+37
    %v755 = vand.u32 %v742, 2147483648
    %v756 = vor.u32 1.1754944e-38, %v755
    %v757 = vsel %vm754, %v756, %v752
    %v758 = vmul.f32 1.0, %v757
    %v759 = vrcp.pop %v743
    %v760 = vmul.f32 %v743, %v759
    %v761 = vsub.f32 1.0, %v760
    %v762 = vmul.f32 %v759, %v761
    %v763 = vadd.f32 %v759, %v762
    %vm764 = vweird.f32 %v743
    %vm765 = vweird.f32 %v759
    %vm766 = vmor %vm764, %vm765
    %v767 = vsel %vm766, %v759, %v763
    %v768 = vand.u32 2147483647, %v743
    %vm769 = vcmp.eq.f32.partialorder %v768, 8.507059e+37
    %v770 = vand.u32 %v743, 2147483648
    %v771 = vor.u32 1.1754944e-38, %v770
    %v772 = vsel %vm769, %v771, %v767
    %v773 = vmul.f32 1.0, %v772
    %v774 = vmul.f32 %v773, 2.0
    %v775 = vsub.f32 %v774, 1.0
    %v776 = vmul.f32 %v758, %v698
    %v777 = vmul.f32 %v758, %v775
    %779 = vrot.lane.b32.xlu0 %v777, 64
    %v780 = vpop.permute.xlu0 %779
    %v782 = vadd.f32 %v776, %v780
    %v783 = vtanh.pop %v782
    %v784 = vmul.f32 %v773, %v783
    %s785 = scalar_lea.vmem [#allocation2], 128
    %v786 = vld [vmem:[%s785] sm:$0xff]
    %v787 = vld [vmem:[%s785 + $0x8] sm:$0xff]
    %v788 = vpack.c.bf16 %v784, %v784
    %v790 = vsel %vm116, %v788, 0
    %792 = vmatpush.bf16.msra.mxu0 0
    %793 = vmatpush.bf16.msra.mxu0 0
    %794 = vmatpush.bf16.msra.mxu0 0
    %795 = vmatpush.bf16.msra.mxu0 0
    %796 = vmatpush.bf16.msra.mxu0 %v106
    %797 = vmatpush.bf16.msra.mxu0 %v104
    %798 = vmatpush.bf16.msra.mxu0 %v102
    %799 = vmatpush.bf16.msra.mxu0 %v100
    %800 = vmatmul.bf16.gmra.mxu0 %v790
    %v801 = vpop.f32.mrf.mxu0
    %v802 = vadd.f32 0.0, %v801
    %v803 = vpop.f32.mrf.mxu0
    %804 = vdwg.mxu0
    %805 = vmatpush.bf16.msra.mxu0 0
    %806 = vmatpush.bf16.msra.mxu0 0
    %807 = vmatpush.bf16.msra.mxu0 0
    %808 = vmatpush.bf16.msra.mxu0 0
    %809 = vmatpush.bf16.msra.mxu0 %v107
    %810 = vmatpush.bf16.msra.mxu0 %v105
    %811 = vmatpush.bf16.msra.mxu0 %v103
    %812 = vmatpush.bf16.msra.mxu0 %v101
    %813 = vmatmul.bf16.gmra.mxu0 %v790
    %v814 = vpop.f32.mrf.mxu0
    %v815 = vadd.f32 0.0, %v814
    %v816 = vpop.f32.mrf.mxu0
    %817 = vdwg.mxu0
    %v818 = vadd.f32 %v786, %v802
    %v819 = vadd.f32 %v787, %v815
    %v820 = vxor.u32 %v818, 2147483648
    %v821 = vxor.u32 %v819, 2147483648
    %v822 = vmul.f32 %v820, 1.442695
    %v823 = vpow.pop %v822
    %v824 = vmul.f32 %v821, 1.442695
    %v825 = vpow.pop %v824
    %v826 = vadd.f32 %v823, 1.0
    %v827 = vadd.f32 %v825, 1.0
    %v828 = vrcp.pop %v826
    %v829 = vmul.f32 %v826, %v828
    %v830 = vsub.f32 1.0, %v829
    %v831 = vmul.f32 %v828, %v830
    %v832 = vadd.f32 %v828, %v831
    %vm833 = vweird.f32 %v826
    %vm834 = vweird.f32 %v828
    %vm835 = vmor %vm833, %vm834
    %v836 = vsel %vm835, %v828, %v832
    %v837 = vand.u32 2147483647, %v826
    %vm838 = vcmp.eq.f32.partialorder %v837, 8.507059e+37
    %v839 = vand.u32 %v826, 2147483648
    %v840 = vor.u32 1.1754944e-38, %v839
    %v841 = vsel %vm838, %v840, %v836
    %v842 = vmul.f32 1.0, %v841
    %v843 = vrcp.pop %v827
    %v844 = vmul.f32 %v827, %v843
    %v845 = vsub.f32 1.0, %v844
    %v846 = vmul.f32 %v843, %v845
    %v847 = vadd.f32 %v843, %v846
    %vm848 = vweird.f32 %v827
    %vm849 = vweird.f32 %v843
    %vm850 = vmor %vm848, %vm849
    %v851 = vsel %vm850, %v843, %v847
    %v852 = vand.u32 2147483647, %v827
    %vm853 = vcmp.eq.f32.partialorder %v852, 8.507059e+37
    %v854 = vand.u32 %v827, 2147483648
    %v855 = vor.u32 1.1754944e-38, %v854
    %v856 = vsel %vm853, %v855, %v851
    %v857 = vmul.f32 1.0, %v856
    %v858 = vmul.f32 %v857, 2.0
    %v859 = vsub.f32 %v858, 1.0
    %v860 = vmul.f32 %v842, %v782
    %v861 = vmul.f32 %v842, %v859
    %863 = vrot.lane.b32.xlu0 %v861, 64
    %v864 = vpop.permute.xlu0 %863
    %v866 = vadd.f32 %v860, %v864
    %v867 = vtanh.pop %v866
    %v868 = vmul.f32 %v857, %v867
    %s869 = scalar_lea.vmem [#allocation2], 144
    %v870 = vld [vmem:[%s869] sm:$0xff]
    %v871 = vld [vmem:[%s869 + $0x8] sm:$0xff]
    %v872 = vpack.c.bf16 %v868, %v868
    %v874 = vsel %vm116, %v872, 0
    %876 = vmatpush.bf16.msra.mxu0 0
    %877 = vmatpush.bf16.msra.mxu0 0
    %878 = vmatpush.bf16.msra.mxu0 0
    %879 = vmatpush.bf16.msra.mxu0 0
    %880 = vmatpush.bf16.msra.mxu0 %v106
    %881 = vmatpush.bf16.msra.mxu0 %v104
    %882 = vmatpush.bf16.msra.mxu0 %v102
    %883 = vmatpush.bf16.msra.mxu0 %v100
    %884 = vmatmul.bf16.gmra.mxu0 %v874
    %v885 = vpop.f32.mrf.mxu0
    %v886 = vadd.f32 0.0, %v885
    %v887 = vpop.f32.mrf.mxu0
    %888 = vdwg.mxu0
    %889 = vmatpush.bf16.msra.mxu0 0
    %890 = vmatpush.bf16.msra.mxu0 0
    %891 = vmatpush.bf16.msra.mxu0 0
    %892 = vmatpush.bf16.msra.mxu0 0
    %893 = vmatpush.bf16.msra.mxu0 %v107
    %894 = vmatpush.bf16.msra.mxu0 %v105
    %895 = vmatpush.bf16.msra.mxu0 %v103
    %896 = vmatpush.bf16.msra.mxu0 %v101
    %897 = vmatmul.bf16.gmra.mxu0 %v874
    %v898 = vpop.f32.mrf.mxu0
    %v899 = vadd.f32 0.0, %v898
    %v900 = vpop.f32.mrf.mxu0
    %901 = vdwg.mxu0
    %v902 = vadd.f32 %v870, %v886
    %v903 = vadd.f32 %v871, %v899
    %v904 = vxor.u32 %v902, 2147483648
    %v905 = vxor.u32 %v903, 2147483648
    %v906 = vmul.f32 %v904, 1.442695
    %v907 = vpow.pop %v906
    %v908 = vmul.f32 %v905, 1.442695
    %v909 = vpow.pop %v908
    %v910 = vadd.f32 %v907, 1.0
    %v911 = vadd.f32 %v909, 1.0
    %v912 = vrcp.pop %v910
    %v913 = vmul.f32 %v910, %v912
    %v914 = vsub.f32 1.0, %v913
    %v915 = vmul.f32 %v912, %v914
    %v916 = vadd.f32 %v912, %v915
    %vm917 = vweird.f32 %v910
    %vm918 = vweird.f32 %v912
    %vm919 = vmor %vm917, %vm918
    %v920 = vsel %vm919, %v912, %v916
    %v921 = vand.u32 2147483647, %v910
    %vm922 = vcmp.eq.f32.partialorder %v921, 8.507059e+37
    %v923 = vand.u32 %v910, 2147483648
    %v924 = vor.u32 1.1754944e-38, %v923
    %v925 = vsel %vm922, %v924, %v920
    %v926 = vmul.f32 1.0, %v925
    %v927 = vrcp.pop %v911
    %v928 = vmul.f32 %v911, %v927
    %v929 = vsub.f32 1.0, %v928
    %v930 = vmul.f32 %v927, %v929
    %v931 = vadd.f32 %v927, %v930
    %vm932 = vweird.f32 %v911
    %vm933 = vweird.f32 %v927
    %vm934 = vmor %vm932, %vm933
    %v935 = vsel %vm934, %v927, %v931
    %v936 = vand.u32 2147483647, %v911
    %vm937 = vcmp.eq.f32.partialorder %v936, 8.507059e+37
    %v938 = vand.u32 %v911, 2147483648
    %v939 = vor.u32 1.1754944e-38, %v938
    %v940 = vsel %vm937, %v939, %v935
    %v941 = vmul.f32 1.0, %v940
    %v942 = vmul.f32 %v941, 2.0
    %v943 = vsub.f32 %v942, 1.0
    %v944 = vmul.f32 %v926, %v866
    %v945 = vmul.f32 %v926, %v943
    %947 = vrot.lane.b32.xlu0 %v945, 64
    %v948 = vpop.permute.xlu0 %947
    %v950 = vadd.f32 %v944, %v948
    %v951 = vtanh.pop %v950
    %v952 = vmul.f32 %v941, %v951
    %s953 = scalar_lea.vmem [#allocation2], 160
    %v954 = vld [vmem:[%s953] sm:$0xff]
    %v955 = vld [vmem:[%s953 + $0x8] sm:$0xff]
    %v956 = vpack.c.bf16 %v952, %v952
    %v958 = vsel %vm116, %v956, 0
    %960 = vmatpush.bf16.msra.mxu0 0
    %961 = vmatpush.bf16.msra.mxu0 0
    %962 = vmatpush.bf16.msra.mxu0 0
    %963 = vmatpush.bf16.msra.mxu0 0
    %964 = vmatpush.bf16.msra.mxu0 %v106
    %965 = vmatpush.bf16.msra.mxu0 %v104
    %966 = vmatpush.bf16.msra.mxu0 %v102
    %967 = vmatpush.bf16.msra.mxu0 %v100
    %968 = vmatmul.bf16.gmra.mxu0 %v958
    %v969 = vpop.f32.mrf.mxu0
    %v970 = vadd.f32 0.0, %v969
    %v971 = vpop.f32.mrf.mxu0
    %972 = vdwg.mxu0
    %973 = vmatpush.bf16.msra.mxu0 0
    %974 = vmatpush.bf16.msra.mxu0 0
    %975 = vmatpush.bf16.msra.mxu0 0
    %976 = vmatpush.bf16.msra.mxu0 0
    %977 = vmatpush.bf16.msra.mxu0 %v107
    %978 = vmatpush.bf16.msra.mxu0 %v105
    %979 = vmatpush.bf16.msra.mxu0 %v103
    %980 = vmatpush.bf16.msra.mxu0 %v101
    %981 = vmatmul.bf16.gmra.mxu0 %v958
    %v982 = vpop.f32.mrf.mxu0
    %v983 = vadd.f32 0.0, %v982
    %v984 = vpop.f32.mrf.mxu0
    %985 = vdwg.mxu0
    %v986 = vadd.f32 %v954, %v970
    %v987 = vadd.f32 %v955, %v983
    %v988 = vxor.u32 %v986, 2147483648
    %v989 = vxor.u32 %v987, 2147483648
    %v990 = vmul.f32 %v988, 1.442695
    %v991 = vpow.pop %v990
    %v992 = vmul.f32 %v989, 1.442695
    %v993 = vpow.pop %v992
    %v994 = vadd.f32 %v991, 1.0
    %v995 = vadd.f32 %v993, 1.0
    %v996 = vrcp.pop %v994
    %v997 = vmul.f32 %v994, %v996
    %v998 = vsub.f32 1.0, %v997
    %v999 = vmul.f32 %v996, %v998
    %v1000 = vadd.f32 %v996, %v999
    %vm1001 = vweird.f32 %v994
    %vm1002 = vweird.f32 %v996
    %vm1003 = vmor %vm1001, %vm1002
    %v1004 = vsel %vm1003, %v996, %v1000
    %v1005 = vand.u32 2147483647, %v994
    %vm1006 = vcmp.eq.f32.partialorder %v1005, 8.507059e+37
    %v1007 = vand.u32 %v994, 2147483648
    %v1008 = vor.u32 1.1754944e-38, %v1007
    %v1009 = vsel %vm1006, %v1008, %v1004
    %v1010 = vmul.f32 1.0, %v1009
    %v1011 = vrcp.pop %v995
    %v1012 = vmul.f32 %v995, %v1011
    %v1013 = vsub.f32 1.0, %v1012
    %v1014 = vmul.f32 %v1011, %v1013
    %v1015 = vadd.f32 %v1011, %v1014
    %vm1016 = vweird.f32 %v995
    %vm1017 = vweird.f32 %v1011
    %vm1018 = vmor %vm1016, %vm1017
    %v1019 = vsel %vm1018, %v1011, %v1015
    %v1020 = vand.u32 2147483647, %v995
    %vm1021 = vcmp.eq.f32.partialorder %v1020, 8.507059e+37
    %v1022 = vand.u32 %v995, 2147483648
    %v1023 = vor.u32 1.1754944e-38, %v1022
    %v1024 = vsel %vm1021, %v1023, %v1019
    %v1025 = vmul.f32 1.0, %v1024
    %v1026 = vmul.f32 %v1025, 2.0
    %v1027 = vsub.f32 %v1026, 1.0
    %v1028 = vmul.f32 %v1010, %v950
    %v1029 = vmul.f32 %v1010, %v1027
    %1031 = vrot.lane.b32.xlu0 %v1029, 64
    %v1032 = vpop.permute.xlu0 %1031
    %v1034 = vadd.f32 %v1028, %v1032
    %v1035 = vtanh.pop %v1034
    %v1036 = vmul.f32 %v1025, %v1035
    %s1037 = scalar_lea.vmem [#allocation2], 176
    %v1038 = vld [vmem:[%s1037] sm:$0xff]
    %v1039 = vld [vmem:[%s1037 + $0x8] sm:$0xff]
    %v1040 = vpack.c.bf16 %v1036, %v1036
    %v1042 = vsel %vm116, %v1040, 0
    %1044 = vmatpush.bf16.msra.mxu0 0
    %1045 = vmatpush.bf16.msra.mxu0 0
    %1046 = vmatpush.bf16.msra.mxu0 0
    %1047 = vmatpush.bf16.msra.mxu0 0
    %1048 = vmatpush.bf16.msra.mxu0 %v106
    %1049 = vmatpush.bf16.msra.mxu0 %v104
    %1050 = vmatpush.bf16.msra.mxu0 %v102
    %1051 = vmatpush.bf16.msra.mxu0 %v100
    %1052 = vmatmul.bf16.gmra.mxu0 %v1042
    %v1053 = vpop.f32.mrf.mxu0
    %v1054 = vadd.f32 0.0, %v1053
    %v1055 = vpop.f32.mrf.mxu0
    %1056 = vdwg.mxu0
    %1057 = vmatpush.bf16.msra.mxu0 0
    %1058 = vmatpush.bf16.msra.mxu0 0
    %1059 = vmatpush.bf16.msra.mxu0 0
    %1060 = vmatpush.bf16.msra.mxu0 0
    %1061 = vmatpush.bf16.msra.mxu0 %v107
    %1062 = vmatpush.bf16.msra.mxu0 %v105
    %1063 = vmatpush.bf16.msra.mxu0 %v103
    %1064 = vmatpush.bf16.msra.mxu0 %v101
    %1065 = vmatmul.bf16.gmra.mxu0 %v1042
    %v1066 = vpop.f32.mrf.mxu0
    %v1067 = vadd.f32 0.0, %v1066
    %v1068 = vpop.f32.mrf.mxu0
    %1069 = vdwg.mxu0
    %v1070 = vadd.f32 %v1038, %v1054
    %v1071 = vadd.f32 %v1039, %v1067
    %v1072 = vxor.u32 %v1070, 2147483648
    %v1073 = vxor.u32 %v1071, 2147483648
    %v1074 = vmul.f32 %v1072, 1.442695
    %v1075 = vpow.pop %v1074
    %v1076 = vmul.f32 %v1073, 1.442695
    %v1077 = vpow.pop %v1076
    %v1078 = vadd.f32 %v1075, 1.0
    %v1079 = vadd.f32 %v1077, 1.0
    %v1080 = vrcp.pop %v1078
    %v1081 = vmul.f32 %v1078, %v1080
    %v1082 = vsub.f32 1.0, %v1081
    %v1083 = vmul.f32 %v1080, %v1082
    %v1084 = vadd.f32 %v1080, %v1083
    %vm1085 = vweird.f32 %v1078
    %vm1086 = vweird.f32 %v1080
    %vm1087 = vmor %vm1085, %vm1086
    %v1088 = vsel %vm1087, %v1080, %v1084
    %v1089 = vand.u32 2147483647, %v1078
    %vm1090 = vcmp.eq.f32.partialorder %v1089, 8.507059e+37
    %v1091 = vand.u32 %v1078, 2147483648
    %v1092 = vor.u32 1.1754944e-38, %v1091
    %v1093 = vsel %vm1090, %v1092, %v1088
    %v1094 = vmul.f32 1.0, %v1093
    %v1095 = vrcp.pop %v1079
    %v1096 = vmul.f32 %v1079, %v1095
    %v1097 = vsub.f32 1.0, %v1096
    %v1098 = vmul.f32 %v1095, %v1097
    %v1099 = vadd.f32 %v1095, %v1098
    %vm1100 = vweird.f32 %v1079
    %vm1101 = vweird.f32 %v1095
    %vm1102 = vmor %vm1100, %vm1101
    %v1103 = vsel %vm1102, %v1095, %v1099
    %v1104 = vand.u32 2147483647, %v1079
    %vm1105 = vcmp.eq.f32.partialorder %v1104, 8.507059e+37
    %v1106 = vand.u32 %v1079, 2147483648
    %v1107 = vor.u32 1.1754944e-38, %v1106
    %v1108 = vsel %vm1105, %v1107, %v1103
    %v1109 = vmul.f32 1.0, %v1108
    %v1110 = vmul.f32 %v1109, 2.0
    %v1111 = vsub.f32 %v1110, 1.0
    %v1112 = vmul.f32 %v1094, %v1034
    %v1113 = vmul.f32 %v1094, %v1111
    %1115 = vrot.lane.b32.xlu0 %v1113, 64
    %v1116 = vpop.permute.xlu0 %1115
    %v1118 = vadd.f32 %v1112, %v1116
    %v1119 = vtanh.pop %v1118
    %v1120 = vmul.f32 %v1109, %v1119
    %s1121 = scalar_lea.vmem [#allocation2], 192
    %v1122 = vld [vmem:[%s1121] sm:$0xff]
    %v1123 = vld [vmem:[%s1121 + $0x8] sm:$0xff]
    %v1124 = vpack.c.bf16 %v1120, %v1120
    %v1126 = vsel %vm116, %v1124, 0
    %1128 = vmatpush.bf16.msra.mxu0 0
    %1129 = vmatpush.bf16.msra.mxu0 0
    %1130 = vmatpush.bf16.msra.mxu0 0
    %1131 = vmatpush.bf16.msra.mxu0 0
    %1132 = vmatpush.bf16.msra.mxu0 %v106
    %1133 = vmatpush.bf16.msra.mxu0 %v104
    %1134 = vmatpush.bf16.msra.mxu0 %v102
    %1135 = vmatpush.bf16.msra.mxu0 %v100
    %1136 = vmatmul.bf16.gmra.mxu0 %v1126
    %v1137 = vpop.f32.mrf.mxu0
    %v1138 = vadd.f32 0.0, %v1137
    %v1139 = vpop.f32.mrf.mxu0
    %1140 = vdwg.mxu0
    %1141 = vmatpush.bf16.msra.mxu0 0
    %1142 = vmatpush.bf16.msra.mxu0 0
    %1143 = vmatpush.bf16.msra.mxu0 0
    %1144 = vmatpush.bf16.msra.mxu0 0
    %1145 = vmatpush.bf16.msra.mxu0 %v107
    %1146 = vmatpush.bf16.msra.mxu0 %v105
    %1147 = vmatpush.bf16.msra.mxu0 %v103
    %1148 = vmatpush.bf16.msra.mxu0 %v101
    %1149 = vmatmul.bf16.gmra.mxu0 %v1126
    %v1150 = vpop.f32.mrf.mxu0
    %v1151 = vadd.f32 0.0, %v1150
    %v1152 = vpop.f32.mrf.mxu0
    %1153 = vdwg.mxu0
    %v1154 = vadd.f32 %v1122, %v1138
    %v1155 = vadd.f32 %v1123, %v1151
    %v1156 = vxor.u32 %v1154, 2147483648
    %v1157 = vxor.u32 %v1155, 2147483648
    %v1158 = vmul.f32 %v1156, 1.442695
    %v1159 = vpow.pop %v1158
    %v1160 = vmul.f32 %v1157, 1.442695
    %v1161 = vpow.pop %v1160
    %v1162 = vadd.f32 %v1159, 1.0
    %v1163 = vadd.f32 %v1161, 1.0
    %v1164 = vrcp.pop %v1162
    %v1165 = vmul.f32 %v1162, %v1164
    %v1166 = vsub.f32 1.0, %v1165
    %v1167 = vmul.f32 %v1164, %v1166
    %v1168 = vadd.f32 %v1164, %v1167
    %vm1169 = vweird.f32 %v1162
    %vm1170 = vweird.f32 %v1164
    %vm1171 = vmor %vm1169, %vm1170
    %v1172 = vsel %vm1171, %v1164, %v1168
    %v1173 = vand.u32 2147483647, %v1162
    %vm1174 = vcmp.eq.f32.partialorder %v1173, 8.507059e+37
    %v1175 = vand.u32 %v1162, 2147483648
    %v1176 = vor.u32 1.1754944e-38, %v1175
    %v1177 = vsel %vm1174, %v1176, %v1172
    %v1178 = vmul.f32 1.0, %v1177
    %v1179 = vrcp.pop %v1163
    %v1180 = vmul.f32 %v1163, %v1179
    %v1181 = vsub.f32 1.0, %v1180
    %v1182 = vmul.f32 %v1179, %v1181
    %v1183 = vadd.f32 %v1179, %v1182
    %vm1184 = vweird.f32 %v1163
    %vm1185 = vweird.f32 %v1179
    %vm1186 = vmor %vm1184, %vm1185
    %v1187 = vsel %vm1186, %v1179, %v1183
    %v1188 = vand.u32 2147483647, %v1163
    %vm1189 = vcmp.eq.f32.partialorder %v1188, 8.507059e+37
    %v1190 = vand.u32 %v1163, 2147483648
    %v1191 = vor.u32 1.1754944e-38, %v1190
    %v1192 = vsel %vm1189, %v1191, %v1187
    %v1193 = vmul.f32 1.0, %v1192
    %v1194 = vmul.f32 %v1193, 2.0
    %v1195 = vsub.f32 %v1194, 1.0
    %v1196 = vmul.f32 %v1178, %v1118
    %v1197 = vmul.f32 %v1178, %v1195
    %1199 = vrot.lane.b32.xlu0 %v1197, 64
    %v1200 = vpop.permute.xlu0 %1199
    %v1202 = vadd.f32 %v1196, %v1200
    %v1203 = vtanh.pop %v1202
    %v1204 = vmul.f32 %v1193, %v1203
    %s1205 = scalar_lea.vmem [#allocation2], 208
    %v1206 = vld [vmem:[%s1205] sm:$0xff]
    %v1207 = vld [vmem:[%s1205 + $0x8] sm:$0xff]
    %v1208 = vpack.c.bf16 %v1204, %v1204
    %v1210 = vsel %vm116, %v1208, 0
    %1212 = vmatpush.bf16.msra.mxu0 0
    %1213 = vmatpush.bf16.msra.mxu0 0
    %1214 = vmatpush.bf16.msra.mxu0 0
    %1215 = vmatpush.bf16.msra.mxu0 0
    %1216 = vmatpush.bf16.msra.mxu0 %v106
    %1217 = vmatpush.bf16.msra.mxu0 %v104
    %1218 = vmatpush.bf16.msra.mxu0 %v102
    %1219 = vmatpush.bf16.msra.mxu0 %v100
    %1220 = vmatmul.bf16.gmra.mxu0 %v1210
    %v1221 = vpop.f32.mrf.mxu0
    %v1222 = vadd.f32 0.0, %v1221
    %v1223 = vpop.f32.mrf.mxu0
    %1224 = vdwg.mxu0
    %1225 = vmatpush.bf16.msra.mxu0 0
    %1226 = vmatpush.bf16.msra.mxu0 0
    %1227 = vmatpush.bf16.msra.mxu0 0
    %1228 = vmatpush.bf16.msra.mxu0 0
    %1229 = vmatpush.bf16.msra.mxu0 %v107
    %1230 = vmatpush.bf16.msra.mxu0 %v105
    %1231 = vmatpush.bf16.msra.mxu0 %v103
    %1232 = vmatpush.bf16.msra.mxu0 %v101
    %1233 = vmatmul.bf16.gmra.mxu0 %v1210
    %v1234 = vpop.f32.mrf.mxu0
    %v1235 = vadd.f32 0.0, %v1234
    %v1236 = vpop.f32.mrf.mxu0
    %1237 = vdwg.mxu0
    %v1238 = vadd.f32 %v1206, %v1222
    %v1239 = vadd.f32 %v1207, %v1235
    %v1240 = vxor.u32 %v1238, 2147483648
    %v1241 = vxor.u32 %v1239, 2147483648
    %v1242 = vmul.f32 %v1240, 1.442695
    %v1243 = vpow.pop %v1242
    %v1244 = vmul.f32 %v1241, 1.442695
    %v1245 = vpow.pop %v1244
    %v1246 = vadd.f32 %v1243, 1.0
    %v1247 = vadd.f32 %v1245, 1.0
    %v1248 = vrcp.pop %v1246
    %v1249 = vmul.f32 %v1246, %v1248
    %v1250 = vsub.f32 1.0, %v1249
    %v1251 = vmul.f32 %v1248, %v1250
    %v1252 = vadd.f32 %v1248, %v1251
    %vm1253 = vweird.f32 %v1246
    %vm1254 = vweird.f32 %v1248
    %vm1255 = vmor %vm1253, %vm1254
    %v1256 = vsel %vm1255, %v1248, %v1252
    %v1257 = vand.u32 2147483647, %v1246
    %vm1258 = vcmp.eq.f32.partialorder %v1257, 8.507059e+37
    %v1259 = vand.u32 %v1246, 2147483648
    %v1260 = vor.u32 1.1754944e-38, %v1259
    %v1261 = vsel %vm1258, %v1260, %v1256
    %v1262 = vmul.f32 1.0, %v1261
    %v1263 = vrcp.pop %v1247
    %v1264 = vmul.f32 %v1247, %v1263
    %v1265 = vsub.f32 1.0, %v1264
    %v1266 = vmul.f32 %v1263, %v1265
    %v1267 = vadd.f32 %v1263, %v1266
    %vm1268 = vweird.f32 %v1247
    %vm1269 = vweird.f32 %v1263
    %vm1270 = vmor %vm1268, %vm1269
    %v1271 = vsel %vm1270, %v1263, %v1267
    %v1272 = vand.u32 2147483647, %v1247
    %vm1273 = vcmp.eq.f32.partialorder %v1272, 8.507059e+37
    %v1274 = vand.u32 %v1247, 2147483648
    %v1275 = vor.u32 1.1754944e-38, %v1274
    %v1276 = vsel %vm1273, %v1275, %v1271
    %v1277 = vmul.f32 1.0, %v1276
    %v1278 = vmul.f32 %v1277, 2.0
    %v1279 = vsub.f32 %v1278, 1.0
    %v1280 = vmul.f32 %v1262, %v1202
    %v1281 = vmul.f32 %v1262, %v1279
    %1283 = vrot.lane.b32.xlu0 %v1281, 64
    %v1284 = vpop.permute.xlu0 %1283
    %v1286 = vadd.f32 %v1280, %v1284
    %v1287 = vtanh.pop %v1286
    %v1288 = vmul.f32 %v1277, %v1287
    %s1289 = scalar_lea.vmem [#allocation2], 224
    %v1290 = vld [vmem:[%s1289] sm:$0xff]
    %v1291 = vld [vmem:[%s1289 + $0x8] sm:$0xff]
    %v1292 = vpack.c.bf16 %v1288, %v1288
    %v1294 = vsel %vm116, %v1292, 0
    %1296 = vmatpush.bf16.msra.mxu0 0
    %1297 = vmatpush.bf16.msra.mxu0 0
    %1298 = vmatpush.bf16.msra.mxu0 0
    %1299 = vmatpush.bf16.msra.mxu0 0
    %1300 = vmatpush.bf16.msra.mxu0 %v106
    %1301 = vmatpush.bf16.msra.mxu0 %v104
    %1302 = vmatpush.bf16.msra.mxu0 %v102
    %1303 = vmatpush.bf16.msra.mxu0 %v100
    %1304 = vmatmul.bf16.gmra.mxu0 %v1294
    %v1305 = vpop.f32.mrf.mxu0
    %v1306 = vadd.f32 0.0, %v1305
    %v1307 = vpop.f32.mrf.mxu0
    %1308 = vdwg.mxu0
    %1309 = vmatpush.bf16.msra.mxu0 0
    %1310 = vmatpush.bf16.msra.mxu0 0
    %1311 = vmatpush.bf16.msra.mxu0 0
    %1312 = vmatpush.bf16.msra.mxu0 0
    %1313 = vmatpush.bf16.msra.mxu0 %v107
    %1314 = vmatpush.bf16.msra.mxu0 %v105
    %1315 = vmatpush.bf16.msra.mxu0 %v103
    %1316 = vmatpush.bf16.msra.mxu0 %v101
    %1317 = vmatmul.bf16.gmra.mxu0 %v1294
    %v1318 = vpop.f32.mrf.mxu0
    %v1319 = vadd.f32 0.0, %v1318
    %v1320 = vpop.f32.mrf.mxu0
    %1321 = vdwg.mxu0
    %v1322 = vadd.f32 %v1290, %v1306
    %v1323 = vadd.f32 %v1291, %v1319
    %v1324 = vxor.u32 %v1322, 2147483648
    %v1325 = vxor.u32 %v1323, 2147483648
    %v1326 = vmul.f32 %v1324, 1.442695
    %v1327 = vpow.pop %v1326
    %v1328 = vmul.f32 %v1325, 1.442695
    %v1329 = vpow.pop %v1328
    %v1330 = vadd.f32 %v1327, 1.0
    %v1331 = vadd.f32 %v1329, 1.0
    %v1332 = vrcp.pop %v1330
    %v1333 = vmul.f32 %v1330, %v1332
    %v1334 = vsub.f32 1.0, %v1333
    %v1335 = vmul.f32 %v1332, %v1334
    %v1336 = vadd.f32 %v1332, %v1335
    %vm1337 = vweird.f32 %v1330
    %vm1338 = vweird.f32 %v1332
    %vm1339 = vmor %vm1337, %vm1338
    %v1340 = vsel %vm1339, %v1332, %v1336
    %v1341 = vand.u32 2147483647, %v1330
    %vm1342 = vcmp.eq.f32.partialorder %v1341, 8.507059e+37
    %v1343 = vand.u32 %v1330, 2147483648
    %v1344 = vor.u32 1.1754944e-38, %v1343
    %v1345 = vsel %vm1342, %v1344, %v1340
    %v1346 = vmul.f32 1.0, %v1345
    %v1347 = vrcp.pop %v1331
    %v1348 = vmul.f32 %v1331, %v1347
    %v1349 = vsub.f32 1.0, %v1348
    %v1350 = vmul.f32 %v1347, %v1349
    %v1351 = vadd.f32 %v1347, %v1350
    %vm1352 = vweird.f32 %v1331
    %vm1353 = vweird.f32 %v1347
    %vm1354 = vmor %vm1352, %vm1353
    %v1355 = vsel %vm1354, %v1347, %v1351
    %v1356 = vand.u32 2147483647, %v1331
    %vm1357 = vcmp.eq.f32.partialorder %v1356, 8.507059e+37
    %v1358 = vand.u32 %v1331, 2147483648
    %v1359 = vor.u32 1.1754944e-38, %v1358
    %v1360 = vsel %vm1357, %v1359, %v1355
    %v1361 = vmul.f32 1.0, %v1360
    %v1362 = vmul.f32 %v1361, 2.0
    %v1363 = vsub.f32 %v1362, 1.0
    %v1364 = vmul.f32 %v1346, %v1286
    %v1365 = vmul.f32 %v1346, %v1363
    %1367 = vrot.lane.b32.xlu0 %v1365, 64
    %v1368 = vpop.permute.xlu0 %1367
    %v1370 = vadd.f32 %v1364, %v1368
    %v1371 = vtanh.pop %v1370
    %v1372 = vmul.f32 %v1361, %v1371
    %s1373 = scalar_lea.vmem [#allocation2], 240
    %v1374 = vld [vmem:[%s1373] sm:$0xff]
    %v1375 = vld [vmem:[%s1373 + $0x8] sm:$0xff]
    %v1376 = vpack.c.bf16 %v1372, %v1372
    %v1378 = vsel %vm116, %v1376, 0
    %1380 = vmatpush.bf16.msra.mxu0 0
    %1381 = vmatpush.bf16.msra.mxu0 0
    %1382 = vmatpush.bf16.msra.mxu0 0
    %1383 = vmatpush.bf16.msra.mxu0 0
    %1384 = vmatpush.bf16.msra.mxu0 %v106
    %1385 = vmatpush.bf16.msra.mxu0 %v104
    %1386 = vmatpush.bf16.msra.mxu0 %v102
    %1387 = vmatpush.bf16.msra.mxu0 %v100
    %1388 = vmatmul.bf16.gmra.mxu0 %v1378
    %v1389 = vpop.f32.mrf.mxu0
    %v1390 = vadd.f32 0.0, %v1389
    %v1391 = vpop.f32.mrf.mxu0
    %1392 = vdwg.mxu0
    %1393 = vmatpush.bf16.msra.mxu0 0
    %1394 = vmatpush.bf16.msra.mxu0 0
    %1395 = vmatpush.bf16.msra.mxu0 0
    %1396 = vmatpush.bf16.msra.mxu0 0
    %1397 = vmatpush.bf16.msra.mxu0 %v107
    %1398 = vmatpush.bf16.msra.mxu0 %v105
    %1399 = vmatpush.bf16.msra.mxu0 %v103
    %1400 = vmatpush.bf16.msra.mxu0 %v101
    %1401 = vmatmul.bf16.gmra.mxu0 %v1378
    %v1402 = vpop.f32.mrf.mxu0
    %v1403 = vadd.f32 0.0, %v1402
    %v1404 = vpop.f32.mrf.mxu0
    %1405 = vdwg.mxu0
    %v1406 = vadd.f32 %v1374, %v1390
    %v1407 = vadd.f32 %v1375, %v1403
    %v1408 = vxor.u32 %v1406, 2147483648
    %v1409 = vxor.u32 %v1407, 2147483648
    %v1410 = vmul.f32 %v1408, 1.442695
    %v1411 = vpow.pop %v1410
    %v1412 = vmul.f32 %v1409, 1.442695
    %v1413 = vpow.pop %v1412
    %v1414 = vadd.f32 %v1411, 1.0
    %v1415 = vadd.f32 %v1413, 1.0
    %v1416 = vrcp.pop %v1414
    %v1417 = vmul.f32 %v1414, %v1416
    %v1418 = vsub.f32 1.0, %v1417
    %v1419 = vmul.f32 %v1416, %v1418
    %v1420 = vadd.f32 %v1416, %v1419
    %vm1421 = vweird.f32 %v1414
    %vm1422 = vweird.f32 %v1416
    %vm1423 = vmor %vm1421, %vm1422
    %v1424 = vsel %vm1423, %v1416, %v1420
    %v1425 = vand.u32 2147483647, %v1414
    %vm1426 = vcmp.eq.f32.partialorder %v1425, 8.507059e+37
    %v1427 = vand.u32 %v1414, 2147483648
    %v1428 = vor.u32 1.1754944e-38, %v1427
    %v1429 = vsel %vm1426, %v1428, %v1424
    %v1430 = vmul.f32 1.0, %v1429
    %v1431 = vrcp.pop %v1415
    %v1432 = vmul.f32 %v1415, %v1431
    %v1433 = vsub.f32 1.0, %v1432
    %v1434 = vmul.f32 %v1431, %v1433
    %v1435 = vadd.f32 %v1431, %v1434
    %vm1436 = vweird.f32 %v1415
    %vm1437 = vweird.f32 %v1431
    %vm1438 = vmor %vm1436, %vm1437
    %v1439 = vsel %vm1438, %v1431, %v1435
    %v1440 = vand.u32 2147483647, %v1415
    %vm1441 = vcmp.eq.f32.partialorder %v1440, 8.507059e+37
    %v1442 = vand.u32 %v1415, 2147483648
    %v1443 = vor.u32 1.1754944e-38, %v1442
    %v1444 = vsel %vm1441, %v1443, %v1439
    %v1445 = vmul.f32 1.0, %v1444
    %v1446 = vmul.f32 %v1445, 2.0
    %v1447 = vsub.f32 %v1446, 1.0
    %v1448 = vmul.f32 %v1430, %v1370
    %v1449 = vmul.f32 %v1430, %v1447
    %1451 = vrot.lane.b32.xlu0 %v1449, 64
    %v1452 = vpop.permute.xlu0 %1451
    %v1454 = vadd.f32 %v1448, %v1452
    %v1455 = vtanh.pop %v1454
    %v1456 = vmul.f32 %v1445, %v1455
    %s1457 = scalar_lea.vmem [#allocation2], 256
    %v1458 = vld [vmem:[%s1457] sm:$0xff]
    %v1459 = vld [vmem:[%s1457 + $0x8] sm:$0xff]
    %v1460 = vpack.c.bf16 %v1456, %v1456
    %v1462 = vsel %vm116, %v1460, 0
    %1464 = vmatpush.bf16.msra.mxu0 0
    %1465 = vmatpush.bf16.msra.mxu0 0
    %1466 = vmatpush.bf16.msra.mxu0 0
    %1467 = vmatpush.bf16.msra.mxu0 0
    %1468 = vmatpush.bf16.msra.mxu0 %v106
    %1469 = vmatpush.bf16.msra.mxu0 %v104
    %1470 = vmatpush.bf16.msra.mxu0 %v102
    %1471 = vmatpush.bf16.msra.mxu0 %v100
    %1472 = vmatmul.bf16.gmra.mxu0 %v1462
    %v1473 = vpop.f32.mrf.mxu0
    %v1474 = vadd.f32 0.0, %v1473
    %v1475 = vpop.f32.mrf.mxu0
    %1476 = vdwg.mxu0
    %1477 = vmatpush.bf16.msra.mxu0 0
    %1478 = vmatpush.bf16.msra.mxu0 0
    %1479 = vmatpush.bf16.msra.mxu0 0
    %1480 = vmatpush.bf16.msra.mxu0 0
    %1481 = vmatpush.bf16.msra.mxu0 %v107
    %1482 = vmatpush.bf16.msra.mxu0 %v105
    %1483 = vmatpush.bf16.msra.mxu0 %v103
    %1484 = vmatpush.bf16.msra.mxu0 %v101
    %1485 = vmatmul.bf16.gmra.mxu0 %v1462
    %v1486 = vpop.f32.mrf.mxu0
    %v1487 = vadd.f32 0.0, %v1486
    %v1488 = vpop.f32.mrf.mxu0
    %1489 = vdwg.mxu0
    %v1490 = vadd.f32 %v1458, %v1474
    %v1491 = vadd.f32 %v1459, %v1487
    %v1492 = vxor.u32 %v1490, 2147483648
    %v1493 = vxor.u32 %v1491, 2147483648
    %v1494 = vmul.f32 %v1492, 1.442695
    %v1495 = vpow.pop %v1494
    %v1496 = vmul.f32 %v1493, 1.442695
    %v1497 = vpow.pop %v1496
    %v1498 = vadd.f32 %v1495, 1.0
    %v1499 = vadd.f32 %v1497, 1.0
    %v1500 = vrcp.pop %v1498
    %v1501 = vmul.f32 %v1498, %v1500
    %v1502 = vsub.f32 1.0, %v1501
    %v1503 = vmul.f32 %v1500, %v1502
    %v1504 = vadd.f32 %v1500, %v1503
    %vm1505 = vweird.f32 %v1498
    %vm1506 = vweird.f32 %v1500
    %vm1507 = vmor %vm1505, %vm1506
    %v1508 = vsel %vm1507, %v1500, %v1504
    %v1509 = vand.u32 2147483647, %v1498
    %vm1510 = vcmp.eq.f32.partialorder %v1509, 8.507059e+37
    %v1511 = vand.u32 %v1498, 2147483648
    %v1512 = vor.u32 1.1754944e-38, %v1511
    %v1513 = vsel %vm1510, %v1512, %v1508
    %v1514 = vmul.f32 1.0, %v1513
    %v1515 = vrcp.pop %v1499
    %v1516 = vmul.f32 %v1499, %v1515
    %v1517 = vsub.f32 1.0, %v1516
    %v1518 = vmul.f32 %v1515, %v1517
    %v1519 = vadd.f32 %v1515, %v1518
    %vm1520 = vweird.f32 %v1499
    %vm1521 = vweird.f32 %v1515
    %vm1522 = vmor %vm1520, %vm1521
    %v1523 = vsel %vm1522, %v1515, %v1519
    %v1524 = vand.u32 2147483647, %v1499
    %vm1525 = vcmp.eq.f32.partialorder %v1524, 8.507059e+37
    %v1526 = vand.u32 %v1499, 2147483648
    %v1527 = vor.u32 1.1754944e-38, %v1526
    %v1528 = vsel %vm1525, %v1527, %v1523
    %v1529 = vmul.f32 1.0, %v1528
    %v1530 = vmul.f32 %v1529, 2.0
    %v1531 = vsub.f32 %v1530, 1.0
    %v1532 = vmul.f32 %v1514, %v1454
    %v1533 = vmul.f32 %v1514, %v1531
    %1535 = vrot.lane.b32.xlu0 %v1533, 64
    %v1536 = vpop.permute.xlu0 %1535
    %v1538 = vadd.f32 %v1532, %v1536
    %v1539 = vtanh.pop %v1538
    %v1540 = vmul.f32 %v1529, %v1539
    %s1541 = scalar_lea.vmem [#allocation2], 272
    %v1542 = vld [vmem:[%s1541] sm:$0xff]
    %v1543 = vld [vmem:[%s1541 + $0x8] sm:$0xff]
    %v1544 = vpack.c.bf16 %v1540, %v1540
    %v1546 = vsel %vm116, %v1544, 0
    %1548 = vmatpush.bf16.msra.mxu0 0
    %1549 = vmatpush.bf16.msra.mxu0 0
    %1550 = vmatpush.bf16.msra.mxu0 0
    %1551 = vmatpush.bf16.msra.mxu0 0
    %1552 = vmatpush.bf16.msra.mxu0 %v106
    %1553 = vmatpush.bf16.msra.mxu0 %v104
    %1554 = vmatpush.bf16.msra.mxu0 %v102
    %1555 = vmatpush.bf16.msra.mxu0 %v100
    %1556 = vmatmul.bf16.gmra.mxu0 %v1546
    %v1557 = vpop.f32.mrf.mxu0
    %v1558 = vadd.f32 0.0, %v1557
    %v1559 = vpop.f32.mrf.mxu0
    %1560 = vdwg.mxu0
    %1561 = vmatpush.bf16.msra.mxu0 0
    %1562 = vmatpush.bf16.msra.mxu0 0
    %1563 = vmatpush.bf16.msra.mxu0 0
    %1564 = vmatpush.bf16.msra.mxu0 0
    %1565 = vmatpush.bf16.msra.mxu0 %v107
    %1566 = vmatpush.bf16.msra.mxu0 %v105
    %1567 = vmatpush.bf16.msra.mxu0 %v103
    %1568 = vmatpush.bf16.msra.mxu0 %v101
    %1569 = vmatmul.bf16.gmra.mxu0 %v1546
    %v1570 = vpop.f32.mrf.mxu0
    %v1571 = vadd.f32 0.0, %v1570
    %v1572 = vpop.f32.mrf.mxu0
    %1573 = vdwg.mxu0
    %v1574 = vadd.f32 %v1542, %v1558
    %v1575 = vadd.f32 %v1543, %v1571
    %v1576 = vxor.u32 %v1574, 2147483648
    %v1577 = vxor.u32 %v1575, 2147483648
    %v1578 = vmul.f32 %v1576, 1.442695
    %v1579 = vpow.pop %v1578
    %v1580 = vmul.f32 %v1577, 1.442695
    %v1581 = vpow.pop %v1580
    %v1582 = vadd.f32 %v1579, 1.0
    %v1583 = vadd.f32 %v1581, 1.0
    %v1584 = vrcp.pop %v1582
    %v1585 = vmul.f32 %v1582, %v1584
    %v1586 = vsub.f32 1.0, %v1585
    %v1587 = vmul.f32 %v1584, %v1586
    %v1588 = vadd.f32 %v1584, %v1587
    %vm1589 = vweird.f32 %v1582
    %vm1590 = vweird.f32 %v1584
    %vm1591 = vmor %vm1589, %vm1590
    %v1592 = vsel %vm1591, %v1584, %v1588
    %v1593 = vand.u32 2147483647, %v1582
    %vm1594 = vcmp.eq.f32.partialorder %v1593, 8.507059e+37
    %v1595 = vand.u32 %v1582, 2147483648
    %v1596 = vor.u32 1.1754944e-38, %v1595
    %v1597 = vsel %vm1594, %v1596, %v1592
    %v1598 = vmul.f32 1.0, %v1597
    %v1599 = vrcp.pop %v1583
    %v1600 = vmul.f32 %v1583, %v1599
    %v1601 = vsub.f32 1.0, %v1600
    %v1602 = vmul.f32 %v1599, %v1601
    %v1603 = vadd.f32 %v1599, %v1602
    %vm1604 = vweird.f32 %v1583
    %vm1605 = vweird.f32 %v1599
    %vm1606 = vmor %vm1604, %vm1605
    %v1607 = vsel %vm1606, %v1599, %v1603
    %v1608 = vand.u32 2147483647, %v1583
    %vm1609 = vcmp.eq.f32.partialorder %v1608, 8.507059e+37
    %v1610 = vand.u32 %v1583, 2147483648
    %v1611 = vor.u32 1.1754944e-38, %v1610
    %v1612 = vsel %vm1609, %v1611, %v1607
    %v1613 = vmul.f32 1.0, %v1612
    %v1614 = vmul.f32 %v1613, 2.0
    %v1615 = vsub.f32 %v1614, 1.0
    %v1616 = vmul.f32 %v1598, %v1538
    %v1617 = vmul.f32 %v1598, %v1615
    %1619 = vrot.lane.b32.xlu0 %v1617, 64
    %v1620 = vpop.permute.xlu0 %1619
    %v1622 = vadd.f32 %v1616, %v1620
    %v1623 = vtanh.pop %v1622
    %v1624 = vmul.f32 %v1613, %v1623
    %s1625 = scalar_lea.vmem [#allocation2], 288
    %v1626 = vld [vmem:[%s1625] sm:$0xff]
    %v1627 = vld [vmem:[%s1625 + $0x8] sm:$0xff]
    %v1628 = vpack.c.bf16 %v1624, %v1624
    %v1630 = vsel %vm116, %v1628, 0
    %1632 = vmatpush.bf16.msra.mxu0 0
    %1633 = vmatpush.bf16.msra.mxu0 0
    %1634 = vmatpush.bf16.msra.mxu0 0
    %1635 = vmatpush.bf16.msra.mxu0 0
    %1636 = vmatpush.bf16.msra.mxu0 %v106
    %1637 = vmatpush.bf16.msra.mxu0 %v104
    %1638 = vmatpush.bf16.msra.mxu0 %v102
    %1639 = vmatpush.bf16.msra.mxu0 %v100
    %1640 = vmatmul.bf16.gmra.mxu0 %v1630
    %v1641 = vpop.f32.mrf.mxu0
    %v1642 = vadd.f32 0.0, %v1641
    %v1643 = vpop.f32.mrf.mxu0
    %1644 = vdwg.mxu0
    %1645 = vmatpush.bf16.msra.mxu0 0
    %1646 = vmatpush.bf16.msra.mxu0 0
    %1647 = vmatpush.bf16.msra.mxu0 0
    %1648 = vmatpush.bf16.msra.mxu0 0
    %1649 = vmatpush.bf16.msra.mxu0 %v107
    %1650 = vmatpush.bf16.msra.mxu0 %v105
    %1651 = vmatpush.bf16.msra.mxu0 %v103
    %1652 = vmatpush.bf16.msra.mxu0 %v101
    %1653 = vmatmul.bf16.gmra.mxu0 %v1630
    %v1654 = vpop.f32.mrf.mxu0
    %v1655 = vadd.f32 0.0, %v1654
    %v1656 = vpop.f32.mrf.mxu0
    %1657 = vdwg.mxu0
    %v1658 = vadd.f32 %v1626, %v1642
    %v1659 = vadd.f32 %v1627, %v1655
    %v1660 = vxor.u32 %v1658, 2147483648
    %v1661 = vxor.u32 %v1659, 2147483648
    %v1662 = vmul.f32 %v1660, 1.442695
    %v1663 = vpow.pop %v1662
    %v1664 = vmul.f32 %v1661, 1.442695
    %v1665 = vpow.pop %v1664
    %v1666 = vadd.f32 %v1663, 1.0
    %v1667 = vadd.f32 %v1665, 1.0
    %v1668 = vrcp.pop %v1666
    %v1669 = vmul.f32 %v1666, %v1668
    %v1670 = vsub.f32 1.0, %v1669
    %v1671 = vmul.f32 %v1668, %v1670
    %v1672 = vadd.f32 %v1668, %v1671
    %vm1673 = vweird.f32 %v1666
    %vm1674 = vweird.f32 %v1668
    %vm1675 = vmor %vm1673, %vm1674
    %v1676 = vsel %vm1675, %v1668, %v1672
    %v1677 = vand.u32 2147483647, %v1666
    %vm1678 = vcmp.eq.f32.partialorder %v1677, 8.507059e+37
    %v1679 = vand.u32 %v1666, 2147483648
    %v1680 = vor.u32 1.1754944e-38, %v1679
    %v1681 = vsel %vm1678, %v1680, %v1676
    %v1682 = vmul.f32 1.0, %v1681
    %v1683 = vrcp.pop %v1667
    %v1684 = vmul.f32 %v1667, %v1683
    %v1685 = vsub.f32 1.0, %v1684
    %v1686 = vmul.f32 %v1683, %v1685
    %v1687 = vadd.f32 %v1683, %v1686
    %vm1688 = vweird.f32 %v1667
    %vm1689 = vweird.f32 %v1683
    %vm1690 = vmor %vm1688, %vm1689
    %v1691 = vsel %vm1690, %v1683, %v1687
    %v1692 = vand.u32 2147483647, %v1667
    %vm1693 = vcmp.eq.f32.partialorder %v1692, 8.507059e+37
    %v1694 = vand.u32 %v1667, 2147483648
    %v1695 = vor.u32 1.1754944e-38, %v1694
    %v1696 = vsel %vm1693, %v1695, %v1691
    %v1697 = vmul.f32 1.0, %v1696
    %v1698 = vmul.f32 %v1697, 2.0
    %v1699 = vsub.f32 %v1698, 1.0
    %v1700 = vmul.f32 %v1682, %v1622
    %v1701 = vmul.f32 %v1682, %v1699
    %1703 = vrot.lane.b32.xlu0 %v1701, 64
    %v1704 = vpop.permute.xlu0 %1703
    %v1706 = vadd.f32 %v1700, %v1704
    %v1707 = vtanh.pop %v1706
    %v1708 = vmul.f32 %v1697, %v1707
    %s1709 = scalar_lea.vmem [#allocation2], 304
    %v1710 = vld [vmem:[%s1709] sm:$0xff]
    %v1711 = vld [vmem:[%s1709 + $0x8] sm:$0xff]
    %v1712 = vpack.c.bf16 %v1708, %v1708
    %v1714 = vsel %vm116, %v1712, 0
    %1716 = vmatpush.bf16.msra.mxu0 0
    %1717 = vmatpush.bf16.msra.mxu0 0
    %1718 = vmatpush.bf16.msra.mxu0 0
    %1719 = vmatpush.bf16.msra.mxu0 0
    %1720 = vmatpush.bf16.msra.mxu0 %v106
    %1721 = vmatpush.bf16.msra.mxu0 %v104
    %1722 = vmatpush.bf16.msra.mxu0 %v102
    %1723 = vmatpush.bf16.msra.mxu0 %v100
    %1724 = vmatmul.bf16.gmra.mxu0 %v1714
    %v1725 = vpop.f32.mrf.mxu0
    %v1726 = vadd.f32 0.0, %v1725
    %v1727 = vpop.f32.mrf.mxu0
    %1728 = vdwg.mxu0
    %1729 = vmatpush.bf16.msra.mxu0 0
    %1730 = vmatpush.bf16.msra.mxu0 0
    %1731 = vmatpush.bf16.msra.mxu0 0
    %1732 = vmatpush.bf16.msra.mxu0 0
    %1733 = vmatpush.bf16.msra.mxu0 %v107
    %1734 = vmatpush.bf16.msra.mxu0 %v105
    %1735 = vmatpush.bf16.msra.mxu0 %v103
    %1736 = vmatpush.bf16.msra.mxu0 %v101
    %1737 = vmatmul.bf16.gmra.mxu0 %v1714
    %v1738 = vpop.f32.mrf.mxu0
    %v1739 = vadd.f32 0.0, %v1738
    %v1740 = vpop.f32.mrf.mxu0
    %1741 = vdwg.mxu0
    %v1742 = vadd.f32 %v1710, %v1726
    %v1743 = vadd.f32 %v1711, %v1739
    %v1744 = vxor.u32 %v1742, 2147483648
    %v1745 = vxor.u32 %v1743, 2147483648
    %v1746 = vmul.f32 %v1744, 1.442695
    %v1747 = vpow.pop %v1746
    %v1748 = vmul.f32 %v1745, 1.442695
    %v1749 = vpow.pop %v1748
    %v1750 = vadd.f32 %v1747, 1.0
    %v1751 = vadd.f32 %v1749, 1.0
    %v1752 = vrcp.pop %v1750
    %v1753 = vmul.f32 %v1750, %v1752
    %v1754 = vsub.f32 1.0, %v1753
    %v1755 = vmul.f32 %v1752, %v1754
    %v1756 = vadd.f32 %v1752, %v1755
    %vm1757 = vweird.f32 %v1750
    %vm1758 = vweird.f32 %v1752
    %vm1759 = vmor %vm1757, %vm1758
    %v1760 = vsel %vm1759, %v1752, %v1756
    %v1761 = vand.u32 2147483647, %v1750
    %vm1762 = vcmp.eq.f32.partialorder %v1761, 8.507059e+37
    %v1763 = vand.u32 %v1750, 2147483648
    %v1764 = vor.u32 1.1754944e-38, %v1763
    %v1765 = vsel %vm1762, %v1764, %v1760
    %v1766 = vmul.f32 1.0, %v1765
    %v1767 = vrcp.pop %v1751
    %v1768 = vmul.f32 %v1751, %v1767
    %v1769 = vsub.f32 1.0, %v1768
    %v1770 = vmul.f32 %v1767, %v1769
    %v1771 = vadd.f32 %v1767, %v1770
    %vm1772 = vweird.f32 %v1751
    %vm1773 = vweird.f32 %v1767
    %vm1774 = vmor %vm1772, %vm1773
    %v1775 = vsel %vm1774, %v1767, %v1771
    %v1776 = vand.u32 2147483647, %v1751
    %vm1777 = vcmp.eq.f32.partialorder %v1776, 8.507059e+37
    %v1778 = vand.u32 %v1751, 2147483648
    %v1779 = vor.u32 1.1754944e-38, %v1778
    %v1780 = vsel %vm1777, %v1779, %v1775
    %v1781 = vmul.f32 1.0, %v1780
    %v1782 = vmul.f32 %v1781, 2.0
    %v1783 = vsub.f32 %v1782, 1.0
    %v1784 = vmul.f32 %v1766, %v1706
    %v1785 = vmul.f32 %v1766, %v1783
    %1787 = vrot.lane.b32.xlu0 %v1785, 64
    %v1788 = vpop.permute.xlu0 %1787
    %v1790 = vadd.f32 %v1784, %v1788
    %v1791 = vtanh.pop %v1790
    %v1792 = vmul.f32 %v1781, %v1791
    %s1793 = scalar_lea.vmem [#allocation2], 320
    %v1794 = vld [vmem:[%s1793] sm:$0xff]
    %v1795 = vld [vmem:[%s1793 + $0x8] sm:$0xff]
    %v1796 = vpack.c.bf16 %v1792, %v1792
    %v1798 = vsel %vm116, %v1796, 0
    %1800 = vmatpush.bf16.msra.mxu0 0
    %1801 = vmatpush.bf16.msra.mxu0 0
    %1802 = vmatpush.bf16.msra.mxu0 0
    %1803 = vmatpush.bf16.msra.mxu0 0
    %1804 = vmatpush.bf16.msra.mxu0 %v106
    %1805 = vmatpush.bf16.msra.mxu0 %v104
    %1806 = vmatpush.bf16.msra.mxu0 %v102
    %1807 = vmatpush.bf16.msra.mxu0 %v100
    %1808 = vmatmul.bf16.gmra.mxu0 %v1798
    %v1809 = vpop.f32.mrf.mxu0
    %v1810 = vadd.f32 0.0, %v1809
    %v1811 = vpop.f32.mrf.mxu0
    %1812 = vdwg.mxu0
    %1813 = vmatpush.bf16.msra.mxu0 0
    %1814 = vmatpush.bf16.msra.mxu0 0
    %1815 = vmatpush.bf16.msra.mxu0 0
    %1816 = vmatpush.bf16.msra.mxu0 0
    %1817 = vmatpush.bf16.msra.mxu0 %v107
    %1818 = vmatpush.bf16.msra.mxu0 %v105
    %1819 = vmatpush.bf16.msra.mxu0 %v103
    %1820 = vmatpush.bf16.msra.mxu0 %v101
    %1821 = vmatmul.bf16.gmra.mxu0 %v1798
    %v1822 = vpop.f32.mrf.mxu0
    %v1823 = vadd.f32 0.0, %v1822
    %v1824 = vpop.f32.mrf.mxu0
    %1825 = vdwg.mxu0
    %v1826 = vadd.f32 %v1794, %v1810
    %v1827 = vadd.f32 %v1795, %v1823
    %v1828 = vxor.u32 %v1826, 2147483648
    %v1829 = vxor.u32 %v1827, 2147483648
    %v1830 = vmul.f32 %v1828, 1.442695
    %v1831 = vpow.pop %v1830
    %v1832 = vmul.f32 %v1829, 1.442695
    %v1833 = vpow.pop %v1832
    %v1834 = vadd.f32 %v1831, 1.0
    %v1835 = vadd.f32 %v1833, 1.0
    %v1836 = vrcp.pop %v1834
    %v1837 = vmul.f32 %v1834, %v1836
    %v1838 = vsub.f32 1.0, %v1837
    %v1839 = vmul.f32 %v1836, %v1838
    %v1840 = vadd.f32 %v1836, %v1839
    %vm1841 = vweird.f32 %v1834
    %vm1842 = vweird.f32 %v1836
    %vm1843 = vmor %vm1841, %vm1842
    %v1844 = vsel %vm1843, %v1836, %v1840
    %v1845 = vand.u32 2147483647, %v1834
    %vm1846 = vcmp.eq.f32.partialorder %v1845, 8.507059e+37
    %v1847 = vand.u32 %v1834, 2147483648
    %v1848 = vor.u32 1.1754944e-38, %v1847
    %v1849 = vsel %vm1846, %v1848, %v1844
    %v1850 = vmul.f32 1.0, %v1849
    %v1851 = vrcp.pop %v1835
    %v1852 = vmul.f32 %v1835, %v1851
    %v1853 = vsub.f32 1.0, %v1852
    %v1854 = vmul.f32 %v1851, %v1853
    %v1855 = vadd.f32 %v1851, %v1854
    %vm1856 = vweird.f32 %v1835
    %vm1857 = vweird.f32 %v1851
    %vm1858 = vmor %vm1856, %vm1857
    %v1859 = vsel %vm1858, %v1851, %v1855
    %v1860 = vand.u32 2147483647, %v1835
    %vm1861 = vcmp.eq.f32.partialorder %v1860, 8.507059e+37
    %v1862 = vand.u32 %v1835, 2147483648
    %v1863 = vor.u32 1.1754944e-38, %v1862
    %v1864 = vsel %vm1861, %v1863, %v1859
    %v1865 = vmul.f32 1.0, %v1864
    %v1866 = vmul.f32 %v1865, 2.0
    %v1867 = vsub.f32 %v1866, 1.0
    %v1868 = vmul.f32 %v1850, %v1790
    %v1869 = vmul.f32 %v1850, %v1867
    %1871 = vrot.lane.b32.xlu0 %v1869, 64
    %v1872 = vpop.permute.xlu0 %1871
    %v1874 = vadd.f32 %v1868, %v1872
    %v1875 = vtanh.pop %v1874
    %v1876 = vmul.f32 %v1865, %v1875
    %s1877 = scalar_lea.vmem [#allocation2], 336
    %v1878 = vld [vmem:[%s1877] sm:$0xff]
    %v1879 = vld [vmem:[%s1877 + $0x8] sm:$0xff]
    %v1880 = vpack.c.bf16 %v1876, %v1876
    %v1882 = vsel %vm116, %v1880, 0
    %1884 = vmatpush.bf16.msra.mxu0 0
    %1885 = vmatpush.bf16.msra.mxu0 0
    %1886 = vmatpush.bf16.msra.mxu0 0
    %1887 = vmatpush.bf16.msra.mxu0 0
    %1888 = vmatpush.bf16.msra.mxu0 %v106
    %1889 = vmatpush.bf16.msra.mxu0 %v104
    %1890 = vmatpush.bf16.msra.mxu0 %v102
    %1891 = vmatpush.bf16.msra.mxu0 %v100
    %1892 = vmatmul.bf16.gmra.mxu0 %v1882
    %v1893 = vpop.f32.mrf.mxu0
    %v1894 = vadd.f32 0.0, %v1893
    %v1895 = vpop.f32.mrf.mxu0
    %1896 = vdwg.mxu0
    %1897 = vmatpush.bf16.msra.mxu0 0
    %1898 = vmatpush.bf16.msra.mxu0 0
    %1899 = vmatpush.bf16.msra.mxu0 0
    %1900 = vmatpush.bf16.msra.mxu0 0
    %1901 = vmatpush.bf16.msra.mxu0 %v107
    %1902 = vmatpush.bf16.msra.mxu0 %v105
    %1903 = vmatpush.bf16.msra.mxu0 %v103
    %1904 = vmatpush.bf16.msra.mxu0 %v101
    %1905 = vmatmul.bf16.gmra.mxu0 %v1882
    %v1906 = vpop.f32.mrf.mxu0
    %v1907 = vadd.f32 0.0, %v1906
    %v1908 = vpop.f32.mrf.mxu0
    %1909 = vdwg.mxu0
    %v1910 = vadd.f32 %v1878, %v1894
    %v1911 = vadd.f32 %v1879, %v1907
    %v1912 = vxor.u32 %v1910, 2147483648
    %v1913 = vxor.u32 %v1911, 2147483648
    %v1914 = vmul.f32 %v1912, 1.442695
    %v1915 = vpow.pop %v1914
    %v1916 = vmul.f32 %v1913, 1.442695
    %v1917 = vpow.pop %v1916
    %v1918 = vadd.f32 %v1915, 1.0
    %v1919 = vadd.f32 %v1917, 1.0
    %v1920 = vrcp.pop %v1918
    %v1921 = vmul.f32 %v1918, %v1920
    %v1922 = vsub.f32 1.0, %v1921
    %v1923 = vmul.f32 %v1920, %v1922
    %v1924 = vadd.f32 %v1920, %v1923
    %vm1925 = vweird.f32 %v1918
    %vm1926 = vweird.f32 %v1920
    %vm1927 = vmor %vm1925, %vm1926
    %v1928 = vsel %vm1927, %v1920, %v1924
    %v1929 = vand.u32 2147483647, %v1918
    %vm1930 = vcmp.eq.f32.partialorder %v1929, 8.507059e+37
    %v1931 = vand.u32 %v1918, 2147483648
    %v1932 = vor.u32 1.1754944e-38, %v1931
    %v1933 = vsel %vm1930, %v1932, %v1928
    %v1934 = vmul.f32 1.0, %v1933
    %v1935 = vrcp.pop %v1919
    %v1936 = vmul.f32 %v1919, %v1935
    %v1937 = vsub.f32 1.0, %v1936
    %v1938 = vmul.f32 %v1935, %v1937
    %v1939 = vadd.f32 %v1935, %v1938
    %vm1940 = vweird.f32 %v1919
    %vm1941 = vweird.f32 %v1935
    %vm1942 = vmor %vm1940, %vm1941
    %v1943 = vsel %vm1942, %v1935, %v1939
    %v1944 = vand.u32 2147483647, %v1919
    %vm1945 = vcmp.eq.f32.partialorder %v1944, 8.507059e+37
    %v1946 = vand.u32 %v1919, 2147483648
    %v1947 = vor.u32 1.1754944e-38, %v1946
    %v1948 = vsel %vm1945, %v1947, %v1943
    %v1949 = vmul.f32 1.0, %v1948
    %v1950 = vmul.f32 %v1949, 2.0
    %v1951 = vsub.f32 %v1950, 1.0
    %v1952 = vmul.f32 %v1934, %v1874
    %v1953 = vmul.f32 %v1934, %v1951
    %1955 = vrot.lane.b32.xlu0 %v1953, 64
    %v1956 = vpop.permute.xlu0 %1955
    %v1958 = vadd.f32 %v1952, %v1956
    %v1959 = vtanh.pop %v1958
    %v1960 = vmul.f32 %v1949, %v1959
    %s1961 = scalar_lea.vmem [#allocation2], 352
    %v1962 = vld [vmem:[%s1961] sm:$0xff]
    %v1963 = vld [vmem:[%s1961 + $0x8] sm:$0xff]
    %v1964 = vpack.c.bf16 %v1960, %v1960
    %v1966 = vsel %vm116, %v1964, 0
    %1968 = vmatpush.bf16.msra.mxu0 0
    %1969 = vmatpush.bf16.msra.mxu0 0
    %1970 = vmatpush.bf16.msra.mxu0 0
    %1971 = vmatpush.bf16.msra.mxu0 0
    %1972 = vmatpush.bf16.msra.mxu0 %v106
    %1973 = vmatpush.bf16.msra.mxu0 %v104
    %1974 = vmatpush.bf16.msra.mxu0 %v102
    %1975 = vmatpush.bf16.msra.mxu0 %v100
    %1976 = vmatmul.bf16.gmra.mxu0 %v1966
    %v1977 = vpop.f32.mrf.mxu0
    %v1978 = vadd.f32 0.0, %v1977
    %v1979 = vpop.f32.mrf.mxu0
    %1980 = vdwg.mxu0
    %1981 = vmatpush.bf16.msra.mxu0 0
    %1982 = vmatpush.bf16.msra.mxu0 0
    %1983 = vmatpush.bf16.msra.mxu0 0
    %1984 = vmatpush.bf16.msra.mxu0 0
    %1985 = vmatpush.bf16.msra.mxu0 %v107
    %1986 = vmatpush.bf16.msra.mxu0 %v105
    %1987 = vmatpush.bf16.msra.mxu0 %v103
    %1988 = vmatpush.bf16.msra.mxu0 %v101
    %1989 = vmatmul.bf16.gmra.mxu0 %v1966
    %v1990 = vpop.f32.mrf.mxu0
    %v1991 = vadd.f32 0.0, %v1990
    %v1992 = vpop.f32.mrf.mxu0
    %1993 = vdwg.mxu0
    %v1994 = vadd.f32 %v1962, %v1978
    %v1995 = vadd.f32 %v1963, %v1991
    %v1996 = vxor.u32 %v1994, 2147483648
    %v1997 = vxor.u32 %v1995, 2147483648
    %v1998 = vmul.f32 %v1996, 1.442695
    %v1999 = vpow.pop %v1998
    %v2000 = vmul.f32 %v1997, 1.442695
    %v2001 = vpow.pop %v2000
    %v2002 = vadd.f32 %v1999, 1.0
    %v2003 = vadd.f32 %v2001, 1.0
    %v2004 = vrcp.pop %v2002
    %v2005 = vmul.f32 %v2002, %v2004
    %v2006 = vsub.f32 1.0, %v2005
    %v2007 = vmul.f32 %v2004, %v2006
    %v2008 = vadd.f32 %v2004, %v2007
    %vm2009 = vweird.f32 %v2002
    %vm2010 = vweird.f32 %v2004
    %vm2011 = vmor %vm2009, %vm2010
    %v2012 = vsel %vm2011, %v2004, %v2008
    %v2013 = vand.u32 2147483647, %v2002
    %vm2014 = vcmp.eq.f32.partialorder %v2013, 8.507059e+37
    %v2015 = vand.u32 %v2002, 2147483648
    %v2016 = vor.u32 1.1754944e-38, %v2015
    %v2017 = vsel %vm2014, %v2016, %v2012
    %v2018 = vmul.f32 1.0, %v2017
    %v2019 = vrcp.pop %v2003
    %v2020 = vmul.f32 %v2003, %v2019
    %v2021 = vsub.f32 1.0, %v2020
    %v2022 = vmul.f32 %v2019, %v2021
    %v2023 = vadd.f32 %v2019, %v2022
    %vm2024 = vweird.f32 %v2003
    %vm2025 = vweird.f32 %v2019
    %vm2026 = vmor %vm2024, %vm2025
    %v2027 = vsel %vm2026, %v2019, %v2023
    %v2028 = vand.u32 2147483647, %v2003
    %vm2029 = vcmp.eq.f32.partialorder %v2028, 8.507059e+37
    %v2030 = vand.u32 %v2003, 2147483648
    %v2031 = vor.u32 1.1754944e-38, %v2030
    %v2032 = vsel %vm2029, %v2031, %v2027
    %v2033 = vmul.f32 1.0, %v2032
    %v2034 = vmul.f32 %v2033, 2.0
    %v2035 = vsub.f32 %v2034, 1.0
    %v2036 = vmul.f32 %v2018, %v1958
    %v2037 = vmul.f32 %v2018, %v2035
    %2039 = vrot.lane.b32.xlu0 %v2037, 64
    %v2040 = vpop.permute.xlu0 %2039
    %v2042 = vadd.f32 %v2036, %v2040
    %v2043 = vtanh.pop %v2042
    %v2044 = vmul.f32 %v2033, %v2043
    %s2045 = scalar_lea.vmem [#allocation2], 368
    %v2046 = vld [vmem:[%s2045] sm:$0xff]
    %v2047 = vld [vmem:[%s2045 + $0x8] sm:$0xff]
    %v2048 = vpack.c.bf16 %v2044, %v2044
    %v2050 = vsel %vm116, %v2048, 0
    %2052 = vmatpush.bf16.msra.mxu0 0
    %2053 = vmatpush.bf16.msra.mxu0 0
    %2054 = vmatpush.bf16.msra.mxu0 0
    %2055 = vmatpush.bf16.msra.mxu0 0
    %2056 = vmatpush.bf16.msra.mxu0 %v106
    %2057 = vmatpush.bf16.msra.mxu0 %v104
    %2058 = vmatpush.bf16.msra.mxu0 %v102
    %2059 = vmatpush.bf16.msra.mxu0 %v100
    %2060 = vmatmul.bf16.gmra.mxu0 %v2050
    %v2061 = vpop.f32.mrf.mxu0
    %v2062 = vadd.f32 0.0, %v2061
    %v2063 = vpop.f32.mrf.mxu0
    %2064 = vdwg.mxu0
    %2065 = vmatpush.bf16.msra.mxu0 0
    %2066 = vmatpush.bf16.msra.mxu0 0
    %2067 = vmatpush.bf16.msra.mxu0 0
    %2068 = vmatpush.bf16.msra.mxu0 0
    %2069 = vmatpush.bf16.msra.mxu0 %v107
    %2070 = vmatpush.bf16.msra.mxu0 %v105
    %2071 = vmatpush.bf16.msra.mxu0 %v103
    %2072 = vmatpush.bf16.msra.mxu0 %v101
    %2073 = vmatmul.bf16.gmra.mxu0 %v2050
    %v2074 = vpop.f32.mrf.mxu0
    %v2075 = vadd.f32 0.0, %v2074
    %v2076 = vpop.f32.mrf.mxu0
    %2077 = vdwg.mxu0
    %v2078 = vadd.f32 %v2046, %v2062
    %v2079 = vadd.f32 %v2047, %v2075
    %v2080 = vxor.u32 %v2078, 2147483648
    %v2081 = vxor.u32 %v2079, 2147483648
    %v2082 = vmul.f32 %v2080, 1.442695
    %v2083 = vpow.pop %v2082
    %v2084 = vmul.f32 %v2081, 1.442695
    %v2085 = vpow.pop %v2084
    %v2086 = vadd.f32 %v2083, 1.0
    %v2087 = vadd.f32 %v2085, 1.0
    %v2088 = vrcp.pop %v2086
    %v2089 = vmul.f32 %v2086, %v2088
    %v2090 = vsub.f32 1.0, %v2089
    %v2091 = vmul.f32 %v2088, %v2090
    %v2092 = vadd.f32 %v2088, %v2091
    %vm2093 = vweird.f32 %v2086
    %vm2094 = vweird.f32 %v2088
    %vm2095 = vmor %vm2093, %vm2094
    %v2096 = vsel %vm2095, %v2088, %v2092
    %v2097 = vand.u32 2147483647, %v2086
    %vm2098 = vcmp.eq.f32.partialorder %v2097, 8.507059e+37
    %v2099 = vand.u32 %v2086, 2147483648
    %v2100 = vor.u32 1.1754944e-38, %v2099
    %v2101 = vsel %vm2098, %v2100, %v2096
    %v2102 = vmul.f32 1.0, %v2101
    %v2103 = vrcp.pop %v2087
    %v2104 = vmul.f32 %v2087, %v2103
    %v2105 = vsub.f32 1.0, %v2104
    %v2106 = vmul.f32 %v2103, %v2105
    %v2107 = vadd.f32 %v2103, %v2106
    %vm2108 = vweird.f32 %v2087
    %vm2109 = vweird.f32 %v2103
    %vm2110 = vmor %vm2108, %vm2109
    %v2111 = vsel %vm2110, %v2103, %v2107
    %v2112 = vand.u32 2147483647, %v2087
    %vm2113 = vcmp.eq.f32.partialorder %v2112, 8.507059e+37
    %v2114 = vand.u32 %v2087, 2147483648
    %v2115 = vor.u32 1.1754944e-38, %v2114
    %v2116 = vsel %vm2113, %v2115, %v2111
    %v2117 = vmul.f32 1.0, %v2116
    %v2118 = vmul.f32 %v2117, 2.0
    %v2119 = vsub.f32 %v2118, 1.0
    %v2120 = vmul.f32 %v2102, %v2042
    %v2121 = vmul.f32 %v2102, %v2119
    %2123 = vrot.lane.b32.xlu0 %v2121, 64
    %v2124 = vpop.permute.xlu0 %2123
    %v2126 = vadd.f32 %v2120, %v2124
    %v2127 = vtanh.pop %v2126
    %v2128 = vmul.f32 %v2117, %v2127
    %s2129 = scalar_lea.vmem [#allocation2], 384
    %v2130 = vld [vmem:[%s2129] sm:$0xff]
    %v2131 = vld [vmem:[%s2129 + $0x8] sm:$0xff]
    %v2132 = vpack.c.bf16 %v2128, %v2128
    %v2134 = vsel %vm116, %v2132, 0
    %2136 = vmatpush.bf16.msra.mxu0 0
    %2137 = vmatpush.bf16.msra.mxu0 0
    %2138 = vmatpush.bf16.msra.mxu0 0
    %2139 = vmatpush.bf16.msra.mxu0 0
    %2140 = vmatpush.bf16.msra.mxu0 %v106
    %2141 = vmatpush.bf16.msra.mxu0 %v104
    %2142 = vmatpush.bf16.msra.mxu0 %v102
    %2143 = vmatpush.bf16.msra.mxu0 %v100
    %2144 = vmatmul.bf16.gmra.mxu0 %v2134
    %v2145 = vpop.f32.mrf.mxu0
    %v2146 = vadd.f32 0.0, %v2145
    %v2147 = vpop.f32.mrf.mxu0
    %2148 = vdwg.mxu0
    %2149 = vmatpush.bf16.msra.mxu0 0
    %2150 = vmatpush.bf16.msra.mxu0 0
    %2151 = vmatpush.bf16.msra.mxu0 0
    %2152 = vmatpush.bf16.msra.mxu0 0
    %2153 = vmatpush.bf16.msra.mxu0 %v107
    %2154 = vmatpush.bf16.msra.mxu0 %v105
    %2155 = vmatpush.bf16.msra.mxu0 %v103
    %2156 = vmatpush.bf16.msra.mxu0 %v101
    %2157 = vmatmul.bf16.gmra.mxu0 %v2134
    %v2158 = vpop.f32.mrf.mxu0
    %v2159 = vadd.f32 0.0, %v2158
    %v2160 = vpop.f32.mrf.mxu0
    %2161 = vdwg.mxu0
    %v2162 = vadd.f32 %v2130, %v2146
    %v2163 = vadd.f32 %v2131, %v2159
    %v2164 = vxor.u32 %v2162, 2147483648
    %v2165 = vxor.u32 %v2163, 2147483648
    %v2166 = vmul.f32 %v2164, 1.442695
    %v2167 = vpow.pop %v2166
    %v2168 = vmul.f32 %v2165, 1.442695
    %v2169 = vpow.pop %v2168
    %v2170 = vadd.f32 %v2167, 1.0
    %v2171 = vadd.f32 %v2169, 1.0
    %v2172 = vrcp.pop %v2170
    %v2173 = vmul.f32 %v2170, %v2172
    %v2174 = vsub.f32 1.0, %v2173
    %v2175 = vmul.f32 %v2172, %v2174
    %v2176 = vadd.f32 %v2172, %v2175
    %vm2177 = vweird.f32 %v2170
    %vm2178 = vweird.f32 %v2172
    %vm2179 = vmor %vm2177, %vm2178
    %v2180 = vsel %vm2179, %v2172, %v2176
    %v2181 = vand.u32 2147483647, %v2170
    %vm2182 = vcmp.eq.f32.partialorder %v2181, 8.507059e+37
    %v2183 = vand.u32 %v2170, 2147483648
    %v2184 = vor.u32 1.1754944e-38, %v2183
    %v2185 = vsel %vm2182, %v2184, %v2180
    %v2186 = vmul.f32 1.0, %v2185
    %v2187 = vrcp.pop %v2171
    %v2188 = vmul.f32 %v2171, %v2187
    %v2189 = vsub.f32 1.0, %v2188
    %v2190 = vmul.f32 %v2187, %v2189
    %v2191 = vadd.f32 %v2187, %v2190
    %vm2192 = vweird.f32 %v2171
    %vm2193 = vweird.f32 %v2187
    %vm2194 = vmor %vm2192, %vm2193
    %v2195 = vsel %vm2194, %v2187, %v2191
    %v2196 = vand.u32 2147483647, %v2171
    %vm2197 = vcmp.eq.f32.partialorder %v2196, 8.507059e+37
    %v2198 = vand.u32 %v2171, 2147483648
    %v2199 = vor.u32 1.1754944e-38, %v2198
    %v2200 = vsel %vm2197, %v2199, %v2195
    %v2201 = vmul.f32 1.0, %v2200
    %v2202 = vmul.f32 %v2201, 2.0
    %v2203 = vsub.f32 %v2202, 1.0
    %v2204 = vmul.f32 %v2186, %v2126
    %v2205 = vmul.f32 %v2186, %v2203
    %2207 = vrot.lane.b32.xlu0 %v2205, 64
    %v2208 = vpop.permute.xlu0 %2207
    %v2210 = vadd.f32 %v2204, %v2208
    %v2211 = vtanh.pop %v2210
    %v2212 = vmul.f32 %v2201, %v2211
    %s2213 = scalar_lea.vmem [#allocation2], 400
    %v2214 = vld [vmem:[%s2213] sm:$0xff]
    %v2215 = vld [vmem:[%s2213 + $0x8] sm:$0xff]
    %v2216 = vpack.c.bf16 %v2212, %v2212
    %v2218 = vsel %vm116, %v2216, 0
    %2220 = vmatpush.bf16.msra.mxu0 0
    %2221 = vmatpush.bf16.msra.mxu0 0
    %2222 = vmatpush.bf16.msra.mxu0 0
    %2223 = vmatpush.bf16.msra.mxu0 0
    %2224 = vmatpush.bf16.msra.mxu0 %v106
    %2225 = vmatpush.bf16.msra.mxu0 %v104
    %2226 = vmatpush.bf16.msra.mxu0 %v102
    %2227 = vmatpush.bf16.msra.mxu0 %v100
    %2228 = vmatmul.bf16.gmra.mxu0 %v2218
    %v2229 = vpop.f32.mrf.mxu0
    %v2230 = vadd.f32 0.0, %v2229
    %v2231 = vpop.f32.mrf.mxu0
    %2232 = vdwg.mxu0
    %2233 = vmatpush.bf16.msra.mxu0 0
    %2234 = vmatpush.bf16.msra.mxu0 0
    %2235 = vmatpush.bf16.msra.mxu0 0
    %2236 = vmatpush.bf16.msra.mxu0 0
    %2237 = vmatpush.bf16.msra.mxu0 %v107
    %2238 = vmatpush.bf16.msra.mxu0 %v105
    %2239 = vmatpush.bf16.msra.mxu0 %v103
    %2240 = vmatpush.bf16.msra.mxu0 %v101
    %2241 = vmatmul.bf16.gmra.mxu0 %v2218
    %v2242 = vpop.f32.mrf.mxu0
    %v2243 = vadd.f32 0.0, %v2242
    %v2244 = vpop.f32.mrf.mxu0
    %2245 = vdwg.mxu0
    %v2246 = vadd.f32 %v2214, %v2230
    %v2247 = vadd.f32 %v2215, %v2243
    %v2248 = vxor.u32 %v2246, 2147483648
    %v2249 = vxor.u32 %v2247, 2147483648
    %v2250 = vmul.f32 %v2248, 1.442695
    %v2251 = vpow.pop %v2250
    %v2252 = vmul.f32 %v2249, 1.442695
    %v2253 = vpow.pop %v2252
    %v2254 = vadd.f32 %v2251, 1.0
    %v2255 = vadd.f32 %v2253, 1.0
    %v2256 = vrcp.pop %v2254
    %v2257 = vmul.f32 %v2254, %v2256
    %v2258 = vsub.f32 1.0, %v2257
    %v2259 = vmul.f32 %v2256, %v2258
    %v2260 = vadd.f32 %v2256, %v2259
    %vm2261 = vweird.f32 %v2254
    %vm2262 = vweird.f32 %v2256
    %vm2263 = vmor %vm2261, %vm2262
    %v2264 = vsel %vm2263, %v2256, %v2260
    %v2265 = vand.u32 2147483647, %v2254
    %vm2266 = vcmp.eq.f32.partialorder %v2265, 8.507059e+37
    %v2267 = vand.u32 %v2254, 2147483648
    %v2268 = vor.u32 1.1754944e-38, %v2267
    %v2269 = vsel %vm2266, %v2268, %v2264
    %v2270 = vmul.f32 1.0, %v2269
    %v2271 = vrcp.pop %v2255
    %v2272 = vmul.f32 %v2255, %v2271
    %v2273 = vsub.f32 1.0, %v2272
    %v2274 = vmul.f32 %v2271, %v2273
    %v2275 = vadd.f32 %v2271, %v2274
    %vm2276 = vweird.f32 %v2255
    %vm2277 = vweird.f32 %v2271
    %vm2278 = vmor %vm2276, %vm2277
    %v2279 = vsel %vm2278, %v2271, %v2275
    %v2280 = vand.u32 2147483647, %v2255
    %vm2281 = vcmp.eq.f32.partialorder %v2280, 8.507059e+37
    %v2282 = vand.u32 %v2255, 2147483648
    %v2283 = vor.u32 1.1754944e-38, %v2282
    %v2284 = vsel %vm2281, %v2283, %v2279
    %v2285 = vmul.f32 1.0, %v2284
    %v2286 = vmul.f32 %v2285, 2.0
    %v2287 = vsub.f32 %v2286, 1.0
    %v2288 = vmul.f32 %v2270, %v2210
    %v2289 = vmul.f32 %v2270, %v2287
    %2291 = vrot.lane.b32.xlu0 %v2289, 64
    %v2292 = vpop.permute.xlu0 %2291
    %v2294 = vadd.f32 %v2288, %v2292
    %v2295 = vtanh.pop %v2294
    %v2296 = vmul.f32 %v2285, %v2295
    %s2297 = scalar_lea.vmem [#allocation2], 416
    %v2298 = vld [vmem:[%s2297] sm:$0xff]
    %v2299 = vld [vmem:[%s2297 + $0x8] sm:$0xff]
    %v2300 = vpack.c.bf16 %v2296, %v2296
    %v2302 = vsel %vm116, %v2300, 0
    %2304 = vmatpush.bf16.msra.mxu0 0
    %2305 = vmatpush.bf16.msra.mxu0 0
    %2306 = vmatpush.bf16.msra.mxu0 0
    %2307 = vmatpush.bf16.msra.mxu0 0
    %2308 = vmatpush.bf16.msra.mxu0 %v106
    %2309 = vmatpush.bf16.msra.mxu0 %v104
    %2310 = vmatpush.bf16.msra.mxu0 %v102
    %2311 = vmatpush.bf16.msra.mxu0 %v100
    %2312 = vmatmul.bf16.gmra.mxu0 %v2302
    %v2313 = vpop.f32.mrf.mxu0
    %v2314 = vadd.f32 0.0, %v2313
    %v2315 = vpop.f32.mrf.mxu0
    %2316 = vdwg.mxu0
    %2317 = vmatpush.bf16.msra.mxu0 0
    %2318 = vmatpush.bf16.msra.mxu0 0
    %2319 = vmatpush.bf16.msra.mxu0 0
    %2320 = vmatpush.bf16.msra.mxu0 0
    %2321 = vmatpush.bf16.msra.mxu0 %v107
    %2322 = vmatpush.bf16.msra.mxu0 %v105
    %2323 = vmatpush.bf16.msra.mxu0 %v103
    %2324 = vmatpush.bf16.msra.mxu0 %v101
    %2325 = vmatmul.bf16.gmra.mxu0 %v2302
    %v2326 = vpop.f32.mrf.mxu0
    %v2327 = vadd.f32 0.0, %v2326
    %v2328 = vpop.f32.mrf.mxu0
    %2329 = vdwg.mxu0
    %v2330 = vadd.f32 %v2298, %v2314
    %v2331 = vadd.f32 %v2299, %v2327
    %v2332 = vxor.u32 %v2330, 2147483648
    %v2333 = vxor.u32 %v2331, 2147483648
    %v2334 = vmul.f32 %v2332, 1.442695
    %v2335 = vpow.pop %v2334
    %v2336 = vmul.f32 %v2333, 1.442695
    %v2337 = vpow.pop %v2336
    %v2338 = vadd.f32 %v2335, 1.0
    %v2339 = vadd.f32 %v2337, 1.0
    %v2340 = vrcp.pop %v2338
    %v2341 = vmul.f32 %v2338, %v2340
    %v2342 = vsub.f32 1.0, %v2341
    %v2343 = vmul.f32 %v2340, %v2342
    %v2344 = vadd.f32 %v2340, %v2343
    %vm2345 = vweird.f32 %v2338
    %vm2346 = vweird.f32 %v2340
    %vm2347 = vmor %vm2345, %vm2346
    %v2348 = vsel %vm2347, %v2340, %v2344
    %v2349 = vand.u32 2147483647, %v2338
    %vm2350 = vcmp.eq.f32.partialorder %v2349, 8.507059e+37
    %v2351 = vand.u32 %v2338, 2147483648
    %v2352 = vor.u32 1.1754944e-38, %v2351
    %v2353 = vsel %vm2350, %v2352, %v2348
    %v2354 = vmul.f32 1.0, %v2353
    %v2355 = vrcp.pop %v2339
    %v2356 = vmul.f32 %v2339, %v2355
    %v2357 = vsub.f32 1.0, %v2356
    %v2358 = vmul.f32 %v2355, %v2357
    %v2359 = vadd.f32 %v2355, %v2358
    %vm2360 = vweird.f32 %v2339
    %vm2361 = vweird.f32 %v2355
    %vm2362 = vmor %vm2360, %vm2361
    %v2363 = vsel %vm2362, %v2355, %v2359
    %v2364 = vand.u32 2147483647, %v2339
    %vm2365 = vcmp.eq.f32.partialorder %v2364, 8.507059e+37
    %v2366 = vand.u32 %v2339, 2147483648
    %v2367 = vor.u32 1.1754944e-38, %v2366
    %v2368 = vsel %vm2365, %v2367, %v2363
    %v2369 = vmul.f32 1.0, %v2368
    %v2370 = vmul.f32 %v2369, 2.0
    %v2371 = vsub.f32 %v2370, 1.0
    %v2372 = vmul.f32 %v2354, %v2294
    %v2373 = vmul.f32 %v2354, %v2371
    %2375 = vrot.lane.b32.xlu0 %v2373, 64
    %v2376 = vpop.permute.xlu0 %2375
    %v2378 = vadd.f32 %v2372, %v2376
    %v2379 = vtanh.pop %v2378
    %v2380 = vmul.f32 %v2369, %v2379
    %s2381 = scalar_lea.vmem [#allocation2], 432
    %v2382 = vld [vmem:[%s2381] sm:$0xff]
    %v2383 = vld [vmem:[%s2381 + $0x8] sm:$0xff]
    %v2384 = vpack.c.bf16 %v2380, %v2380
    %v2386 = vsel %vm116, %v2384, 0
    %2388 = vmatpush.bf16.msra.mxu0 0
    %2389 = vmatpush.bf16.msra.mxu0 0
    %2390 = vmatpush.bf16.msra.mxu0 0
    %2391 = vmatpush.bf16.msra.mxu0 0
    %2392 = vmatpush.bf16.msra.mxu0 %v106
    %2393 = vmatpush.bf16.msra.mxu0 %v104
    %2394 = vmatpush.bf16.msra.mxu0 %v102
    %2395 = vmatpush.bf16.msra.mxu0 %v100
    %2396 = vmatmul.bf16.gmra.mxu0 %v2386
    %v2397 = vpop.f32.mrf.mxu0
    %v2398 = vadd.f32 0.0, %v2397
    %v2399 = vpop.f32.mrf.mxu0
    %2400 = vdwg.mxu0
    %2401 = vmatpush.bf16.msra.mxu0 0
    %2402 = vmatpush.bf16.msra.mxu0 0
    %2403 = vmatpush.bf16.msra.mxu0 0
    %2404 = vmatpush.bf16.msra.mxu0 0
    %2405 = vmatpush.bf16.msra.mxu0 %v107
    %2406 = vmatpush.bf16.msra.mxu0 %v105
    %2407 = vmatpush.bf16.msra.mxu0 %v103
    %2408 = vmatpush.bf16.msra.mxu0 %v101
    %2409 = vmatmul.bf16.gmra.mxu0 %v2386
    %v2410 = vpop.f32.mrf.mxu0
    %v2411 = vadd.f32 0.0, %v2410
    %v2412 = vpop.f32.mrf.mxu0
    %2413 = vdwg.mxu0
    %v2414 = vadd.f32 %v2382, %v2398
    %v2415 = vadd.f32 %v2383, %v2411
    %v2416 = vxor.u32 %v2414, 2147483648
    %v2417 = vxor.u32 %v2415, 2147483648
    %v2418 = vmul.f32 %v2416, 1.442695
    %v2419 = vpow.pop %v2418
    %v2420 = vmul.f32 %v2417, 1.442695
    %v2421 = vpow.pop %v2420
    %v2422 = vadd.f32 %v2419, 1.0
    %v2423 = vadd.f32 %v2421, 1.0
    %v2424 = vrcp.pop %v2422
    %v2425 = vmul.f32 %v2422, %v2424
    %v2426 = vsub.f32 1.0, %v2425
    %v2427 = vmul.f32 %v2424, %v2426
    %v2428 = vadd.f32 %v2424, %v2427
    %vm2429 = vweird.f32 %v2422
    %vm2430 = vweird.f32 %v2424
    %vm2431 = vmor %vm2429, %vm2430
    %v2432 = vsel %vm2431, %v2424, %v2428
    %v2433 = vand.u32 2147483647, %v2422
    %vm2434 = vcmp.eq.f32.partialorder %v2433, 8.507059e+37
    %v2435 = vand.u32 %v2422, 2147483648
    %v2436 = vor.u32 1.1754944e-38, %v2435
    %v2437 = vsel %vm2434, %v2436, %v2432
    %v2438 = vmul.f32 1.0, %v2437
    %v2439 = vrcp.pop %v2423
    %v2440 = vmul.f32 %v2423, %v2439
    %v2441 = vsub.f32 1.0, %v2440
    %v2442 = vmul.f32 %v2439, %v2441
    %v2443 = vadd.f32 %v2439, %v2442
    %vm2444 = vweird.f32 %v2423
    %vm2445 = vweird.f32 %v2439
    %vm2446 = vmor %vm2444, %vm2445
    %v2447 = vsel %vm2446, %v2439, %v2443
    %v2448 = vand.u32 2147483647, %v2423
    %vm2449 = vcmp.eq.f32.partialorder %v2448, 8.507059e+37
    %v2450 = vand.u32 %v2423, 2147483648
    %v2451 = vor.u32 1.1754944e-38, %v2450
    %v2452 = vsel %vm2449, %v2451, %v2447
    %v2453 = vmul.f32 1.0, %v2452
    %v2454 = vmul.f32 %v2453, 2.0
    %v2455 = vsub.f32 %v2454, 1.0
    %v2456 = vmul.f32 %v2438, %v2378
    %v2457 = vmul.f32 %v2438, %v2455
    %2459 = vrot.lane.b32.xlu0 %v2457, 64
    %v2460 = vpop.permute.xlu0 %2459
    %v2462 = vadd.f32 %v2456, %v2460
    %v2463 = vtanh.pop %v2462
    %v2464 = vmul.f32 %v2453, %v2463
    %v2465 = vld [vmem:[#allocation7] sm:$0xff]
    %v2466 = vld [vmem:[#allocation7 + $0x8] sm:$0xff]
    %v2467 = vld [vmem:[#allocation7 + $0x10] sm:$0xff]
    %v2468 = vld [vmem:[#allocation7 + $0x18] sm:$0xff]
    %v2469 = vld [vmem:[#allocation7 + $0x20] sm:$0xff]
    %v2470 = vld [vmem:[#allocation7 + $0x28] sm:$0xff]
    %v2471 = vld [vmem:[#allocation7 + $0x30] sm:$0xff]
    %v2472 = vld [vmem:[#allocation7 + $0x38] sm:$0xff]
    %v2473 = vld [vmem:[%s3] sm:$0x1]
    %v2475 = vperm.slane %v2473, 0
    %v2478 = vsel %vm116, %v2464, 0
    %2480 = vmatpush.msra.mxu0 0.0
    %2481 = vmatpush.msra.mxu0 0.0
    %2482 = vmatpush.msra.mxu0 0.0
    %2483 = vmatpush.msra.mxu0 0.0
    %2484 = vmatpush.msra.mxu0 0.0
    %2485 = vmatpush.msra.mxu0 0.0
    %2486 = vmatpush.msra.mxu0 0.0
    %2487 = vmatpush.msra.mxu0 0.0
    %2488 = vmatpush.msra.mxu0 %v2472
    %2489 = vmatpush.msra.mxu0 %v2471
    %2490 = vmatpush.msra.mxu0 %v2470
    %2491 = vmatpush.msra.mxu0 %v2469
    %2492 = vmatpush.msra.mxu0 %v2468
    %2493 = vmatpush.msra.mxu0 %v2467
    %2494 = vmatpush.msra.mxu0 %v2466
    %2495 = vmatpush.msra.mxu0 %v2465
    %2496 = vmatmul.f32.gmra.mxu0 %v2478
    %v2497 = vpop.f32.mrf.mxu0
    %v2498 = vadd.f32 %v2475, %v2497
    %2499 = vdwg.mxu0
    %2500 = vmax.xlane.f32.xlu0 %v2498
    %v2501 = vpop.xlane.xlu0 %2500
    %v2502 = vsub.f32 %v2498, %v2501
    %v2503 = vmul.f32 %v2502, 1.442695
    %v2504 = vpow.pop %v2503
    %2505 = vadd.xlane.f32.xlu0 %v2504
    %v2506 = vpop.xlane.xlu0 %2505
    %v2507 = vrcp.pop %v2506
    %v2508 = vmul.f32 %v2506, %v2507
    %v2509 = vsub.f32 1.0, %v2508
    %v2510 = vmul.f32 %v2507, %v2509
    %v2511 = vadd.f32 %v2507, %v2510
    %vm2512 = vweird.f32 %v2506
    %vm2513 = vweird.f32 %v2507
    %vm2514 = vmor %vm2512, %vm2513
    %v2515 = vsel %vm2514, %v2507, %v2511
    %v2516 = vand.u32 2147483647, %v2506
    %vm2517 = vcmp.eq.f32.partialorder %v2516, 8.507059e+37
    %v2518 = vand.u32 %v2506, 2147483648
    %v2519 = vor.u32 1.1754944e-38, %v2518
    %v2520 = vsel %vm2517, %v2519, %v2515
    %v2521 = vmul.f32 %v2504, %v2520
    %2522 = vst [vmem:[#allocation8] sm:$0xff] %v2521
    // Predicated region
    $region30: #{tpu_custom_call.1} parent=1 // pred_check
      _
    $region31: #{tpu_custom_call.1} parent=1 // pred_check_branch
      %2524 = sbr.rel (0) target = $region33
    $region32: #{tpu_custom_call.1} parent=1 // pred_region
      %2526 = vsyncadd [#allocation4], 0
      %s2528 = sshll.u32 [#allocation8], 4
      %s2529 = int_to_ptr.vmem [resolvable:$true] %s2528
      %s2530 = sshll.u32 %s4, 4
      %s2531 = int_to_ptr.hbm [resolvable:$true] %s2530
      %2533 = dma.vmem_to_hbm [thread:$0]  %s2529, 128, %s2531, [#allocation4]
    $region33: #{tpu_custom_call.1} parent=1 // pred_fallthru
      _
    // Predicated region
    $region34: #{tpu_custom_call.1} parent=1 // pred_check
      _
    $region35: #{tpu_custom_call.1} parent=1 // pred_check_branch
      %2535 = sbr.rel (0) target = $region37
    $region36: #{tpu_custom_call.1} parent=1 // pred_region
      %2537 = dma.done [#allocation4], 128
    $region37: #{tpu_custom_call.1} parent=1 // pred_fallthru
      _
    %2538 = vsyncpa [#allocation3], 1
    %2539 = vsyncpa [#allocation6], 1
    %2540 = vsyncpa [#allocation4], 1

</llo_original>
